<compile_context>
chip_gen: v5e
topology: v5e:2x2
jax: 0.10.0
libtpu: 0.0.40
codegen_flags: <defaults>
</compile_context>

<pallas_src>
import math

import jax
import jax.numpy as jnp
from jax.experimental import pallas as pl
from jax.experimental.pallas import tpu as pltpu


# ----------------------------------------------------------------------------
# Deterministic parameter construction (mirrors the PyTorch __init__ /
# `linear()` helper: xavier_uniform_ weights, zero biases, zero mem_0/control_0)
# ----------------------------------------------------------------------------
def _xavier_uniform(key, out_dim, in_dim):
    bound = math.sqrt(6.0 / (in_dim + out_dim))
    return jax.random.uniform(key, (out_dim, in_dim), jnp.float32, -bound, bound)


def _linear_params(key, in_dim, out_dim):
    w = _xavier_uniform(key, out_dim, in_dim).T          # stored (in, out) for x @ W
    b = jnp.zeros((1, out_dim), jnp.float32)
    return w, b


def init_mac_params(key, dim, max_step):
    keys = jax.random.split(key, 11)
    p = {}
    # ControlUnit
    pa_keys = jax.random.split(keys[0], max_step)
    p["w_pa"] = jnp.stack([_linear_params(pa_keys[i], 2 * dim, dim)[0]
                           for i in range(max_step)])    # (max_step, 2*dim, dim)
    p["b_pa"] = jnp.zeros((max_step, dim), jnp.float32)
    p["w_cq"], p["b_cq"] = _linear_params(keys[1], 2 * dim, dim)
    p["w_ca"] = _xavier_uniform(keys[2], 1, dim)         # Linear(dim, 1) weight, (1, dim)
    p["b_ca"] = jnp.zeros((1, 1), jnp.float32)
    # ReadUnit 1
    p["w_mem1"], p["b_mem1"] = _linear_params(keys[3], dim, dim)
    p["w_cc1"], p["b_cc1"] = _linear_params(keys[4], 2 * dim, dim)
    p["w_ra1"] = _xavier_uniform(keys[5], 1, dim)
    p["b_ra1"] = jnp.zeros((1, 1), jnp.float32)
    # ReadUnit 2
    p["w_mem2"], p["b_mem2"] = _linear_params(keys[6], dim, dim)
    p["w_cc2"], p["b_cc2"] = _linear_params(keys[7], 2 * dim, dim)
    p["w_ra2"] = _xavier_uniform(keys[8], 1, dim)
    p["b_ra2"] = jnp.zeros((1, 1), jnp.float32)
    # proj + WriteUnit (self_attention=False, memory_gate=False)
    p["w_proj"], p["b_proj"] = _linear_params(keys[9], 2 * dim, dim)
    p["w_wr"], p["b_wr"] = _linear_params(keys[10], 2 * dim, dim)
    return p


# ----------------------------------------------------------------------------
# Pallas kernel
# ----------------------------------------------------------------------------
def mac_kernel(ctx_ref, q_ref, kb_ref, w_pa_ref, w_sq_ref, vec_ref,
               out_ref, kb_base_ref, ctxw_ref, pa_logit_ref):
    f32 = jnp.float32
    B, S, d = ctx_ref.shape
    T = kb_ref.shape[2]
    max_step = pa_logit_ref.shape[0]

    # ----- row indices inside the packed weight / vector slabs (static) -----
    W_CQC, W_MEM, W_CCHT, W_CCT = 0, 1, 3, 5        # w_sq slab (11, d, d)
    W_PROJ1, W_PROJ2, W_WRR, W_WRM = 7, 8, 9, 10
    R_BPA, R_BMEM, R_BCC = 0, max_step, max_step + 2   # vec slab (max_step+9, d)
    R_WCA, R_WRA = max_step + 4, max_step + 5
    R_BPROJ, R_BWR = max_step + 7, max_step + 8

    def mm(x, w):
        return jnp.dot(x, w, preferred_element_type=f32)

    def bmm(x, w):                    # (2,M,K) x (2,K,N) -> (2,M,N); batch = RU axis
        return jnp.einsum('rmk,rkn->rmn', x, w, preferred_element_type=f32)

    def softmax_last(x):              # exact division: keeps 2e-3 parity
        m = jnp.max(x, axis=-1, keepdims=True)
        e = jnp.exp(x - m)
        return e / jnp.sum(e, axis=-1, keepdims=True)

    # ------------- loop-invariant precompute (off the serial chain) ---------
    # ReadUnits: kb @ W_cc[d:] + b_cc is step-independent.  Tiny (T,d)x(d,d)
    # 2-D dots per (RU, batch element) keep the lowering trivial; prologue work.
    for r in range(2):
        w_cct_r = w_sq_ref[W_CCT + r]
        b_cc_r = vec_ref[R_BCC + r][None, :]
        for b in range(B):
            kb_base_ref[r, b] = mm(kb_ref[r, b], w_cct_r) + b_cc_r

    # ControlUnit: fold the rank-1 attention weight into the context once.
    w_ca = vec_ref[R_WCA:R_WCA + 1]                        # (1, d)
    ctxw_ref[...] = ctx_ref[...] * w_ca[None]              # (B, S, d)

    # Whole position-aware path in ONE lane-dense (B,2d)@(2d,max_step*d) matmul
    # (W_cq[d:], b_pa, b_cq folded into w_pa_ref / the first vec rows by the
    # wrapper):  pa_cq[s] = (q @ W_pa[s] + b_pa[s]) @ W_cq[d:] + b_cq
    pa_cq_all = mm(q_ref[...], w_pa_ref[...])              # (B, max_step*d)
    ctx_w = ctxw_ref[...]
    for s in range(max_step):
        pa_cq_s = pa_cq_all[:, s * d:(s + 1) * d] + vec_ref[R_BPA + s][None, :]
        pa_logit_ref[s] = jnp.sum(ctx_w * pa_cq_s[:, None, :], axis=-1)    # (B, S)

    # mem_0 / control_0 are zero-initialized nn.Parameters.
    control = jnp.zeros((B, d), f32)
    memory = jnp.zeros((B, d), f32)

    for step in range(max_step):
        # ----------------------------- ControlUnit --------------------------
        cqc = mm(control, w_sq_ref[W_CQC])                                  # control @ W_cq[:d]
        logits_c = (jnp.sum(ctxw_ref[...] * cqc[:, None, :], axis=-1)
                    + pa_logit_ref[step])                                   # (B, S)
        attn_c = softmax_last(logits_c)          # b_ca dropped: softmax shift-invariant
        control = jnp.sum(attn_c[:, :, None] * ctx_ref[...], axis=1)        # (B, d)

        # -------------- fused ReadUnits (leading RU axis of size 2) ---------
        mem_cat = (bmm(jnp.broadcast_to(memory[None], (2, B, d)),
                       w_sq_ref[W_MEM:W_MEM + 2])
                   + vec_ref[R_BMEM:R_BMEM + 2][:, None, :])                # (2, B, d)
        cw = control[None] * vec_ref[R_WRA:R_WRA + 2][:, None, :]           # control * w_ra
        # Algebraic push of W_cc[:d] onto the small control vector:
        #   logits = sum_k kb * (mem * (cw @ W_cch^T)) + sum_n kb_base * cw
        u = bmm(cw, w_sq_ref[W_CCHT:W_CCHT + 2])                            # (2, B, d)
        a = mem_cat * u                                                     # (2, B, d)
        kb = kb_ref[...]                                                    # (2, B, T, d) at point of use
        logits_r = jnp.sum(kb * a[:, :, None, :]
                           + kb_base_ref[...] * cw[:, :, None, :], axis=-1)  # (2, B, T)
        attn_r = softmax_last(logits_r)          # b_ra dropped: softmax shift-invariant
        read_cat = jnp.sum(attn_r[..., None] * kb, axis=2)                  # (2, B, d)

        # --------------------------- proj + WriteUnit -----------------------
        # split-K form of concat([read1, read2]) @ W_proj (avoids an unaligned
        # lane-axis concat; two tiny dots instead of one K=2d dot).
        read = (mm(read_cat[0], w_sq_ref[W_PROJ1])
                + mm(read_cat[1], w_sq_ref[W_PROJ2])
                + vec_ref[R_BPROJ][None, :])
        memory = (mm(read, w_sq_ref[W_WRR]) + mm(memory, w_sq_ref[W_WRM])
                  + vec_ref[R_BWR][None, :])

    # ------------- final global min/max normalization to [-1, 1] ------------
    memory = memory - jnp.min(memory, keepdims=True)
    out_ref[...] = 2.0 * (memory / jnp.max(memory, keepdims=True)) - 1.0


# ----------------------------------------------------------------------------
# Wrapper: parameter repacking (one-time) + pallas_call
# ----------------------------------------------------------------------------
@jax.jit
def mac_unit_2rus(context, question, kb1, kb2, params):
    B, S, d = context.shape
    T = kb1.shape[2]
    max_step = params["w_pa"].shape[0]
    f32 = jnp.float32

    w_cq_c = params["w_cq"][:d]                       # control part of control_question
    w_cq_p = params["w_cq"][d:]                       # position-aware part
    # Fold the position-aware Linear and the pa half of control_question into a
    # single lane-dense (2d, max_step*d) weight + per-step bias rows.
    w_pa_cq = jnp.einsum('sij,jk->sik', params["w_pa"], w_cq_p)            # (max_step, 2d, d)
    b_pa_cq = params["b_pa"] @ w_cq_p + params["b_cq"]                     # (max_step, d)
    w_pa_flat = jnp.transpose(w_pa_cq, (1, 0, 2)).reshape(2 * d, max_step * d)

    # Packed (11, d, d) square-weight slab (per-RU weights as plain (d,d) rows —
    # no batch broadcasting).  W_cch is stored transposed so the in-kernel
    # batched matmul contracts its output axis directly.
    w_sq = jnp.concatenate([
        w_cq_c[None],                                                       # 0
        params["w_mem1"][None], params["w_mem2"][None],                     # 1, 2
        params["w_cc1"][:d].T[None], params["w_cc2"][:d].T[None],           # 3, 4  (W_cch^T)
        params["w_cc1"][d:][None], params["w_cc2"][d:][None],               # 5, 6  (W_cct)
        params["w_proj"][:d][None], params["w_proj"][d:][None],             # 7, 8
        params["w_wr"][:d][None], params["w_wr"][d:][None],                 # 9, 10
    ], axis=0).astype(f32)

    # Packed (max_step + 9, d) bias / rank-1 vector slab.
    vec = jnp.concatenate([
        b_pa_cq,                                        # rows [0, max_step)
        params["b_mem1"], params["b_mem2"],             # max_step, +1
        params["b_cc1"], params["b_cc2"],               # +2, +3
        params["w_ca"],                                 # +4
        params["w_ra1"], params["w_ra2"],               # +5, +6
        params["b_proj"], params["b_wr"],               # +7, +8
    ], axis=0).astype(f32)
    # NOTE: b_ca / b_ra{1,2} are omitted on purpose — they add a constant per
    # softmax row (softmax is shift-invariant) and are zero-initialized anyway.

    # RU-major knowledge base, feature dim on the lane axis: (2, B, T, d).
    kb = jnp.stack([jnp.transpose(kb1, (0, 2, 1)),
                    jnp.transpose(kb2, (0, 2, 1))], axis=0).astype(f32)

    vmem = pl.BlockSpec(memory_space=pltpu.MemorySpace.VMEM)
    return pl.pallas_call(
        mac_kernel,
        out_shape=jax.ShapeDtypeStruct((B, d), f32),
        in_specs=[vmem] * 6,
        out_specs=vmem,
        scratch_shapes=[
            pltpu.VMEM((2, B, T, d), f32),      # kb_base  (loop-invariant)
            pltpu.VMEM((B, S, d), f32),         # ctx * w_ca (loop-invariant)
            pltpu.VMEM((max_step, B, S), f32),  # per-step position-aware control logits
        ],
    )(context.astype(f32), question.astype(f32), kb, w_pa_flat, w_sq, vec)


# ----------------------------------------------------------------------------
# Pure-JAX reference (literal transcription of the PyTorch forward, eval mode)
# ----------------------------------------------------------------------------
def mac_reference(context, question, kb1, kb2, params):
    B, _, dim = context.shape
    max_step = params["w_pa"].shape[0]
    control = jnp.zeros((B, dim), jnp.float32)
    memory = jnp.zeros((B, dim), jnp.float32)

    def read_ref(memory, know, control, wm, bm, wc, bc, wa, ba):
        mem = (memory @ wm + bm)[:, :, None]                       # (B, d, 1)
        cat = jnp.concatenate([mem * know, know], axis=1)          # (B, 2d, T)
        concat = jnp.transpose(cat, (0, 2, 1)) @ wc + bc           # (B, T, d)
        att = concat * control[:, None, :]
        att = jnp.einsum('btd,od->bto', att, wa) + ba              # (B, T, 1)
        att = jax.nn.softmax(att[..., 0], axis=1)[:, None, :]      # (B, 1, T)
        return jnp.sum(att * know, axis=2)                         # (B, d)

    for i in range(max_step):
        pa = question @ params["w_pa"][i] + params["b_pa"][i]
        cq = jnp.concatenate([control, pa], 1) @ params["w_cq"] + params["b_cq"]
        cp = cq[:, None, :] * context
        aw = jnp.einsum('bsd,od->bso', cp, params["w_ca"]) + params["b_ca"]
        attn = jax.nn.softmax(aw, axis=1)
        control = jnp.sum(attn * context, axis=1)

        read1 = read_ref(memory, kb1, control, params["w_mem1"], params["b_mem1"],
                         params["w_cc1"], params["b_cc1"], params["w_ra1"], params["b_ra1"])
        read2 = read_ref(memory, kb2, control, params["w_mem2"], params["b_mem2"],
                         params["w_cc2"], params["b_cc2"], params["w_ra2"], params["b_ra2"])
        read = jnp.concatenate([read1, read2], 1) @ params["w_proj"] + params["b_proj"]
        memory = jnp.concatenate([read, memory], 1) @ params["w_wr"] + params["b_wr"]

    memory = memory - jnp.min(memory)
    memory = memory / jnp.max(memory)
    return 2.0 * memory - 1.0


if __name__ == "__main__":
    B, DIM, S, T, MAX_STEP = 2, 32, 8, 10, 4
    key = jax.random.PRNGKey(0)
    k_ctx, k_q, k_kb1, k_kb2, k_par = jax.random.split(key, 5)

    context = jax.random.normal(k_ctx, (B, S, DIM), jnp.float32)      # (B, S, dim)
    question = jax.random.normal(k_q, (B, 2 * DIM), jnp.float32)      # (B, 2*dim)
    kb1 = jax.random.normal(k_kb1, (B, DIM, T), jnp.float32)          # PyTorch (B, dim, T)
    kb2 = jax.random.normal(k_kb2, (B, DIM, T), jnp.float32)
    params = init_mac_params(k_par, DIM, MAX_STEP)

    out = mac_unit_2rus(context, question, kb1, kb2, params)
    out = jax.block_until_ready(out)

    ref = mac_reference(context, question, kb1, kb2, params)
    assert out.shape == (B, DIM)
    max_diff = float(jnp.max(jnp.abs(out - ref)))
    assert jnp.allclose(out, ref, rtol=2e-3, atol=2e-3), f"max abs diff {max_diff}"
    print("KERNEL_OK")
</pallas_src>

<mosaic_0001>
module attributes {stable_mosaic.version = 11 : i64} {
  func.func @mac_kernel(%arg0: memref<2x8x32xf32, #tpu.memory_space<vmem>>, %arg1: memref<2x64xf32, #tpu.memory_space<vmem>>, %arg2: memref<2x2x10x32xf32, #tpu.memory_space<vmem>>, %arg3: memref<64x128xf32, #tpu.memory_space<vmem>>, %arg4: memref<11x32x32xf32, #tpu.memory_space<vmem>>, %arg5: memref<13x32xf32, #tpu.memory_space<vmem>>, %arg6: memref<2x32xf32, #tpu.memory_space<vmem>>, %arg7: memref<2x2x10x32xf32, #tpu.memory_space<vmem>>, %arg8: memref<2x8x32xf32, #tpu.memory_space<vmem>>, %arg9: memref<4x2x8xf32, #tpu.memory_space<vmem>>) attributes {dimension_semantics = [], scalar_prefetch = 0 : i64, scratch_operands = 3 : i64, tpu.core_type = #tpu.core_type<tc>} {
    %c5 = arith.constant 5 : index
    %c0 = arith.constant 0 : index
    %c0_0 = arith.constant 0 : index
    %0 = vector.load %arg4[%c5, %c0, %c0_0] : memref<11x32x32xf32, #tpu.memory_space<vmem>>, vector<1x32x32xf32>
    %1 = vector.shape_cast %0 : vector<1x32x32xf32> to vector<32x32xf32>
    %c6 = arith.constant 6 : index
    %c0_1 = arith.constant 0 : index
    %2 = vector.load %arg5[%c6, %c0_1] : memref<13x32xf32, #tpu.memory_space<vmem>>, vector<1x32xf32>
    %3 = vector.shape_cast %2 : vector<1x32xf32> to vector<32xf32>
    %4 = vector.shape_cast %3 : vector<32xf32> to vector<1x32xf32>
    %c0_2 = arith.constant 0 : index
    %c0_3 = arith.constant 0 : index
    %c0_4 = arith.constant 0 : index
    %c0_5 = arith.constant 0 : index
    %5 = vector.load %arg2[%c0_2, %c0_3, %c0_4, %c0_5] : memref<2x2x10x32xf32, #tpu.memory_space<vmem>>, vector<1x1x10x32xf32>
    %6 = vector.shape_cast %5 : vector<1x1x10x32xf32> to vector<10x32xf32>
    %cst = arith.constant dense<0.000000e+00> : vector<10x32xf32>
    %7 = tpu.matmul %6, %1, %cst {dimension_numbers = #tpu.dot_dimension_numbers<[1], [0], [0], [1], [0, 0, 1, 1], [], []>} : vector<10x32xf32>, vector<32x32xf32>, vector<10x32xf32> -> vector<10x32xf32>
    %8 = vector.broadcast %4 : vector<1x32xf32> to vector<10x32xf32>
    %9 = arith.addf %7, %8 : vector<10x32xf32>
    %c0_6 = arith.constant 0 : index
    %c0_7 = arith.constant 0 : index
    %c0_8 = arith.constant 0 : index
    %c0_9 = arith.constant 0 : index
    %10 = vector.load %arg7[%c0_6, %c0_7, %c0_8, %c0_9] : memref<2x2x10x32xf32, #tpu.memory_space<vmem>>, vector<1x1x10x32xf32>
    %11 = vector.shape_cast %10 : vector<1x1x10x32xf32> to vector<10x32xf32>
    %12 = vector.shape_cast %9 : vector<10x32xf32> to vector<1x1x10x32xf32>
    tpu.vector_store %arg7[%c0_6, %c0_7, %c0_8, %c0_9], %12 {strides = array<i32>} : memref<2x2x10x32xf32, #tpu.memory_space<vmem>>, vector<1x1x10x32xf32>,
    %c0_10 = arith.constant 0 : index
    %c1 = arith.constant 1 : index
    %c0_11 = arith.constant 0 : index
    %c0_12 = arith.constant 0 : index
    %13 = vector.load %arg2[%c0_10, %c1, %c0_11, %c0_12] : memref<2x2x10x32xf32, #tpu.memory_space<vmem>>, vector<1x1x10x32xf32>
    %14 = vector.shape_cast %13 : vector<1x1x10x32xf32> to vector<10x32xf32>
    %cst_13 = arith.constant dense<0.000000e+00> : vector<10x32xf32>
    %15 = tpu.matmul %14, %1, %cst_13 {dimension_numbers = #tpu.dot_dimension_numbers<[1], [0], [0], [1], [0, 0, 1, 1], [], []>} : vector<10x32xf32>, vector<32x32xf32>, vector<10x32xf32> -> vector<10x32xf32>
    %16 = vector.broadcast %4 : vector<1x32xf32> to vector<10x32xf32>
    %17 = arith.addf %15, %16 : vector<10x32xf32>
    %c0_14 = arith.constant 0 : index
    %c1_15 = arith.constant 1 : index
    %c0_16 = arith.constant 0 : index
    %c0_17 = arith.constant 0 : index
    %18 = vector.load %arg7[%c0_14, %c1_15, %c0_16, %c0_17] : memref<2x2x10x32xf32, #tpu.memory_space<vmem>>, vector<1x1x10x32xf32>
    %19 = vector.shape_cast %18 : vector<1x1x10x32xf32> to vector<10x32xf32>
    %20 = vector.shape_cast %17 : vector<10x32xf32> to vector<1x1x10x32xf32>
    tpu.vector_store %arg7[%c0_14, %c1_15, %c0_16, %c0_17], %20 {strides = array<i32>} : memref<2x2x10x32xf32, #tpu.memory_space<vmem>>, vector<1x1x10x32xf32>,
    %c6_18 = arith.constant 6 : index
    %c0_19 = arith.constant 0 : index
    %c0_20 = arith.constant 0 : index
    %21 = vector.load %arg4[%c6_18, %c0_19, %c0_20] : memref<11x32x32xf32, #tpu.memory_space<vmem>>, vector<1x32x32xf32>
    %22 = vector.shape_cast %21 : vector<1x32x32xf32> to vector<32x32xf32>
    %c7 = arith.constant 7 : index
    %c0_21 = arith.constant 0 : index
    %23 = vector.load %arg5[%c7, %c0_21] : memref<13x32xf32, #tpu.memory_space<vmem>>, vector<1x32xf32>
    %24 = vector.shape_cast %23 : vector<1x32xf32> to vector<32xf32>
    %25 = vector.shape_cast %24 : vector<32xf32> to vector<1x32xf32>
    %c1_22 = arith.constant 1 : index
    %c0_23 = arith.constant 0 : index
    %c0_24 = arith.constant 0 : index
    %c0_25 = arith.constant 0 : index
    %26 = vector.load %arg2[%c1_22, %c0_23, %c0_24, %c0_25] : memref<2x2x10x32xf32, #tpu.memory_space<vmem>>, vector<1x1x10x32xf32>
    %27 = vector.shape_cast %26 : vector<1x1x10x32xf32> to vector<10x32xf32>
    %cst_26 = arith.constant dense<0.000000e+00> : vector<10x32xf32>
    %28 = tpu.matmul %27, %22, %cst_26 {dimension_numbers = #tpu.dot_dimension_numbers<[1], [0], [0], [1], [0, 0, 1, 1], [], []>} : vector<10x32xf32>, vector<32x32xf32>, vector<10x32xf32> -> vector<10x32xf32>
    %29 = vector.broadcast %25 : vector<1x32xf32> to vector<10x32xf32>
    %30 = arith.addf %28, %29 : vector<10x32xf32>
    %c1_27 = arith.constant 1 : index
    %c0_28 = arith.constant 0 : index
    %c0_29 = arith.constant 0 : index
    %c0_30 = arith.constant 0 : index
    %31 = vector.load %arg7[%c1_27, %c0_28, %c0_29, %c0_30] : memref<2x2x10x32xf32, #tpu.memory_space<vmem>>, vector<1x1x10x32xf32>
    %32 = vector.shape_cast %31 : vector<1x1x10x32xf32> to vector<10x32xf32>
    %33 = vector.shape_cast %30 : vector<10x32xf32> to vector<1x1x10x32xf32>
    tpu.vector_store %arg7[%c1_27, %c0_28, %c0_29, %c0_30], %33 {strides = array<i32>} : memref<2x2x10x32xf32, #tpu.memory_space<vmem>>, vector<1x1x10x32xf32>,
    %c1_31 = arith.constant 1 : index
    %c1_32 = arith.constant 1 : index
    %c0_33 = arith.constant 0 : index
    %c0_34 = arith.constant 0 : index
    %34 = vector.load %arg2[%c1_31, %c1_32, %c0_33, %c0_34] : memref<2x2x10x32xf32, #tpu.memory_space<vmem>>, vector<1x1x10x32xf32>
    %35 = vector.shape_cast %34 : vector<1x1x10x32xf32> to vector<10x32xf32>
    %cst_35 = arith.constant dense<0.000000e+00> : vector<10x32xf32>
    %36 = tpu.matmul %35, %22, %cst_35 {dimension_numbers = #tpu.dot_dimension_numbers<[1], [0], [0], [1], [0, 0, 1, 1], [], []>} : vector<10x32xf32>, vector<32x32xf32>, vector<10x32xf32> -> vector<10x32xf32>
    %37 = vector.broadcast %25 : vector<1x32xf32> to vector<10x32xf32>
    %38 = arith.addf %36, %37 : vector<10x32xf32>
    %c1_36 = arith.constant 1 : index
    %c1_37 = arith.constant 1 : index
    %c0_38 = arith.constant 0 : index
    %c0_39 = arith.constant 0 : index
    %39 = vector.load %arg7[%c1_36, %c1_37, %c0_38, %c0_39] : memref<2x2x10x32xf32, #tpu.memory_space<vmem>>, vector<1x1x10x32xf32>
    %40 = vector.shape_cast %39 : vector<1x1x10x32xf32> to vector<10x32xf32>
    %41 = vector.shape_cast %38 : vector<10x32xf32> to vector<1x1x10x32xf32>
    tpu.vector_store %arg7[%c1_36, %c1_37, %c0_38, %c0_39], %41 {strides = array<i32>} : memref<2x2x10x32xf32, #tpu.memory_space<vmem>>, vector<1x1x10x32xf32>,
    %c8 = arith.constant 8 : index
    %c0_40 = arith.constant 0 : index
    %42 = vector.load %arg5[%c8, %c0_40] : memref<13x32xf32, #tpu.memory_space<vmem>>, vector<1x32xf32>
    %c0_41 = arith.constant 0 : index
    %c0_42 = arith.constant 0 : index
    %c0_43 = arith.constant 0 : index
    %43 = vector.load %arg0[%c0_41, %c0_42, %c0_43] : memref<2x8x32xf32, #tpu.memory_space<vmem>>, vector<2x8x32xf32>
    %44 = vector.shape_cast %42 : vector<1x32xf32> to vector<1x1x32xf32>
    %45 = vector.broadcast %44 : vector<1x1x32xf32> to vector<2x8x32xf32>
    %46 = arith.mulf %43, %45 : vector<2x8x32xf32>
    %c0_44 = arith.constant 0 : index
    %c0_45 = arith.constant 0 : index
    %c0_46 = arith.constant 0 : index
    %47 = vector.load %arg8[%c0_44, %c0_45, %c0_46] : memref<2x8x32xf32, #tpu.memory_space<vmem>>, vector<2x8x32xf32>
    tpu.vector_store %arg8[%c0_44, %c0_45, %c0_46], %46 {strides = array<i32>} : memref<2x8x32xf32, #tpu.memory_space<vmem>>, vector<2x8x32xf32>,
    %c0_47 = arith.constant 0 : index
    %c0_48 = arith.constant 0 : index
    %48 = vector.load %arg1[%c0_47, %c0_48] : memref<2x64xf32, #tpu.memory_space<vmem>>, vector<2x64xf32>
    %c0_49 = arith.constant 0 : index
    %c0_50 = arith.constant 0 : index
    %49 = vector.load %arg3[%c0_49, %c0_50] : memref<64x128xf32, #tpu.memory_space<vmem>>, vector<64x128xf32>
    %cst_51 = arith.constant dense<0.000000e+00> : vector<2x128xf32>
    %50 = tpu.matmul %48, %49, %cst_51 {dimension_numbers = #tpu.dot_dimension_numbers<[1], [0], [0], [1], [0, 0, 1, 1], [], []>} : vector<2x64xf32>, vector<64x128xf32>, vector<2x128xf32> -> vector<2x128xf32>
    %c0_52 = arith.constant 0 : index
    %c0_53 = arith.constant 0 : index
    %c0_54 = arith.constant 0 : index
    %51 = vector.load %arg8[%c0_52, %c0_53, %c0_54] : memref<2x8x32xf32, #tpu.memory_space<vmem>>, vector<2x8x32xf32>
    %52 = vector.extract_strided_slice %50 {offsets = [0, 0], sizes = [2, 32], strides = [1, 1]} : vector<2x128xf32> to vector<2x32xf32>
    %c0_55 = arith.constant 0 : index
    %c0_56 = arith.constant 0 : index
    %53 = vector.load %arg5[%c0_55, %c0_56] : memref<13x32xf32, #tpu.memory_space<vmem>>, vector<1x32xf32>
    %54 = vector.shape_cast %53 : vector<1x32xf32> to vector<32xf32>
    %55 = vector.shape_cast %54 : vector<32xf32> to vector<1x32xf32>
    %56 = vector.broadcast %55 : vector<1x32xf32> to vector<2x32xf32>
    %57 = arith.addf %52, %56 : vector<2x32xf32>
    %58 = vector.shape_cast %57 : vector<2x32xf32> to vector<2x1x32xf32>
    %59 = vector.broadcast %58 : vector<2x1x32xf32> to vector<2x8x32xf32>
    %60 = arith.mulf %51, %59 : vector<2x8x32xf32>
    %cst_57 = arith.constant dense<0.000000e+00> : vector<2x8xf32>
    %61 = vector.multi_reduction <add>, %60, %cst_57 [2] : vector<2x8x32xf32> to vector<2x8xf32>
    %c0_58 = arith.constant 0 : index
    %c0_59 = arith.constant 0 : index
    %c0_60 = arith.constant 0 : index
    %62 = vector.load %arg9[%c0_58, %c0_59, %c0_60] : memref<4x2x8xf32, #tpu.memory_space<vmem>>, vector<1x2x8xf32>
    %63 = vector.shape_cast %62 : vector<1x2x8xf32> to vector<2x8xf32>
    %64 = vector.shape_cast %61 : vector<2x8xf32> to vector<1x2x8xf32>
    tpu.vector_store %arg9[%c0_58, %c0_59, %c0_60], %64 {strides = array<i32>} : memref<4x2x8xf32, #tpu.memory_space<vmem>>, vector<1x2x8xf32>,
    %65 = vector.extract_strided_slice %50 {offsets = [0, 32], sizes = [2, 32], strides = [1, 1]} : vector<2x128xf32> to vector<2x32xf32>
    %c1_61 = arith.constant 1 : index
    %c0_62 = arith.constant 0 : index
    %66 = vector.load %arg5[%c1_61, %c0_62] : memref<13x32xf32, #tpu.memory_space<vmem>>, vector<1x32xf32>
    %67 = vector.shape_cast %66 : vector<1x32xf32> to vector<32xf32>
    %68 = vector.shape_cast %67 : vector<32xf32> to vector<1x32xf32>
    %69 = vector.broadcast %68 : vector<1x32xf32> to vector<2x32xf32>
    %70 = arith.addf %65, %69 : vector<2x32xf32>
    %71 = vector.shape_cast %70 : vector<2x32xf32> to vector<2x1x32xf32>
    %72 = vector.broadcast %71 : vector<2x1x32xf32> to vector<2x8x32xf32>
    %73 = arith.mulf %51, %72 : vector<2x8x32xf32>
    %cst_63 = arith.constant dense<0.000000e+00> : vector<2x8xf32>
    %74 = vector.multi_reduction <add>, %73, %cst_63 [2] : vector<2x8x32xf32> to vector<2x8xf32>
    %c1_64 = arith.constant 1 : index
    %c0_65 = arith.constant 0 : index
    %c0_66 = arith.constant 0 : index
    %75 = vector.load %arg9[%c1_64, %c0_65, %c0_66] : memref<4x2x8xf32, #tpu.memory_space<vmem>>, vector<1x2x8xf32>
    %76 = vector.shape_cast %75 : vector<1x2x8xf32> to vector<2x8xf32>
    %77 = vector.shape_cast %74 : vector<2x8xf32> to vector<1x2x8xf32>
    tpu.vector_store %arg9[%c1_64, %c0_65, %c0_66], %77 {strides = array<i32>} : memref<4x2x8xf32, #tpu.memory_space<vmem>>, vector<1x2x8xf32>,
    %78 = vector.extract_strided_slice %50 {offsets = [0, 64], sizes = [2, 32], strides = [1, 1]} : vector<2x128xf32> to vector<2x32xf32>
    %c2 = arith.constant 2 : index
    %c0_67 = arith.constant 0 : index
    %79 = vector.load %arg5[%c2, %c0_67] : memref<13x32xf32, #tpu.memory_space<vmem>>, vector<1x32xf32>
    %80 = vector.shape_cast %79 : vector<1x32xf32> to vector<32xf32>
    %81 = vector.shape_cast %80 : vector<32xf32> to vector<1x32xf32>
    %82 = vector.broadcast %81 : vector<1x32xf32> to vector<2x32xf32>
    %83 = arith.addf %78, %82 : vector<2x32xf32>
    %84 = vector.shape_cast %83 : vector<2x32xf32> to vector<2x1x32xf32>
    %85 = vector.broadcast %84 : vector<2x1x32xf32> to vector<2x8x32xf32>
    %86 = arith.mulf %51, %85 : vector<2x8x32xf32>
    %cst_68 = arith.constant dense<0.000000e+00> : vector<2x8xf32>
    %87 = vector.multi_reduction <add>, %86, %cst_68 [2] : vector<2x8x32xf32> to vector<2x8xf32>
    %c2_69 = arith.constant 2 : index
    %c0_70 = arith.constant 0 : index
    %c0_71 = arith.constant 0 : index
    %88 = vector.load %arg9[%c2_69, %c0_70, %c0_71] : memref<4x2x8xf32, #tpu.memory_space<vmem>>, vector<1x2x8xf32>
    %89 = vector.shape_cast %88 : vector<1x2x8xf32> to vector<2x8xf32>
    %90 = vector.shape_cast %87 : vector<2x8xf32> to vector<1x2x8xf32>
    tpu.vector_store %arg9[%c2_69, %c0_70, %c0_71], %90 {strides = array<i32>} : memref<4x2x8xf32, #tpu.memory_space<vmem>>, vector<1x2x8xf32>,
    %91 = vector.extract_strided_slice %50 {offsets = [0, 96], sizes = [2, 32], strides = [1, 1]} : vector<2x128xf32> to vector<2x32xf32>
    %c3 = arith.constant 3 : index
    %c0_72 = arith.constant 0 : index
    %92 = vector.load %arg5[%c3, %c0_72] : memref<13x32xf32, #tpu.memory_space<vmem>>, vector<1x32xf32>
    %93 = vector.shape_cast %92 : vector<1x32xf32> to vector<32xf32>
    %94 = vector.shape_cast %93 : vector<32xf32> to vector<1x32xf32>
    %95 = vector.broadcast %94 : vector<1x32xf32> to vector<2x32xf32>
    %96 = arith.addf %91, %95 : vector<2x32xf32>
    %97 = vector.shape_cast %96 : vector<2x32xf32> to vector<2x1x32xf32>
    %98 = vector.broadcast %97 : vector<2x1x32xf32> to vector<2x8x32xf32>
    %99 = arith.mulf %51, %98 : vector<2x8x32xf32>
    %cst_73 = arith.constant dense<0.000000e+00> : vector<2x8xf32>
    %100 = vector.multi_reduction <add>, %99, %cst_73 [2] : vector<2x8x32xf32> to vector<2x8xf32>
    %c3_74 = arith.constant 3 : index
    %c0_75 = arith.constant 0 : index
    %c0_76 = arith.constant 0 : index
    %101 = vector.load %arg9[%c3_74, %c0_75, %c0_76] : memref<4x2x8xf32, #tpu.memory_space<vmem>>, vector<1x2x8xf32>
    %102 = vector.shape_cast %101 : vector<1x2x8xf32> to vector<2x8xf32>
    %103 = vector.shape_cast %100 : vector<2x8xf32> to vector<1x2x8xf32>
    tpu.vector_store %arg9[%c3_74, %c0_75, %c0_76], %103 {strides = array<i32>} : memref<4x2x8xf32, #tpu.memory_space<vmem>>, vector<1x2x8xf32>,
    %cst_77 = arith.constant 0.000000e+00 : f32
    %104 = vector.broadcast %cst_77 : f32 to vector<2x32xf32>
    %cst_78 = arith.constant 0.000000e+00 : f32
    %105 = vector.broadcast %cst_78 : f32 to vector<2x32xf32>
    %c0_79 = arith.constant 0 : index
    %c0_80 = arith.constant 0 : index
    %c0_81 = arith.constant 0 : index
    %106 = vector.load %arg4[%c0_79, %c0_80, %c0_81] : memref<11x32x32xf32, #tpu.memory_space<vmem>>, vector<1x32x32xf32>
    %107 = vector.shape_cast %106 : vector<1x32x32xf32> to vector<32x32xf32>
    %cst_82 = arith.constant dense<0.000000e+00> : vector<2x32xf32>
    %108 = tpu.matmul %104, %107, %cst_82 {dimension_numbers = #tpu.dot_dimension_numbers<[1], [0], [0], [1], [0, 0, 1, 1], [], []>} : vector<2x32xf32>, vector<32x32xf32>, vector<2x32xf32> -> vector<2x32xf32>
    %c0_83 = arith.constant 0 : index
    %c0_84 = arith.constant 0 : index
    %c0_85 = arith.constant 0 : index
    %109 = vector.load %arg8[%c0_83, %c0_84, %c0_85] : memref<2x8x32xf32, #tpu.memory_space<vmem>>, vector<2x8x32xf32>
    %110 = vector.shape_cast %108 : vector<2x32xf32> to vector<2x1x32xf32>
    %111 = vector.broadcast %110 : vector<2x1x32xf32> to vector<2x8x32xf32>
    %112 = arith.mulf %109, %111 : vector<2x8x32xf32>
    %cst_86 = arith.constant dense<0.000000e+00> : vector<2x8xf32>
    %113 = vector.multi_reduction <add>, %112, %cst_86 [2] : vector<2x8x32xf32> to vector<2x8xf32>
    %c0_87 = arith.constant 0 : index
    %c0_88 = arith.constant 0 : index
    %c0_89 = arith.constant 0 : index
    %114 = vector.load %arg9[%c0_87, %c0_88, %c0_89] : memref<4x2x8xf32, #tpu.memory_space<vmem>>, vector<1x2x8xf32>
    %115 = vector.shape_cast %114 : vector<1x2x8xf32> to vector<2x8xf32>
    %116 = arith.addf %113, %115 : vector<2x8xf32>
    %cst_90 = arith.constant dense<0xFF800000> : vector<2xf32>
    %117 = vector.multi_reduction <maximumf>, %116, %cst_90 [1] : vector<2x8xf32> to vector<2xf32>
    %118 = vector.shape_cast %117 : vector<2xf32> to vector<2x1xf32>
    %119 = vector.broadcast %118 : vector<2x1xf32> to vector<2x8xf32>
    %120 = arith.subf %116, %119 : vector<2x8xf32>
    %121 = math.exp %120 : vector<2x8xf32>
    %cst_91 = arith.constant dense<0.000000e+00> : vector<2xf32>
    %122 = vector.multi_reduction <add>, %121, %cst_91 [1] : vector<2x8xf32> to vector<2xf32>
    %123 = vector.shape_cast %122 : vector<2xf32> to vector<2x1xf32>
    %124 = vector.broadcast %123 : vector<2x1xf32> to vector<2x8xf32>
    %125 = arith.divf %121, %124 : vector<2x8xf32>
    %126 = vector.shape_cast %125 : vector<2x8xf32> to vector<2x8x1xf32>
    %c0_92 = arith.constant 0 : index
    %c0_93 = arith.constant 0 : index
    %c0_94 = arith.constant 0 : index
    %127 = vector.load %arg0[%c0_92, %c0_93, %c0_94] : memref<2x8x32xf32, #tpu.memory_space<vmem>>, vector<2x8x32xf32>
    %128 = vector.broadcast %126 : vector<2x8x1xf32> to vector<2x8x32xf32>
    %129 = arith.mulf %128, %127 : vector<2x8x32xf32>
    %cst_95 = arith.constant dense<0.000000e+00> : vector<2x32xf32>
    %130 = vector.multi_reduction <add>, %129, %cst_95 [1] : vector<2x8x32xf32> to vector<2x32xf32>
    %131 = vector.shape_cast %105 : vector<2x32xf32> to vector<1x2x32xf32>
    %132 = vector.shape_cast %131 : vector<1x2x32xf32> to vector<1x2x32xf32>
    %133 = vector.broadcast %132 : vector<1x2x32xf32> to vector<2x2x32xf32>
    %c1_96 = arith.constant 1 : index
    %c0_97 = arith.constant 0 : index
    %c0_98 = arith.constant 0 : index
    %134 = vector.load %arg4[%c1_96, %c0_97, %c0_98] : memref<11x32x32xf32, #tpu.memory_space<vmem>>, vector<2x32x32xf32>
    "tpu.trace_start"() <{level = 10 : i32, message = "rmk,rkn->rmn"}> : () -> ()
    %cst_99 = arith.constant dense<0.000000e+00> : vector<2x2x32xf32>
    %135 = tpu.matmul %133, %134, %cst_99 {dimension_numbers = #tpu.dot_dimension_numbers<[2], [1], [1], [2], [0, 0, 0, 1, 1, 2], [0], [0]>} : vector<2x2x32xf32>, vector<2x32x32xf32>, vector<2x2x32xf32> -> vector<2x2x32xf32>
    "tpu.trace_stop"() : () -> ()
    %c4 = arith.constant 4 : index
    %c0_100 = arith.constant 0 : index
    %136 = vector.load %arg5[%c4, %c0_100] : memref<13x32xf32, #tpu.memory_space<vmem>>, vector<2x32xf32>
    %137 = vector.shape_cast %136 : vector<2x32xf32> to vector<2x1x32xf32>
    %138 = vector.broadcast %137 : vector<2x1x32xf32> to vector<2x2x32xf32>
    %139 = arith.addf %135, %138 : vector<2x2x32xf32>
    %140 = vector.shape_cast %130 : vector<2x32xf32> to vector<1x2x32xf32>
    %c9 = arith.constant 9 : index
    %c0_101 = arith.constant 0 : index
    %141 = vector.load %arg5[%c9, %c0_101] : memref<13x32xf32, #tpu.memory_space<vmem>>, vector<2x32xf32>
    %142 = vector.shape_cast %141 : vector<2x32xf32> to vector<2x1x32xf32>
    %143 = vector.broadcast %140 : vector<1x2x32xf32> to vector<2x2x32xf32>
    %144 = vector.broadcast %142 : vector<2x1x32xf32> to vector<2x2x32xf32>
    %145 = arith.mulf %143, %144 : vector<2x2x32xf32>
    %c3_102 = arith.constant 3 : index
    %c0_103 = arith.constant 0 : index
    %c0_104 = arith.constant 0 : index
    %146 = vector.load %arg4[%c3_102, %c0_103, %c0_104] : memref<11x32x32xf32, #tpu.memory_space<vmem>>, vector<2x32x32xf32>
    "tpu.trace_start"() <{level = 10 : i32, message = "rmk,rkn->rmn"}> : () -> ()
    %cst_105 = arith.constant dense<0.000000e+00> : vector<2x2x32xf32>
    %147 = tpu.matmul %145, %146, %cst_105 {dimension_numbers = #tpu.dot_dimension_numbers<[2], [1], [1], [2], [0, 0, 0, 1, 1, 2], [0], [0]>} : vector<2x2x32xf32>, vector<2x32x32xf32>, vector<2x2x32xf32> -> vector<2x2x32xf32>
    "tpu.trace_stop"() : () -> ()
    %148 = arith.mulf %139, %147 : vector<2x2x32xf32>
    %c0_106 = arith.constant 0 : index
    %c0_107 = arith.constant 0 : index
    %c0_108 = arith.constant 0 : index
    %c0_109 = arith.constant 0 : index
    %149 = vector.load %arg2[%c0_106, %c0_107, %c0_108, %c0_109] : memref<2x2x10x32xf32, #tpu.memory_space<vmem>>, vector<2x2x10x32xf32>
    %150 = vector.shape_cast %148 : vector<2x2x32xf32> to vector<2x2x1x32xf32>
    %151 = vector.broadcast %150 : vector<2x2x1x32xf32> to vector<2x2x10x32xf32>
    %152 = arith.mulf %149, %151 : vector<2x2x10x32xf32>
    %c0_110 = arith.constant 0 : index
    %c0_111 = arith.constant 0 : index
    %c0_112 = arith.constant 0 : index
    %c0_113 = arith.constant 0 : index
    %153 = vector.load %arg7[%c0_110, %c0_111, %c0_112, %c0_113] : memref<2x2x10x32xf32, #tpu.memory_space<vmem>>, vector<2x2x10x32xf32>
    %154 = vector.shape_cast %145 : vector<2x2x32xf32> to vector<2x2x1x32xf32>
    %155 = vector.broadcast %154 : vector<2x2x1x32xf32> to vector<2x2x10x32xf32>
    %156 = arith.mulf %153, %155 : vector<2x2x10x32xf32>
    %157 = arith.addf %152, %156 : vector<2x2x10x32xf32>
    %cst_114 = arith.constant dense<0.000000e+00> : vector<2x2x10xf32>
    %158 = vector.multi_reduction <add>, %157, %cst_114 [3] : vector<2x2x10x32xf32> to vector<2x2x10xf32>
    %cst_115 = arith.constant dense<0xFF800000> : vector<2x2xf32>
    %159 = vector.multi_reduction <maximumf>, %158, %cst_115 [2] : vector<2x2x10xf32> to vector<2x2xf32>
    %160 = vector.shape_cast %159 : vector<2x2xf32> to vector<2x2x1xf32>
    %161 = vector.broadcast %160 : vector<2x2x1xf32> to vector<2x2x10xf32>
    %162 = arith.subf %158, %161 : vector<2x2x10xf32>
    %163 = math.exp %162 : vector<2x2x10xf32>
    %cst_116 = arith.constant dense<0.000000e+00> : vector<2x2xf32>
    %164 = vector.multi_reduction <add>, %163, %cst_116 [2] : vector<2x2x10xf32> to vector<2x2xf32>
    %165 = vector.shape_cast %164 : vector<2x2xf32> to vector<2x2x1xf32>
    %166 = vector.broadcast %165 : vector<2x2x1xf32> to vector<2x2x10xf32>
    %167 = arith.divf %163, %166 : vector<2x2x10xf32>
    %168 = vector.shape_cast %167 : vector<2x2x10xf32> to vector<2x2x10x1xf32>
    %169 = vector.broadcast %168 : vector<2x2x10x1xf32> to vector<2x2x10x32xf32>
    %170 = arith.mulf %169, %149 : vector<2x2x10x32xf32>
    %cst_117 = arith.constant dense<0.000000e+00> : vector<2x2x32xf32>
    %171 = vector.multi_reduction <add>, %170, %cst_117 [2] : vector<2x2x10x32xf32> to vector<2x2x32xf32>
    %172 = vector.extract_strided_slice %171 {offsets = [0, 0, 0], sizes = [1, 2, 32], strides = [1, 1, 1]} : vector<2x2x32xf32> to vector<1x2x32xf32>
    %173 = vector.shape_cast %172 : vector<1x2x32xf32> to vector<2x32xf32>
    %c7_118 = arith.constant 7 : index
    %c0_119 = arith.constant 0 : index
    %c0_120 = arith.constant 0 : index
    %174 = vector.load %arg4[%c7_118, %c0_119, %c0_120] : memref<11x32x32xf32, #tpu.memory_space<vmem>>, vector<1x32x32xf32>
    %175 = vector.shape_cast %174 : vector<1x32x32xf32> to vector<32x32xf32>
    %cst_121 = arith.constant dense<0.000000e+00> : vector<2x32xf32>
    %176 = tpu.matmul %173, %175, %cst_121 {dimension_numbers = #tpu.dot_dimension_numbers<[1], [0], [0], [1], [0, 0, 1, 1], [], []>} : vector<2x32xf32>, vector<32x32xf32>, vector<2x32xf32> -> vector<2x32xf32>
    %177 = vector.extract_strided_slice %171 {offsets = [1, 0, 0], sizes = [1, 2, 32], strides = [1, 1, 1]} : vector<2x2x32xf32> to vector<1x2x32xf32>
    %178 = vector.shape_cast %177 : vector<1x2x32xf32> to vector<2x32xf32>
    %c8_122 = arith.constant 8 : index
    %c0_123 = arith.constant 0 : index
    %c0_124 = arith.constant 0 : index
    %179 = vector.load %arg4[%c8_122, %c0_123, %c0_124] : memref<11x32x32xf32, #tpu.memory_space<vmem>>, vector<1x32x32xf32>
    %180 = vector.shape_cast %179 : vector<1x32x32xf32> to vector<32x32xf32>
    %cst_125 = arith.constant dense<0.000000e+00> : vector<2x32xf32>
    %181 = tpu.matmul %178, %180, %cst_125 {dimension_numbers = #tpu.dot_dimension_numbers<[1], [0], [0], [1], [0, 0, 1, 1], [], []>} : vector<2x32xf32>, vector<32x32xf32>, vector<2x32xf32> -> vector<2x32xf32>
    %182 = arith.addf %176, %181 : vector<2x32xf32>
    %c11 = arith.constant 11 : index
    %c0_126 = arith.constant 0 : index
    %183 = vector.load %arg5[%c11, %c0_126] : memref<13x32xf32, #tpu.memory_space<vmem>>, vector<1x32xf32>
    %184 = vector.shape_cast %183 : vector<1x32xf32> to vector<32xf32>
    %185 = vector.shape_cast %184 : vector<32xf32> to vector<1x32xf32>
    %186 = vector.broadcast %185 : vector<1x32xf32> to vector<2x32xf32>
    %187 = arith.addf %182, %186 : vector<2x32xf32>
    %c9_127 = arith.constant 9 : index
    %c0_128 = arith.constant 0 : index
    %c0_129 = arith.constant 0 : index
    %188 = vector.load %arg4[%c9_127, %c0_128, %c0_129] : memref<11x32x32xf32, #tpu.memory_space<vmem>>, vector<1x32x32xf32>
    %189 = vector.shape_cast %188 : vector<1x32x32xf32> to vector<32x32xf32>
    %cst_130 = arith.constant dense<0.000000e+00> : vector<2x32xf32>
    %190 = tpu.matmul %187, %189, %cst_130 {dimension_numbers = #tpu.dot_dimension_numbers<[1], [0], [0], [1], [0, 0, 1, 1], [], []>} : vector<2x32xf32>, vector<32x32xf32>, vector<2x32xf32> -> vector<2x32xf32>
    %c10 = arith.constant 10 : index
    %c0_131 = arith.constant 0 : index
    %c0_132 = arith.constant 0 : index
    %191 = vector.load %arg4[%c10, %c0_131, %c0_132] : memref<11x32x32xf32, #tpu.memory_space<vmem>>, vector<1x32x32xf32>
    %192 = vector.shape_cast %191 : vector<1x32x32xf32> to vector<32x32xf32>
    %cst_133 = arith.constant dense<0.000000e+00> : vector<2x32xf32>
    %193 = tpu.matmul %105, %192, %cst_133 {dimension_numbers = #tpu.dot_dimension_numbers<[1], [0], [0], [1], [0, 0, 1, 1], [], []>} : vector<2x32xf32>, vector<32x32xf32>, vector<2x32xf32> -> vector<2x32xf32>
    %194 = arith.addf %190, %193 : vector<2x32xf32>
    %c12 = arith.constant 12 : index
    %c0_134 = arith.constant 0 : index
    %195 = vector.load %arg5[%c12, %c0_134] : memref<13x32xf32, #tpu.memory_space<vmem>>, vector<1x32xf32>
    %196 = vector.shape_cast %195 : vector<1x32xf32> to vector<32xf32>
    %197 = vector.shape_cast %196 : vector<32xf32> to vector<1x32xf32>
    %198 = vector.broadcast %197 : vector<1x32xf32> to vector<2x32xf32>
    %199 = arith.addf %194, %198 : vector<2x32xf32>
    %c0_135 = arith.constant 0 : index
    %c0_136 = arith.constant 0 : index
    %c0_137 = arith.constant 0 : index
    %200 = vector.load %arg4[%c0_135, %c0_136, %c0_137] : memref<11x32x32xf32, #tpu.memory_space<vmem>>, vector<1x32x32xf32>
    %201 = vector.shape_cast %200 : vector<1x32x32xf32> to vector<32x32xf32>
    %cst_138 = arith.constant dense<0.000000e+00> : vector<2x32xf32>
    %202 = tpu.matmul %130, %201, %cst_138 {dimension_numbers = #tpu.dot_dimension_numbers<[1], [0], [0], [1], [0, 0, 1, 1], [], []>} : vector<2x32xf32>, vector<32x32xf32>, vector<2x32xf32> -> vector<2x32xf32>
    %c0_139 = arith.constant 0 : index
    %c0_140 = arith.constant 0 : index
    %c0_141 = arith.constant 0 : index
    %203 = vector.load %arg8[%c0_139, %c0_140, %c0_141] : memref<2x8x32xf32, #tpu.memory_space<vmem>>, vector<2x8x32xf32>
    %204 = vector.shape_cast %202 : vector<2x32xf32> to vector<2x1x32xf32>
    %205 = vector.broadcast %204 : vector<2x1x32xf32> to vector<2x8x32xf32>
    %206 = arith.mulf %203, %205 : vector<2x8x32xf32>
    %cst_142 = arith.constant dense<0.000000e+00> : vector<2x8xf32>
    %207 = vector.multi_reduction <add>, %206, %cst_142 [2] : vector<2x8x32xf32> to vector<2x8xf32>
    %c1_143 = arith.constant 1 : index
    %c0_144 = arith.constant 0 : index
    %c0_145 = arith.constant 0 : index
    %208 = vector.load %arg9[%c1_143, %c0_144, %c0_145] : memref<4x2x8xf32, #tpu.memory_space<vmem>>, vector<1x2x8xf32>
    %209 = vector.shape_cast %208 : vector<1x2x8xf32> to vector<2x8xf32>
    %210 = arith.addf %207, %209 : vector<2x8xf32>
    %cst_146 = arith.constant dense<0xFF800000> : vector<2xf32>
    %211 = vector.multi_reduction <maximumf>, %210, %cst_146 [1] : vector<2x8xf32> to vector<2xf32>
    %212 = vector.shape_cast %211 : vector<2xf32> to vector<2x1xf32>
    %213 = vector.broadcast %212 : vector<2x1xf32> to vector<2x8xf32>
    %214 = arith.subf %210, %213 : vector<2x8xf32>
    %215 = math.exp %214 : vector<2x8xf32>
    %cst_147 = arith.constant dense<0.000000e+00> : vector<2xf32>
    %216 = vector.multi_reduction <add>, %215, %cst_147 [1] : vector<2x8xf32> to vector<2xf32>
    %217 = vector.shape_cast %216 : vector<2xf32> to vector<2x1xf32>
    %218 = vector.broadcast %217 : vector<2x1xf32> to vector<2x8xf32>
    %219 = arith.divf %215, %218 : vector<2x8xf32>
    %220 = vector.shape_cast %219 : vector<2x8xf32> to vector<2x8x1xf32>
    %c0_148 = arith.constant 0 : index
    %c0_149 = arith.constant 0 : index
    %c0_150 = arith.constant 0 : index
    %221 = vector.load %arg0[%c0_148, %c0_149, %c0_150] : memref<2x8x32xf32, #tpu.memory_space<vmem>>, vector<2x8x32xf32>
    %222 = vector.broadcast %220 : vector<2x8x1xf32> to vector<2x8x32xf32>
    %223 = arith.mulf %222, %221 : vector<2x8x32xf32>
    %cst_151 = arith.constant dense<0.000000e+00> : vector<2x32xf32>
    %224 = vector.multi_reduction <add>, %223, %cst_151 [1] : vector<2x8x32xf32> to vector<2x32xf32>
    %225 = vector.shape_cast %199 : vector<2x32xf32> to vector<1x2x32xf32>
    %226 = vector.shape_cast %225 : vector<1x2x32xf32> to vector<1x2x32xf32>
    %227 = vector.broadcast %226 : vector<1x2x32xf32> to vector<2x2x32xf32>
    %c1_152 = arith.constant 1 : index
    %c0_153 = arith.constant 0 : index
    %c0_154 = arith.constant 0 : index
    %228 = vector.load %arg4[%c1_152, %c0_153, %c0_154] : memref<11x32x32xf32, #tpu.memory_space<vmem>>, vector<2x32x32xf32>
    "tpu.trace_start"() <{level = 10 : i32, message = "rmk,rkn->rmn"}> : () -> ()
    %cst_155 = arith.constant dense<0.000000e+00> : vector<2x2x32xf32>
    %229 = tpu.matmul %227, %228, %cst_155 {dimension_numbers = #tpu.dot_dimension_numbers<[2], [1], [1], [2], [0, 0, 0, 1, 1, 2], [0], [0]>} : vector<2x2x32xf32>, vector<2x32x32xf32>, vector<2x2x32xf32> -> vector<2x2x32xf32>
    "tpu.trace_stop"() : () -> ()
    %c4_156 = arith.constant 4 : index
    %c0_157 = arith.constant 0 : index
    %230 = vector.load %arg5[%c4_156, %c0_157] : memref<13x32xf32, #tpu.memory_space<vmem>>, vector<2x32xf32>
    %231 = vector.shape_cast %230 : vector<2x32xf32> to vector<2x1x32xf32>
    %232 = vector.broadcast %231 : vector<2x1x32xf32> to vector<2x2x32xf32>
    %233 = arith.addf %229, %232 : vector<2x2x32xf32>
    %234 = vector.shape_cast %224 : vector<2x32xf32> to vector<1x2x32xf32>
    %c9_158 = arith.constant 9 : index
    %c0_159 = arith.constant 0 : index
    %235 = vector.load %arg5[%c9_158, %c0_159] : memref<13x32xf32, #tpu.memory_space<vmem>>, vector<2x32xf32>
    %236 = vector.shape_cast %235 : vector<2x32xf32> to vector<2x1x32xf32>
    %237 = vector.broadcast %234 : vector<1x2x32xf32> to vector<2x2x32xf32>
    %238 = vector.broadcast %236 : vector<2x1x32xf32> to vector<2x2x32xf32>
    %239 = arith.mulf %237, %238 : vector<2x2x32xf32>
    %c3_160 = arith.constant 3 : index
    %c0_161 = arith.constant 0 : index
    %c0_162 = arith.constant 0 : index
    %240 = vector.load %arg4[%c3_160, %c0_161, %c0_162] : memref<11x32x32xf32, #tpu.memory_space<vmem>>, vector<2x32x32xf32>
    "tpu.trace_start"() <{level = 10 : i32, message = "rmk,rkn->rmn"}> : () -> ()
    %cst_163 = arith.constant dense<0.000000e+00> : vector<2x2x32xf32>
    %241 = tpu.matmul %239, %240, %cst_163 {dimension_numbers = #tpu.dot_dimension_numbers<[2], [1], [1], [2], [0, 0, 0, 1, 1, 2], [0], [0]>} : vector<2x2x32xf32>, vector<2x32x32xf32>, vector<2x2x32xf32> -> vector<2x2x32xf32>
    "tpu.trace_stop"() : () -> ()
    %242 = arith.mulf %233, %241 : vector<2x2x32xf32>
    %c0_164 = arith.constant 0 : index
    %c0_165 = arith.constant 0 : index
    %c0_166 = arith.constant 0 : index
    %c0_167 = arith.constant 0 : index
    %243 = vector.load %arg2[%c0_164, %c0_165, %c0_166, %c0_167] : memref<2x2x10x32xf32, #tpu.memory_space<vmem>>, vector<2x2x10x32xf32>
    %244 = vector.shape_cast %242 : vector<2x2x32xf32> to vector<2x2x1x32xf32>
    %245 = vector.broadcast %244 : vector<2x2x1x32xf32> to vector<2x2x10x32xf32>
    %246 = arith.mulf %243, %245 : vector<2x2x10x32xf32>
    %c0_168 = arith.constant 0 : index
    %c0_169 = arith.constant 0 : index
    %c0_170 = arith.constant 0 : index
    %c0_171 = arith.constant 0 : index
    %247 = vector.load %arg7[%c0_168, %c0_169, %c0_170, %c0_171] : memref<2x2x10x32xf32, #tpu.memory_space<vmem>>, vector<2x2x10x32xf32>
    %248 = vector.shape_cast %239 : vector<2x2x32xf32> to vector<2x2x1x32xf32>
    %249 = vector.broadcast %248 : vector<2x2x1x32xf32> to vector<2x2x10x32xf32>
    %250 = arith.mulf %247, %249 : vector<2x2x10x32xf32>
    %251 = arith.addf %246, %250 : vector<2x2x10x32xf32>
    %cst_172 = arith.constant dense<0.000000e+00> : vector<2x2x10xf32>
    %252 = vector.multi_reduction <add>, %251, %cst_172 [3] : vector<2x2x10x32xf32> to vector<2x2x10xf32>
    %cst_173 = arith.constant dense<0xFF800000> : vector<2x2xf32>
    %253 = vector.multi_reduction <maximumf>, %252, %cst_173 [2] : vector<2x2x10xf32> to vector<2x2xf32>
    %254 = vector.shape_cast %253 : vector<2x2xf32> to vector<2x2x1xf32>
    %255 = vector.broadcast %254 : vector<2x2x1xf32> to vector<2x2x10xf32>
    %256 = arith.subf %252, %255 : vector<2x2x10xf32>
    %257 = math.exp %256 : vector<2x2x10xf32>
    %cst_174 = arith.constant dense<0.000000e+00> : vector<2x2xf32>
    %258 = vector.multi_reduction <add>, %257, %cst_174 [2] : vector<2x2x10xf32> to vector<2x2xf32>
    %259 = vector.shape_cast %258 : vector<2x2xf32> to vector<2x2x1xf32>
    %260 = vector.broadcast %259 : vector<2x2x1xf32> to vector<2x2x10xf32>
    %261 = arith.divf %257, %260 : vector<2x2x10xf32>
    %262 = vector.shape_cast %261 : vector<2x2x10xf32> to vector<2x2x10x1xf32>
    %263 = vector.broadcast %262 : vector<2x2x10x1xf32> to vector<2x2x10x32xf32>
    %264 = arith.mulf %263, %243 : vector<2x2x10x32xf32>
    %cst_175 = arith.constant dense<0.000000e+00> : vector<2x2x32xf32>
    %265 = vector.multi_reduction <add>, %264, %cst_175 [2] : vector<2x2x10x32xf32> to vector<2x2x32xf32>
    %266 = vector.extract_strided_slice %265 {offsets = [0, 0, 0], sizes = [1, 2, 32], strides = [1, 1, 1]} : vector<2x2x32xf32> to vector<1x2x32xf32>
    %267 = vector.shape_cast %266 : vector<1x2x32xf32> to vector<2x32xf32>
    %c7_176 = arith.constant 7 : index
    %c0_177 = arith.constant 0 : index
    %c0_178 = arith.constant 0 : index
    %268 = vector.load %arg4[%c7_176, %c0_177, %c0_178] : memref<11x32x32xf32, #tpu.memory_space<vmem>>, vector<1x32x32xf32>
    %269 = vector.shape_cast %268 : vector<1x32x32xf32> to vector<32x32xf32>
    %cst_179 = arith.constant dense<0.000000e+00> : vector<2x32xf32>
    %270 = tpu.matmul %267, %269, %cst_179 {dimension_numbers = #tpu.dot_dimension_numbers<[1], [0], [0], [1], [0, 0, 1, 1], [], []>} : vector<2x32xf32>, vector<32x32xf32>, vector<2x32xf32> -> vector<2x32xf32>
    %271 = vector.extract_strided_slice %265 {offsets = [1, 0, 0], sizes = [1, 2, 32], strides = [1, 1, 1]} : vector<2x2x32xf32> to vector<1x2x32xf32>
    %272 = vector.shape_cast %271 : vector<1x2x32xf32> to vector<2x32xf32>
    %c8_180 = arith.constant 8 : index
    %c0_181 = arith.constant 0 : index
    %c0_182 = arith.constant 0 : index
    %273 = vector.load %arg4[%c8_180, %c0_181, %c0_182] : memref<11x32x32xf32, #tpu.memory_space<vmem>>, vector<1x32x32xf32>
    %274 = vector.shape_cast %273 : vector<1x32x32xf32> to vector<32x32xf32>
    %cst_183 = arith.constant dense<0.000000e+00> : vector<2x32xf32>
    %275 = tpu.matmul %272, %274, %cst_183 {dimension_numbers = #tpu.dot_dimension_numbers<[1], [0], [0], [1], [0, 0, 1, 1], [], []>} : vector<2x32xf32>, vector<32x32xf32>, vector<2x32xf32> -> vector<2x32xf32>
    %276 = arith.addf %270, %275 : vector<2x32xf32>
    %c11_184 = arith.constant 11 : index
    %c0_185 = arith.constant 0 : index
    %277 = vector.load %arg5[%c11_184, %c0_185] : memref<13x32xf32, #tpu.memory_space<vmem>>, vector<1x32xf32>
    %278 = vector.shape_cast %277 : vector<1x32xf32> to vector<32xf32>
    %279 = vector.shape_cast %278 : vector<32xf32> to vector<1x32xf32>
    %280 = vector.broadcast %279 : vector<1x32xf32> to vector<2x32xf32>
    %281 = arith.addf %276, %280 : vector<2x32xf32>
    %c9_186 = arith.constant 9 : index
    %c0_187 = arith.constant 0 : index
    %c0_188 = arith.constant 0 : index
    %282 = vector.load %arg4[%c9_186, %c0_187, %c0_188] : memref<11x32x32xf32, #tpu.memory_space<vmem>>, vector<1x32x32xf32>
    %283 = vector.shape_cast %282 : vector<1x32x32xf32> to vector<32x32xf32>
    %cst_189 = arith.constant dense<0.000000e+00> : vector<2x32xf32>
    %284 = tpu.matmul %281, %283, %cst_189 {dimension_numbers = #tpu.dot_dimension_numbers<[1], [0], [0], [1], [0, 0, 1, 1], [], []>} : vector<2x32xf32>, vector<32x32xf32>, vector<2x32xf32> -> vector<2x32xf32>
    %c10_190 = arith.constant 10 : index
    %c0_191 = arith.constant 0 : index
    %c0_192 = arith.constant 0 : index
    %285 = vector.load %arg4[%c10_190, %c0_191, %c0_192] : memref<11x32x32xf32, #tpu.memory_space<vmem>>, vector<1x32x32xf32>
    %286 = vector.shape_cast %285 : vector<1x32x32xf32> to vector<32x32xf32>
    %cst_193 = arith.constant dense<0.000000e+00> : vector<2x32xf32>
    %287 = tpu.matmul %199, %286, %cst_193 {dimension_numbers = #tpu.dot_dimension_numbers<[1], [0], [0], [1], [0, 0, 1, 1], [], []>} : vector<2x32xf32>, vector<32x32xf32>, vector<2x32xf32> -> vector<2x32xf32>
    %288 = arith.addf %284, %287 : vector<2x32xf32>
    %c12_194 = arith.constant 12 : index
    %c0_195 = arith.constant 0 : index
    %289 = vector.load %arg5[%c12_194, %c0_195] : memref<13x32xf32, #tpu.memory_space<vmem>>, vector<1x32xf32>
    %290 = vector.shape_cast %289 : vector<1x32xf32> to vector<32xf32>
    %291 = vector.shape_cast %290 : vector<32xf32> to vector<1x32xf32>
    %292 = vector.broadcast %291 : vector<1x32xf32> to vector<2x32xf32>
    %293 = arith.addf %288, %292 : vector<2x32xf32>
    %c0_196 = arith.constant 0 : index
    %c0_197 = arith.constant 0 : index
    %c0_198 = arith.constant 0 : index
    %294 = vector.load %arg4[%c0_196, %c0_197, %c0_198] : memref<11x32x32xf32, #tpu.memory_space<vmem>>, vector<1x32x32xf32>
    %295 = vector.shape_cast %294 : vector<1x32x32xf32> to vector<32x32xf32>
    %cst_199 = arith.constant dense<0.000000e+00> : vector<2x32xf32>
    %296 = tpu.matmul %224, %295, %cst_199 {dimension_numbers = #tpu.dot_dimension_numbers<[1], [0], [0], [1], [0, 0, 1, 1], [], []>} : vector<2x32xf32>, vector<32x32xf32>, vector<2x32xf32> -> vector<2x32xf32>
    %c0_200 = arith.constant 0 : index
    %c0_201 = arith.constant 0 : index
    %c0_202 = arith.constant 0 : index
    %297 = vector.load %arg8[%c0_200, %c0_201, %c0_202] : memref<2x8x32xf32, #tpu.memory_space<vmem>>, vector<2x8x32xf32>
    %298 = vector.shape_cast %296 : vector<2x32xf32> to vector<2x1x32xf32>
    %299 = vector.broadcast %298 : vector<2x1x32xf32> to vector<2x8x32xf32>
    %300 = arith.mulf %297, %299 : vector<2x8x32xf32>
    %cst_203 = arith.constant dense<0.000000e+00> : vector<2x8xf32>
    %301 = vector.multi_reduction <add>, %300, %cst_203 [2] : vector<2x8x32xf32> to vector<2x8xf32>
    %c2_204 = arith.constant 2 : index
    %c0_205 = arith.constant 0 : index
    %c0_206 = arith.constant 0 : index
    %302 = vector.load %arg9[%c2_204, %c0_205, %c0_206] : memref<4x2x8xf32, #tpu.memory_space<vmem>>, vector<1x2x8xf32>
    %303 = vector.shape_cast %302 : vector<1x2x8xf32> to vector<2x8xf32>
    %304 = arith.addf %301, %303 : vector<2x8xf32>
    %cst_207 = arith.constant dense<0xFF800000> : vector<2xf32>
    %305 = vector.multi_reduction <maximumf>, %304, %cst_207 [1] : vector<2x8xf32> to vector<2xf32>
    %306 = vector.shape_cast %305 : vector<2xf32> to vector<2x1xf32>
    %307 = vector.broadcast %306 : vector<2x1xf32> to vector<2x8xf32>
    %308 = arith.subf %304, %307 : vector<2x8xf32>
    %309 = math.exp %308 : vector<2x8xf32>
    %cst_208 = arith.constant dense<0.000000e+00> : vector<2xf32>
    %310 = vector.multi_reduction <add>, %309, %cst_208 [1] : vector<2x8xf32> to vector<2xf32>
    %311 = vector.shape_cast %310 : vector<2xf32> to vector<2x1xf32>
    %312 = vector.broadcast %311 : vector<2x1xf32> to vector<2x8xf32>
    %313 = arith.divf %309, %312 : vector<2x8xf32>
    %314 = vector.shape_cast %313 : vector<2x8xf32> to vector<2x8x1xf32>
    %c0_209 = arith.constant 0 : index
    %c0_210 = arith.constant 0 : index
    %c0_211 = arith.constant 0 : index
    %315 = vector.load %arg0[%c0_209, %c0_210, %c0_211] : memref<2x8x32xf32, #tpu.memory_space<vmem>>, vector<2x8x32xf32>
    %316 = vector.broadcast %314 : vector<2x8x1xf32> to vector<2x8x32xf32>
    %317 = arith.mulf %316, %315 : vector<2x8x32xf32>
    %cst_212 = arith.constant dense<0.000000e+00> : vector<2x32xf32>
    %318 = vector.multi_reduction <add>, %317, %cst_212 [1] : vector<2x8x32xf32> to vector<2x32xf32>
    %319 = vector.shape_cast %293 : vector<2x32xf32> to vector<1x2x32xf32>
    %320 = vector.shape_cast %319 : vector<1x2x32xf32> to vector<1x2x32xf32>
    %321 = vector.broadcast %320 : vector<1x2x32xf32> to vector<2x2x32xf32>
    %c1_213 = arith.constant 1 : index
    %c0_214 = arith.constant 0 : index
    %c0_215 = arith.constant 0 : index
    %322 = vector.load %arg4[%c1_213, %c0_214, %c0_215] : memref<11x32x32xf32, #tpu.memory_space<vmem>>, vector<2x32x32xf32>
    "tpu.trace_start"() <{level = 10 : i32, message = "rmk,rkn->rmn"}> : () -> ()
    %cst_216 = arith.constant dense<0.000000e+00> : vector<2x2x32xf32>
    %323 = tpu.matmul %321, %322, %cst_216 {dimension_numbers = #tpu.dot_dimension_numbers<[2], [1], [1], [2], [0, 0, 0, 1, 1, 2], [0], [0]>} : vector<2x2x32xf32>, vector<2x32x32xf32>, vector<2x2x32xf32> -> vector<2x2x32xf32>
    "tpu.trace_stop"() : () -> ()
    %c4_217 = arith.constant 4 : index
    %c0_218 = arith.constant 0 : index
    %324 = vector.load %arg5[%c4_217, %c0_218] : memref<13x32xf32, #tpu.memory_space<vmem>>, vector<2x32xf32>
    %325 = vector.shape_cast %324 : vector<2x32xf32> to vector<2x1x32xf32>
    %326 = vector.broadcast %325 : vector<2x1x32xf32> to vector<2x2x32xf32>
    %327 = arith.addf %323, %326 : vector<2x2x32xf32>
    %328 = vector.shape_cast %318 : vector<2x32xf32> to vector<1x2x32xf32>
    %c9_219 = arith.constant 9 : index
    %c0_220 = arith.constant 0 : index
    %329 = vector.load %arg5[%c9_219, %c0_220] : memref<13x32xf32, #tpu.memory_space<vmem>>, vector<2x32xf32>
    %330 = vector.shape_cast %329 : vector<2x32xf32> to vector<2x1x32xf32>
    %331 = vector.broadcast %328 : vector<1x2x32xf32> to vector<2x2x32xf32>
    %332 = vector.broadcast %330 : vector<2x1x32xf32> to vector<2x2x32xf32>
    %333 = arith.mulf %331, %332 : vector<2x2x32xf32>
    %c3_221 = arith.constant 3 : index
    %c0_222 = arith.constant 0 : index
    %c0_223 = arith.constant 0 : index
    %334 = vector.load %arg4[%c3_221, %c0_222, %c0_223] : memref<11x32x32xf32, #tpu.memory_space<vmem>>, vector<2x32x32xf32>
    "tpu.trace_start"() <{level = 10 : i32, message = "rmk,rkn->rmn"}> : () -> ()
    %cst_224 = arith.constant dense<0.000000e+00> : vector<2x2x32xf32>
    %335 = tpu.matmul %333, %334, %cst_224 {dimension_numbers = #tpu.dot_dimension_numbers<[2], [1], [1], [2], [0, 0, 0, 1, 1, 2], [0], [0]>} : vector<2x2x32xf32>, vector<2x32x32xf32>, vector<2x2x32xf32> -> vector<2x2x32xf32>
    "tpu.trace_stop"() : () -> ()
    %336 = arith.mulf %327, %335 : vector<2x2x32xf32>
    %c0_225 = arith.constant 0 : index
    %c0_226 = arith.constant 0 : index
    %c0_227 = arith.constant 0 : index
    %c0_228 = arith.constant 0 : index
    %337 = vector.load %arg2[%c0_225, %c0_226, %c0_227, %c0_228] : memref<2x2x10x32xf32, #tpu.memory_space<vmem>>, vector<2x2x10x32xf32>
    %338 = vector.shape_cast %336 : vector<2x2x32xf32> to vector<2x2x1x32xf32>
    %339 = vector.broadcast %338 : vector<2x2x1x32xf32> to vector<2x2x10x32xf32>
    %340 = arith.mulf %337, %339 : vector<2x2x10x32xf32>
    %c0_229 = arith.constant 0 : index
    %c0_230 = arith.constant 0 : index
    %c0_231 = arith.constant 0 : index
    %c0_232 = arith.constant 0 : index
    %341 = vector.load %arg7[%c0_229, %c0_230, %c0_231, %c0_232] : memref<2x2x10x32xf32, #tpu.memory_space<vmem>>, vector<2x2x10x32xf32>
    %342 = vector.shape_cast %333 : vector<2x2x32xf32> to vector<2x2x1x32xf32>
    %343 = vector.broadcast %342 : vector<2x2x1x32xf32> to vector<2x2x10x32xf32>
    %344 = arith.mulf %341, %343 : vector<2x2x10x32xf32>
    %345 = arith.addf %340, %344 : vector<2x2x10x32xf32>
    %cst_233 = arith.constant dense<0.000000e+00> : vector<2x2x10xf32>
    %346 = vector.multi_reduction <add>, %345, %cst_233 [3] : vector<2x2x10x32xf32> to vector<2x2x10xf32>
    %cst_234 = arith.constant dense<0xFF800000> : vector<2x2xf32>
    %347 = vector.multi_reduction <maximumf>, %346, %cst_234 [2] : vector<2x2x10xf32> to vector<2x2xf32>
    %348 = vector.shape_cast %347 : vector<2x2xf32> to vector<2x2x1xf32>
    %349 = vector.broadcast %348 : vector<2x2x1xf32> to vector<2x2x10xf32>
    %350 = arith.subf %346, %349 : vector<2x2x10xf32>
    %351 = math.exp %350 : vector<2x2x10xf32>
    %cst_235 = arith.constant dense<0.000000e+00> : vector<2x2xf32>
    %352 = vector.multi_reduction <add>, %351, %cst_235 [2] : vector<2x2x10xf32> to vector<2x2xf32>
    %353 = vector.shape_cast %352 : vector<2x2xf32> to vector<2x2x1xf32>
    %354 = vector.broadcast %353 : vector<2x2x1xf32> to vector<2x2x10xf32>
    %355 = arith.divf %351, %354 : vector<2x2x10xf32>
    %356 = vector.shape_cast %355 : vector<2x2x10xf32> to vector<2x2x10x1xf32>
    %357 = vector.broadcast %356 : vector<2x2x10x1xf32> to vector<2x2x10x32xf32>
    %358 = arith.mulf %357, %337 : vector<2x2x10x32xf32>
    %cst_236 = arith.constant dense<0.000000e+00> : vector<2x2x32xf32>
    %359 = vector.multi_reduction <add>, %358, %cst_236 [2] : vector<2x2x10x32xf32> to vector<2x2x32xf32>
    %360 = vector.extract_strided_slice %359 {offsets = [0, 0, 0], sizes = [1, 2, 32], strides = [1, 1, 1]} : vector<2x2x32xf32> to vector<1x2x32xf32>
    %361 = vector.shape_cast %360 : vector<1x2x32xf32> to vector<2x32xf32>
    %c7_237 = arith.constant 7 : index
    %c0_238 = arith.constant 0 : index
    %c0_239 = arith.constant 0 : index
    %362 = vector.load %arg4[%c7_237, %c0_238, %c0_239] : memref<11x32x32xf32, #tpu.memory_space<vmem>>, vector<1x32x32xf32>
    %363 = vector.shape_cast %362 : vector<1x32x32xf32> to vector<32x32xf32>
    %cst_240 = arith.constant dense<0.000000e+00> : vector<2x32xf32>
    %364 = tpu.matmul %361, %363, %cst_240 {dimension_numbers = #tpu.dot_dimension_numbers<[1], [0], [0], [1], [0, 0, 1, 1], [], []>} : vector<2x32xf32>, vector<32x32xf32>, vector<2x32xf32> -> vector<2x32xf32>
    %365 = vector.extract_strided_slice %359 {offsets = [1, 0, 0], sizes = [1, 2, 32], strides = [1, 1, 1]} : vector<2x2x32xf32> to vector<1x2x32xf32>
    %366 = vector.shape_cast %365 : vector<1x2x32xf32> to vector<2x32xf32>
    %c8_241 = arith.constant 8 : index
    %c0_242 = arith.constant 0 : index
    %c0_243 = arith.constant 0 : index
    %367 = vector.load %arg4[%c8_241, %c0_242, %c0_243] : memref<11x32x32xf32, #tpu.memory_space<vmem>>, vector<1x32x32xf32>
    %368 = vector.shape_cast %367 : vector<1x32x32xf32> to vector<32x32xf32>
    %cst_244 = arith.constant dense<0.000000e+00> : vector<2x32xf32>
    %369 = tpu.matmul %366, %368, %cst_244 {dimension_numbers = #tpu.dot_dimension_numbers<[1], [0], [0], [1], [0, 0, 1, 1], [], []>} : vector<2x32xf32>, vector<32x32xf32>, vector<2x32xf32> -> vector<2x32xf32>
    %370 = arith.addf %364, %369 : vector<2x32xf32>
    %c11_245 = arith.constant 11 : index
    %c0_246 = arith.constant 0 : index
    %371 = vector.load %arg5[%c11_245, %c0_246] : memref<13x32xf32, #tpu.memory_space<vmem>>, vector<1x32xf32>
    %372 = vector.shape_cast %371 : vector<1x32xf32> to vector<32xf32>
    %373 = vector.shape_cast %372 : vector<32xf32> to vector<1x32xf32>
    %374 = vector.broadcast %373 : vector<1x32xf32> to vector<2x32xf32>
    %375 = arith.addf %370, %374 : vector<2x32xf32>
    %c9_247 = arith.constant 9 : index
    %c0_248 = arith.constant 0 : index
    %c0_249 = arith.constant 0 : index
    %376 = vector.load %arg4[%c9_247, %c0_248, %c0_249] : memref<11x32x32xf32, #tpu.memory_space<vmem>>, vector<1x32x32xf32>
    %377 = vector.shape_cast %376 : vector<1x32x32xf32> to vector<32x32xf32>
    %cst_250 = arith.constant dense<0.000000e+00> : vector<2x32xf32>
    %378 = tpu.matmul %375, %377, %cst_250 {dimension_numbers = #tpu.dot_dimension_numbers<[1], [0], [0], [1], [0, 0, 1, 1], [], []>} : vector<2x32xf32>, vector<32x32xf32>, vector<2x32xf32> -> vector<2x32xf32>
    %c10_251 = arith.constant 10 : index
    %c0_252 = arith.constant 0 : index
    %c0_253 = arith.constant 0 : index
    %379 = vector.load %arg4[%c10_251, %c0_252, %c0_253] : memref<11x32x32xf32, #tpu.memory_space<vmem>>, vector<1x32x32xf32>
    %380 = vector.shape_cast %379 : vector<1x32x32xf32> to vector<32x32xf32>
    %cst_254 = arith.constant dense<0.000000e+00> : vector<2x32xf32>
    %381 = tpu.matmul %293, %380, %cst_254 {dimension_numbers = #tpu.dot_dimension_numbers<[1], [0], [0], [1], [0, 0, 1, 1], [], []>} : vector<2x32xf32>, vector<32x32xf32>, vector<2x32xf32> -> vector<2x32xf32>
    %382 = arith.addf %378, %381 : vector<2x32xf32>
    %c12_255 = arith.constant 12 : index
    %c0_256 = arith.constant 0 : index
    %383 = vector.load %arg5[%c12_255, %c0_256] : memref<13x32xf32, #tpu.memory_space<vmem>>, vector<1x32xf32>
    %384 = vector.shape_cast %383 : vector<1x32xf32> to vector<32xf32>
    %385 = vector.shape_cast %384 : vector<32xf32> to vector<1x32xf32>
    %386 = vector.broadcast %385 : vector<1x32xf32> to vector<2x32xf32>
    %387 = arith.addf %382, %386 : vector<2x32xf32>
    %c0_257 = arith.constant 0 : index
    %c0_258 = arith.constant 0 : index
    %c0_259 = arith.constant 0 : index
    %388 = vector.load %arg4[%c0_257, %c0_258, %c0_259] : memref<11x32x32xf32, #tpu.memory_space<vmem>>, vector<1x32x32xf32>
    %389 = vector.shape_cast %388 : vector<1x32x32xf32> to vector<32x32xf32>
    %cst_260 = arith.constant dense<0.000000e+00> : vector<2x32xf32>
    %390 = tpu.matmul %318, %389, %cst_260 {dimension_numbers = #tpu.dot_dimension_numbers<[1], [0], [0], [1], [0, 0, 1, 1], [], []>} : vector<2x32xf32>, vector<32x32xf32>, vector<2x32xf32> -> vector<2x32xf32>
    %c0_261 = arith.constant 0 : index
    %c0_262 = arith.constant 0 : index
    %c0_263 = arith.constant 0 : index
    %391 = vector.load %arg8[%c0_261, %c0_262, %c0_263] : memref<2x8x32xf32, #tpu.memory_space<vmem>>, vector<2x8x32xf32>
    %392 = vector.shape_cast %390 : vector<2x32xf32> to vector<2x1x32xf32>
    %393 = vector.broadcast %392 : vector<2x1x32xf32> to vector<2x8x32xf32>
    %394 = arith.mulf %391, %393 : vector<2x8x32xf32>
    %cst_264 = arith.constant dense<0.000000e+00> : vector<2x8xf32>
    %395 = vector.multi_reduction <add>, %394, %cst_264 [2] : vector<2x8x32xf32> to vector<2x8xf32>
    %c3_265 = arith.constant 3 : index
    %c0_266 = arith.constant 0 : index
    %c0_267 = arith.constant 0 : index
    %396 = vector.load %arg9[%c3_265, %c0_266, %c0_267] : memref<4x2x8xf32, #tpu.memory_space<vmem>>, vector<1x2x8xf32>
    %397 = vector.shape_cast %396 : vector<1x2x8xf32> to vector<2x8xf32>
    %398 = arith.addf %395, %397 : vector<2x8xf32>
    %cst_268 = arith.constant dense<0xFF800000> : vector<2xf32>
    %399 = vector.multi_reduction <maximumf>, %398, %cst_268 [1] : vector<2x8xf32> to vector<2xf32>
    %400 = vector.shape_cast %399 : vector<2xf32> to vector<2x1xf32>
    %401 = vector.broadcast %400 : vector<2x1xf32> to vector<2x8xf32>
    %402 = arith.subf %398, %401 : vector<2x8xf32>
    %403 = math.exp %402 : vector<2x8xf32>
    %cst_269 = arith.constant dense<0.000000e+00> : vector<2xf32>
    %404 = vector.multi_reduction <add>, %403, %cst_269 [1] : vector<2x8xf32> to vector<2xf32>
    %405 = vector.shape_cast %404 : vector<2xf32> to vector<2x1xf32>
    %406 = vector.broadcast %405 : vector<2x1xf32> to vector<2x8xf32>
    %407 = arith.divf %403, %406 : vector<2x8xf32>
    %408 = vector.shape_cast %407 : vector<2x8xf32> to vector<2x8x1xf32>
    %c0_270 = arith.constant 0 : index
    %c0_271 = arith.constant 0 : index
    %c0_272 = arith.constant 0 : index
    %409 = vector.load %arg0[%c0_270, %c0_271, %c0_272] : memref<2x8x32xf32, #tpu.memory_space<vmem>>, vector<2x8x32xf32>
    %410 = vector.broadcast %408 : vector<2x8x1xf32> to vector<2x8x32xf32>
    %411 = arith.mulf %410, %409 : vector<2x8x32xf32>
    %cst_273 = arith.constant dense<0.000000e+00> : vector<2x32xf32>
    %412 = vector.multi_reduction <add>, %411, %cst_273 [1] : vector<2x8x32xf32> to vector<2x32xf32>
    %413 = vector.shape_cast %387 : vector<2x32xf32> to vector<1x2x32xf32>
    %414 = vector.shape_cast %413 : vector<1x2x32xf32> to vector<1x2x32xf32>
    %415 = vector.broadcast %414 : vector<1x2x32xf32> to vector<2x2x32xf32>
    %c1_274 = arith.constant 1 : index
    %c0_275 = arith.constant 0 : index
    %c0_276 = arith.constant 0 : index
    %416 = vector.load %arg4[%c1_274, %c0_275, %c0_276] : memref<11x32x32xf32, #tpu.memory_space<vmem>>, vector<2x32x32xf32>
    "tpu.trace_start"() <{level = 10 : i32, message = "rmk,rkn->rmn"}> : () -> ()
    %cst_277 = arith.constant dense<0.000000e+00> : vector<2x2x32xf32>
    %417 = tpu.matmul %415, %416, %cst_277 {dimension_numbers = #tpu.dot_dimension_numbers<[2], [1], [1], [2], [0, 0, 0, 1, 1, 2], [0], [0]>} : vector<2x2x32xf32>, vector<2x32x32xf32>, vector<2x2x32xf32> -> vector<2x2x32xf32>
    "tpu.trace_stop"() : () -> ()
    %c4_278 = arith.constant 4 : index
    %c0_279 = arith.constant 0 : index
    %418 = vector.load %arg5[%c4_278, %c0_279] : memref<13x32xf32, #tpu.memory_space<vmem>>, vector<2x32xf32>
    %419 = vector.shape_cast %418 : vector<2x32xf32> to vector<2x1x32xf32>
    %420 = vector.broadcast %419 : vector<2x1x32xf32> to vector<2x2x32xf32>
    %421 = arith.addf %417, %420 : vector<2x2x32xf32>
    %422 = vector.shape_cast %412 : vector<2x32xf32> to vector<1x2x32xf32>
    %c9_280 = arith.constant 9 : index
    %c0_281 = arith.constant 0 : index
    %423 = vector.load %arg5[%c9_280, %c0_281] : memref<13x32xf32, #tpu.memory_space<vmem>>, vector<2x32xf32>
    %424 = vector.shape_cast %423 : vector<2x32xf32> to vector<2x1x32xf32>
    %425 = vector.broadcast %422 : vector<1x2x32xf32> to vector<2x2x32xf32>
    %426 = vector.broadcast %424 : vector<2x1x32xf32> to vector<2x2x32xf32>
    %427 = arith.mulf %425, %426 : vector<2x2x32xf32>
    %c3_282 = arith.constant 3 : index
    %c0_283 = arith.constant 0 : index
    %c0_284 = arith.constant 0 : index
    %428 = vector.load %arg4[%c3_282, %c0_283, %c0_284] : memref<11x32x32xf32, #tpu.memory_space<vmem>>, vector<2x32x32xf32>
    "tpu.trace_start"() <{level = 10 : i32, message = "rmk,rkn->rmn"}> : () -> ()
    %cst_285 = arith.constant dense<0.000000e+00> : vector<2x2x32xf32>
    %429 = tpu.matmul %427, %428, %cst_285 {dimension_numbers = #tpu.dot_dimension_numbers<[2], [1], [1], [2], [0, 0, 0, 1, 1, 2], [0], [0]>} : vector<2x2x32xf32>, vector<2x32x32xf32>, vector<2x2x32xf32> -> vector<2x2x32xf32>
    "tpu.trace_stop"() : () -> ()
    %430 = arith.mulf %421, %429 : vector<2x2x32xf32>
    %c0_286 = arith.constant 0 : index
    %c0_287 = arith.constant 0 : index
    %c0_288 = arith.constant 0 : index
    %c0_289 = arith.constant 0 : index
    %431 = vector.load %arg2[%c0_286, %c0_287, %c0_288, %c0_289] : memref<2x2x10x32xf32, #tpu.memory_space<vmem>>, vector<2x2x10x32xf32>
    %432 = vector.shape_cast %430 : vector<2x2x32xf32> to vector<2x2x1x32xf32>
    %433 = vector.broadcast %432 : vector<2x2x1x32xf32> to vector<2x2x10x32xf32>
    %434 = arith.mulf %431, %433 : vector<2x2x10x32xf32>
    %c0_290 = arith.constant 0 : index
    %c0_291 = arith.constant 0 : index
    %c0_292 = arith.constant 0 : index
    %c0_293 = arith.constant 0 : index
    %435 = vector.load %arg7[%c0_290, %c0_291, %c0_292, %c0_293] : memref<2x2x10x32xf32, #tpu.memory_space<vmem>>, vector<2x2x10x32xf32>
    %436 = vector.shape_cast %427 : vector<2x2x32xf32> to vector<2x2x1x32xf32>
    %437 = vector.broadcast %436 : vector<2x2x1x32xf32> to vector<2x2x10x32xf32>
    %438 = arith.mulf %435, %437 : vector<2x2x10x32xf32>
    %439 = arith.addf %434, %438 : vector<2x2x10x32xf32>
    %cst_294 = arith.constant dense<0.000000e+00> : vector<2x2x10xf32>
    %440 = vector.multi_reduction <add>, %439, %cst_294 [3] : vector<2x2x10x32xf32> to vector<2x2x10xf32>
    %cst_295 = arith.constant dense<0xFF800000> : vector<2x2xf32>
    %441 = vector.multi_reduction <maximumf>, %440, %cst_295 [2] : vector<2x2x10xf32> to vector<2x2xf32>
    %442 = vector.shape_cast %441 : vector<2x2xf32> to vector<2x2x1xf32>
    %443 = vector.broadcast %442 : vector<2x2x1xf32> to vector<2x2x10xf32>
    %444 = arith.subf %440, %443 : vector<2x2x10xf32>
    %445 = math.exp %444 : vector<2x2x10xf32>
    %cst_296 = arith.constant dense<0.000000e+00> : vector<2x2xf32>
    %446 = vector.multi_reduction <add>, %445, %cst_296 [2] : vector<2x2x10xf32> to vector<2x2xf32>
    %447 = vector.shape_cast %446 : vector<2x2xf32> to vector<2x2x1xf32>
    %448 = vector.broadcast %447 : vector<2x2x1xf32> to vector<2x2x10xf32>
    %449 = arith.divf %445, %448 : vector<2x2x10xf32>
    %450 = vector.shape_cast %449 : vector<2x2x10xf32> to vector<2x2x10x1xf32>
    %451 = vector.broadcast %450 : vector<2x2x10x1xf32> to vector<2x2x10x32xf32>
    %452 = arith.mulf %451, %431 : vector<2x2x10x32xf32>
    %cst_297 = arith.constant dense<0.000000e+00> : vector<2x2x32xf32>
    %453 = vector.multi_reduction <add>, %452, %cst_297 [2] : vector<2x2x10x32xf32> to vector<2x2x32xf32>
    %454 = vector.extract_strided_slice %453 {offsets = [0, 0, 0], sizes = [1, 2, 32], strides = [1, 1, 1]} : vector<2x2x32xf32> to vector<1x2x32xf32>
    %455 = vector.shape_cast %454 : vector<1x2x32xf32> to vector<2x32xf32>
    %c7_298 = arith.constant 7 : index
    %c0_299 = arith.constant 0 : index
    %c0_300 = arith.constant 0 : index
    %456 = vector.load %arg4[%c7_298, %c0_299, %c0_300] : memref<11x32x32xf32, #tpu.memory_space<vmem>>, vector<1x32x32xf32>
    %457 = vector.shape_cast %456 : vector<1x32x32xf32> to vector<32x32xf32>
    %cst_301 = arith.constant dense<0.000000e+00> : vector<2x32xf32>
    %458 = tpu.matmul %455, %457, %cst_301 {dimension_numbers = #tpu.dot_dimension_numbers<[1], [0], [0], [1], [0, 0, 1, 1], [], []>} : vector<2x32xf32>, vector<32x32xf32>, vector<2x32xf32> -> vector<2x32xf32>
    %459 = vector.extract_strided_slice %453 {offsets = [1, 0, 0], sizes = [1, 2, 32], strides = [1, 1, 1]} : vector<2x2x32xf32> to vector<1x2x32xf32>
    %460 = vector.shape_cast %459 : vector<1x2x32xf32> to vector<2x32xf32>
    %c8_302 = arith.constant 8 : index
    %c0_303 = arith.constant 0 : index
    %c0_304 = arith.constant 0 : index
    %461 = vector.load %arg4[%c8_302, %c0_303, %c0_304] : memref<11x32x32xf32, #tpu.memory_space<vmem>>, vector<1x32x32xf32>
    %462 = vector.shape_cast %461 : vector<1x32x32xf32> to vector<32x32xf32>
    %cst_305 = arith.constant dense<0.000000e+00> : vector<2x32xf32>
    %463 = tpu.matmul %460, %462, %cst_305 {dimension_numbers = #tpu.dot_dimension_numbers<[1], [0], [0], [1], [0, 0, 1, 1], [], []>} : vector<2x32xf32>, vector<32x32xf32>, vector<2x32xf32> -> vector<2x32xf32>
    %464 = arith.addf %458, %463 : vector<2x32xf32>
    %c11_306 = arith.constant 11 : index
    %c0_307 = arith.constant 0 : index
    %465 = vector.load %arg5[%c11_306, %c0_307] : memref<13x32xf32, #tpu.memory_space<vmem>>, vector<1x32xf32>
    %466 = vector.shape_cast %465 : vector<1x32xf32> to vector<32xf32>
    %467 = vector.shape_cast %466 : vector<32xf32> to vector<1x32xf32>
    %468 = vector.broadcast %467 : vector<1x32xf32> to vector<2x32xf32>
    %469 = arith.addf %464, %468 : vector<2x32xf32>
    %c9_308 = arith.constant 9 : index
    %c0_309 = arith.constant 0 : index
    %c0_310 = arith.constant 0 : index
    %470 = vector.load %arg4[%c9_308, %c0_309, %c0_310] : memref<11x32x32xf32, #tpu.memory_space<vmem>>, vector<1x32x32xf32>
    %471 = vector.shape_cast %470 : vector<1x32x32xf32> to vector<32x32xf32>
    %cst_311 = arith.constant dense<0.000000e+00> : vector<2x32xf32>
    %472 = tpu.matmul %469, %471, %cst_311 {dimension_numbers = #tpu.dot_dimension_numbers<[1], [0], [0], [1], [0, 0, 1, 1], [], []>} : vector<2x32xf32>, vector<32x32xf32>, vector<2x32xf32> -> vector<2x32xf32>
    %c10_312 = arith.constant 10 : index
    %c0_313 = arith.constant 0 : index
    %c0_314 = arith.constant 0 : index
    %473 = vector.load %arg4[%c10_312, %c0_313, %c0_314] : memref<11x32x32xf32, #tpu.memory_space<vmem>>, vector<1x32x32xf32>
    %474 = vector.shape_cast %473 : vector<1x32x32xf32> to vector<32x32xf32>
    %cst_315 = arith.constant dense<0.000000e+00> : vector<2x32xf32>
    %475 = tpu.matmul %387, %474, %cst_315 {dimension_numbers = #tpu.dot_dimension_numbers<[1], [0], [0], [1], [0, 0, 1, 1], [], []>} : vector<2x32xf32>, vector<32x32xf32>, vector<2x32xf32> -> vector<2x32xf32>
    %476 = arith.addf %472, %475 : vector<2x32xf32>
    %c12_316 = arith.constant 12 : index
    %c0_317 = arith.constant 0 : index
    %477 = vector.load %arg5[%c12_316, %c0_317] : memref<13x32xf32, #tpu.memory_space<vmem>>, vector<1x32xf32>
    %478 = vector.shape_cast %477 : vector<1x32xf32> to vector<32xf32>
    %479 = vector.shape_cast %478 : vector<32xf32> to vector<1x32xf32>
    %480 = vector.broadcast %479 : vector<1x32xf32> to vector<2x32xf32>
    %481 = arith.addf %476, %480 : vector<2x32xf32>
    %482 = vector.shape_cast %481 : vector<2x32xf32> to vector<1x2x32xf32>
    %cst_318 = arith.constant dense<0x7F800000> : vector<1xf32>
    %483 = vector.multi_reduction <minimumf>, %482, %cst_318 [1, 2] : vector<1x2x32xf32> to vector<1xf32>
    %484 = vector.shape_cast %483 : vector<1xf32> to vector<1x1x1xf32>
    %485 = vector.extract %484[0, 0, 0] : f32 from vector<1x1x1xf32>
    %486 = vector.broadcast %485 : f32 to vector<1x1xf32>
    %487 = vector.broadcast %486 : vector<1x1xf32> to vector<2x32xf32>
    %488 = arith.subf %481, %487 : vector<2x32xf32>
    %489 = vector.shape_cast %488 : vector<2x32xf32> to vector<1x2x32xf32>
    %cst_319 = arith.constant dense<0xFF800000> : vector<1xf32>
    %490 = vector.multi_reduction <maximumf>, %489, %cst_319 [1, 2] : vector<1x2x32xf32> to vector<1xf32>
    %491 = vector.shape_cast %490 : vector<1xf32> to vector<1x1x1xf32>
    %492 = vector.extract %491[0, 0, 0] : f32 from vector<1x1x1xf32>
    %493 = vector.broadcast %492 : f32 to vector<1x1xf32>
    %494 = vector.broadcast %493 : vector<1x1xf32> to vector<2x32xf32>
    %495 = arith.divf %488, %494 : vector<2x32xf32>
    %cst_320 = arith.constant 2.000000e+00 : f32
    %496 = vector.broadcast %cst_320 : f32 to vector<2x32xf32>
    %497 = arith.mulf %496, %495 : vector<2x32xf32>
    %cst_321 = arith.constant 1.000000e+00 : f32
    %498 = vector.broadcast %cst_321 : f32 to vector<2x32xf32>
    %499 = arith.subf %497, %498 : vector<2x32xf32>
    %c0_322 = arith.constant 0 : index
    %c0_323 = arith.constant 0 : index
    %500 = vector.load %arg6[%c0_322, %c0_323] : memref<2x32xf32, #tpu.memory_space<vmem>>, vector<2x32xf32>
    tpu.vector_store %arg6[%c0_322, %c0_323], %499 {strides = array<i32>} : memref<2x32xf32, #tpu.memory_space<vmem>>, vector<2x32xf32>,
    return
  }
}

</mosaic_0001>

<llo_original>
// kernel: mac_unit_2rus.1
$region0: #{mac_unit_2rus.1}
  #allocation0 [shape = 'u32[]', space=smem, size = 0x4, offset = 0x4, fixed_abs, tag = 'smem constant byte address 0x4 - core index']
  #allocation1 [shape = 'u32[72,128]{1,0:T(1,128)}', space=vmem, size = 0x9000, scoped, tag = 'internal scratch']
  #allocation2 [shape = 'f32[2,2,10,32]{3,2,1,0:T(8,128)}', space=vmem, size = 0x8000, scoped, tag = 'scratch operand']
  #allocation3 [shape = 'f32[2,8,32]{2,1,0:T(8,128)}', space=vmem, size = 0x2000, scoped, tag = 'scratch operand']
  #allocation4 [shape = 'f32[4,2,8]{2,1,0:T(2,128)}', space=vmem, size = 0x1000, scoped, tag = 'scratch operand']
  %s0 = inlined_call_operand.vmem [shape: f32[2,8,32], index: 0, kind: input, shape index: {}]
  %s1 = inlined_call_operand.vmem [shape: f32[2,64], index: 1, kind: input, shape index: {}]
  %s2 = inlined_call_operand.vmem [shape: f32[2,2,10,32], index: 2, kind: input, shape index: {}]
  %s3 = inlined_call_operand.vmem [shape: f32[64,128], index: 3, kind: input, shape index: {}]
  %s4 = inlined_call_operand.vmem [shape: f32[11,32,32], index: 4, kind: input, shape index: {}]
  %s5 = inlined_call_operand.vmem [shape: f32[13,32], index: 5, kind: input, shape index: {}]
  %s6 = inlined_call_operand.hbm [shape: f32[2,32], index: 6, kind: output, shape index: {}]
  %s7 = sld [smem:[#allocation0]]
  $region34: #{mac_unit_2rus.1} parent=0
    _
  %s9 = ssub.s32 1, %s7
  %s10 = scalar_select 0, %s9, %s7
  $region1: #{mac_unit_2rus.1} parent=0
    #allocation5 [shape = 'u8[1024]{0}', space=vmem, size = 0x400, scoped, tag = 'output window, operand 0, single buffered']
    #allocation6 [shape = 's32[1]{0}', space=sflag, size = 0x4, scoped, tag = 'scoped memory for mac_unit_2rus.1']
    %11 = vsyncpa [#allocation6], 0
    // Predicated region
    $region2: #{mac_unit_2rus.1} parent=1 // pred_check
      _
    $region3: #{mac_unit_2rus.1} parent=1 // pred_check_branch
      %13 = sbr.rel (0) target = $region5
    $region4: #{mac_unit_2rus.1} parent=1 // pred_region
      _
    $region5: #{mac_unit_2rus.1} parent=1 // pred_fallthru
      _
    // Predicated region
    $region6: #{mac_unit_2rus.1} parent=1 // pred_check
      _
    $region7: #{mac_unit_2rus.1} parent=1 // pred_check_branch
      %15 = sbr.rel (0) target = $region9
    $region8: #{mac_unit_2rus.1} parent=1 // pred_region
      _
    $region9: #{mac_unit_2rus.1} parent=1 // pred_fallthru
      _
    // Predicated region
    $region10: #{mac_unit_2rus.1} parent=1 // pred_check
      _
    $region11: #{mac_unit_2rus.1} parent=1 // pred_check_branch
      %17 = sbr.rel (0) target = $region13
    $region12: #{mac_unit_2rus.1} parent=1 // pred_region
      _
    $region13: #{mac_unit_2rus.1} parent=1 // pred_fallthru
      _
    // Predicated region
    $region14: #{mac_unit_2rus.1} parent=1 // pred_check
      _
    $region15: #{mac_unit_2rus.1} parent=1 // pred_check_branch
      %19 = sbr.rel (0) target = $region17
    $region16: #{mac_unit_2rus.1} parent=1 // pred_region
      _
    $region17: #{mac_unit_2rus.1} parent=1 // pred_fallthru
      _
    // Predicated region
    $region18: #{mac_unit_2rus.1} parent=1 // pred_check
      _
    $region19: #{mac_unit_2rus.1} parent=1 // pred_check_branch
      %21 = sbr.rel (0) target = $region21
    $region20: #{mac_unit_2rus.1} parent=1 // pred_region
      _
    $region21: #{mac_unit_2rus.1} parent=1 // pred_fallthru
      _
    // Predicated region
    $region22: #{mac_unit_2rus.1} parent=1 // pred_check
      _
    $region23: #{mac_unit_2rus.1} parent=1 // pred_check_branch
      %23 = sbr.rel (0) target = $region25
    $region24: #{mac_unit_2rus.1} parent=1 // pred_region
      _
    $region25: #{mac_unit_2rus.1} parent=1 // pred_fallthru
      _
    %s24 = scalar_lea.vmem %s4, 160
    %v25 = vld [vmem:[%s24] sm:$0xff]
    %v26 = vld [vmem:[%s24 + $0x8] sm:$0xff]
    %v27 = vld [vmem:[%s24 + $0x10] sm:$0xff]
    %v28 = vld [vmem:[%s24 + $0x18] sm:$0xff]
    %v29 = vld [vmem:[%s5 + $0x6] sm:$0x1]
    %v30 = vld [vmem:[%s2] sm:$0xff]
    %v31 = vld [vmem:[%s2 + $0x8] sm:$0x3]
    %v32 = vperm.slane %v29, 0
    %vm33 = vcmask 261120
    %v35 = vsel %vm33, %v30, 0
    %v38 = vsel %vm33, %v31, 0
    %40 = vmatpush.msra.mxu0 0.0
    %41 = vmatpush.msra.mxu0 0.0
    %42 = vmatpush.msra.mxu0 0.0
    %43 = vmatpush.msra.mxu0 0.0
    %44 = vmatpush.msra.mxu0 0.0
    %45 = vmatpush.msra.mxu0 0.0
    %46 = vmatpush.msra.mxu0 0.0
    %47 = vmatpush.msra.mxu0 0.0
    %48 = vmatpush.msra.mxu0 0.0
    %49 = vmatpush.msra.mxu0 0.0
    %50 = vmatpush.msra.mxu0 0.0
    %51 = vmatpush.msra.mxu0 0.0
    %52 = vmatpush.msra.mxu0 %v28
    %53 = vmatpush.msra.mxu0 %v27
    %54 = vmatpush.msra.mxu0 %v26
    %55 = vmatpush.msra.mxu0 %v25
    %56 = vmatmul.f32.gmra.mxu0 %v35
    %v57 = vpop.f32.mrf.mxu0
    %v58 = vadd.f32 %v32, %v57
    %59 = vmatmul.f32.gmra.mxu0 %v38
    %v60 = vpop.f32.mrf.mxu0
    %v61 = vadd.f32 %v32, %v60
    %62 = vdwg.mxu0
    %63 = vst.msk [vmem:[#allocation2] sm:$0xff] %vm33, %v58
    %vm64 = vcmask 254976
    %65 = vst.msk [vmem:[#allocation2 + $0x8] sm:$0x3] %vm64, %v61
    %s66 = scalar_lea.vmem %s2, 16
    %v67 = vld [vmem:[%s66] sm:$0xff]
    %v68 = vld [vmem:[%s66 + $0x8] sm:$0x3]
    %v70 = vsel %vm33, %v67, 0
    %v73 = vsel %vm33, %v68, 0
    %75 = vmatpush.msra.mxu0 0.0
    %76 = vmatpush.msra.mxu0 0.0
    %77 = vmatpush.msra.mxu0 0.0
    %78 = vmatpush.msra.mxu0 0.0
    %79 = vmatpush.msra.mxu0 0.0
    %80 = vmatpush.msra.mxu0 0.0
    %81 = vmatpush.msra.mxu0 0.0
    %82 = vmatpush.msra.mxu0 0.0
    %83 = vmatpush.msra.mxu0 0.0
    %84 = vmatpush.msra.mxu0 0.0
    %85 = vmatpush.msra.mxu0 0.0
    %86 = vmatpush.msra.mxu0 0.0
    %87 = vmatpush.msra.mxu0 %v28
    %88 = vmatpush.msra.mxu0 %v27
    %89 = vmatpush.msra.mxu0 %v26
    %90 = vmatpush.msra.mxu0 %v25
    %91 = vmatmul.f32.gmra.mxu0 %v70
    %v92 = vpop.f32.mrf.mxu0
    %v93 = vadd.f32 %v32, %v92
    %94 = vmatmul.f32.gmra.mxu0 %v73
    %v95 = vpop.f32.mrf.mxu0
    %v96 = vadd.f32 %v32, %v95
    %97 = vdwg.mxu0
    %s98 = scalar_lea.vmem [#allocation2], 16
    %99 = vst.msk [vmem:[%s98] sm:$0xff] %vm33, %v93
    %100 = vst.msk [vmem:[%s98 + $0x8] sm:$0x3] %vm64, %v96
    %s101 = scalar_lea.vmem %s4, 192
    %v102 = vld [vmem:[%s101] sm:$0xff]
    %v103 = vld [vmem:[%s101 + $0x8] sm:$0xff]
    %v104 = vld [vmem:[%s101 + $0x10] sm:$0xff]
    %v105 = vld [vmem:[%s101 + $0x18] sm:$0xff]
    %v106 = vld [vmem:[%s5 + $0x7] sm:$0x1]
    %s107 = scalar_lea.vmem %s2, 32
    %v108 = vld [vmem:[%s107] sm:$0xff]
    %v109 = vld [vmem:[%s107 + $0x8] sm:$0x3]
    %v110 = vperm.slane %v106, 0
    %v112 = vsel %vm33, %v108, 0
    %v115 = vsel %vm33, %v109, 0
    %117 = vmatpush.msra.mxu0 0.0
    %118 = vmatpush.msra.mxu0 0.0
    %119 = vmatpush.msra.mxu0 0.0
    %120 = vmatpush.msra.mxu0 0.0
    %121 = vmatpush.msra.mxu0 0.0
    %122 = vmatpush.msra.mxu0 0.0
    %123 = vmatpush.msra.mxu0 0.0
    %124 = vmatpush.msra.mxu0 0.0
    %125 = vmatpush.msra.mxu0 0.0
    %126 = vmatpush.msra.mxu0 0.0
    %127 = vmatpush.msra.mxu0 0.0
    %128 = vmatpush.msra.mxu0 0.0
    %129 = vmatpush.msra.mxu0 %v105
    %130 = vmatpush.msra.mxu0 %v104
    %131 = vmatpush.msra.mxu0 %v103
    %132 = vmatpush.msra.mxu0 %v102
    %133 = vmatmul.f32.gmra.mxu0 %v112
    %v134 = vpop.f32.mrf.mxu0
    %v135 = vadd.f32 %v110, %v134
    %136 = vmatmul.f32.gmra.mxu0 %v115
    %v137 = vpop.f32.mrf.mxu0
    %v138 = vadd.f32 %v110, %v137
    %139 = vdwg.mxu0
    %s140 = scalar_lea.vmem [#allocation2], 32
    %141 = vst.msk [vmem:[%s140] sm:$0xff] %vm33, %v135
    %142 = vst.msk [vmem:[%s140 + $0x8] sm:$0x3] %vm64, %v138
    %s143 = scalar_lea.vmem %s2, 48
    %v144 = vld [vmem:[%s143] sm:$0xff]
    %v145 = vld [vmem:[%s143 + $0x8] sm:$0x3]
    %v147 = vsel %vm33, %v144, 0
    %v150 = vsel %vm33, %v145, 0
    %152 = vmatpush.msra.mxu0 0.0
    %153 = vmatpush.msra.mxu0 0.0
    %154 = vmatpush.msra.mxu0 0.0
    %155 = vmatpush.msra.mxu0 0.0
    %156 = vmatpush.msra.mxu0 0.0
    %157 = vmatpush.msra.mxu0 0.0
    %158 = vmatpush.msra.mxu0 0.0
    %159 = vmatpush.msra.mxu0 0.0
    %160 = vmatpush.msra.mxu0 0.0
    %161 = vmatpush.msra.mxu0 0.0
    %162 = vmatpush.msra.mxu0 0.0
    %163 = vmatpush.msra.mxu0 0.0
    %164 = vmatpush.msra.mxu0 %v105
    %165 = vmatpush.msra.mxu0 %v104
    %166 = vmatpush.msra.mxu0 %v103
    %167 = vmatpush.msra.mxu0 %v102
    %168 = vmatmul.f32.gmra.mxu0 %v147
    %v169 = vpop.f32.mrf.mxu0
    %v170 = vadd.f32 %v110, %v169
    %171 = vmatmul.f32.gmra.mxu0 %v150
    %v172 = vpop.f32.mrf.mxu0
    %v173 = vadd.f32 %v110, %v172
    %174 = vdwg.mxu0
    %s175 = scalar_lea.vmem [#allocation2], 48
    %176 = vst.msk [vmem:[%s175] sm:$0xff] %vm33, %v170
    %177 = vst.msk [vmem:[%s175 + $0x8] sm:$0x3] %vm64, %v173
    %v178 = vld [vmem:[%s5 + $0x8] sm:$0x1]
    %v179 = vld [vmem:[%s0] sm:$0xff]
    %v180 = vld [vmem:[%s0 + $0x8] sm:$0xff]
    %v181 = vperm.slane %v178, 0
    %v182 = vmul.f32 %v179, %v181
    %v183 = vmul.f32 %v180, %v181
    %184 = vst.msk [vmem:[#allocation3] sm:$0xff] %vm33, %v182
    %185 = vst.msk [vmem:[#allocation3 + $0x8] sm:$0xff] %vm33, %v183
    %v186 = vld [vmem:[%s1] sm:$0x3]
    %v187 = vld [vmem:[%s3] sm:$0xff]
    %v188 = vld [vmem:[%s3 + $0x8] sm:$0xff]
    %v189 = vld [vmem:[%s3 + $0x10] sm:$0xff]
    %v190 = vld [vmem:[%s3 + $0x18] sm:$0xff]
    %v191 = vld [vmem:[%s3 + $0x20] sm:$0xff]
    %v192 = vld [vmem:[%s3 + $0x28] sm:$0xff]
    %v193 = vld [vmem:[%s3 + $0x30] sm:$0xff]
    %v194 = vld [vmem:[%s3 + $0x38] sm:$0xff]
    %vm195 = vcmask 523264
    %v197 = vsel %vm195, %v186, 0
    %199 = vmatpush.msra.mxu0 0.0
    %200 = vmatpush.msra.mxu0 0.0
    %201 = vmatpush.msra.mxu0 0.0
    %202 = vmatpush.msra.mxu0 0.0
    %203 = vmatpush.msra.mxu0 0.0
    %204 = vmatpush.msra.mxu0 0.0
    %205 = vmatpush.msra.mxu0 0.0
    %206 = vmatpush.msra.mxu0 0.0
    %207 = vmatpush.msra.mxu0 %v194
    %208 = vmatpush.msra.mxu0 %v193
    %209 = vmatpush.msra.mxu0 %v192
    %210 = vmatpush.msra.mxu0 %v191
    %211 = vmatpush.msra.mxu0 %v190
    %212 = vmatpush.msra.mxu0 %v189
    %213 = vmatpush.msra.mxu0 %v188
    %214 = vmatpush.msra.mxu0 %v187
    %215 = vmatmul.f32.gmra.mxu0 %v197
    %v216 = vpop.f32.mrf.mxu0
    %v217 = vadd.f32 0.0, %v216
    %218 = vdwg.mxu0
    %v219 = vld [vmem:[#allocation3] sm:$0xff]
    %v220 = vld [vmem:[#allocation3 + $0x8] sm:$0xff]
    %v221 = vld [vmem:[%s5] sm:$0x1]
    %v222 = vperm.slane %v221, 0
    %v223 = vadd.f32 %v217, %v222
    %v225 = vrot.slane %v223, 1
    %v226 = vperm.slane %v223, 0
    %v227 = vperm.slane %v225, 0
    %v230 = vmul.f32 %v219, %v226
    %v231 = vmul.f32 %v220, %v227
    %v232 = vsel %vm33, %v230, 0.0
    %233 = vadd.xlane.f32.xlu0 %v232
    %v234 = vpop.xlane.xlu0 %233
    %v235 = vsel %vm33, %v231, 0.0
    %236 = vadd.xlane.f32.xlu0 %v235
    %v237 = vpop.xlane.xlu0 %236
    %v240 = vlaneseq
    %v241 = vand.u32 %v240, 127
    %v242 = vperm.slane %v234, %v241
    %v243 = vperm.slane %v237, %v241
    %vm244 = vcmask 1041409
    %v245 = vsel %vm244, %v243, %v242
    %vm247 = vcmask 58368
    %248 = vst.msk [vmem:[#allocation4] sm:$0x3] %vm247, %v245
    %v249 = vld [vmem:[%s5 + $0x1] sm:$0x1]
    %v250 = vperm.slane %v249, 0
    %252 = vrot.lane.b32.xlu0 %v250, 32
    %v253 = vpop.permute.xlu0 %252
    %v255 = vadd.f32 %v217, %v253
    %v257 = vrot.slane %v255, 1
    %v258 = vperm.slane %v255, 0
    %v259 = vperm.slane %v257, 0
    %260 = vrot.lane.b32.xlu0 %v258, 96
    %v261 = vpop.permute.xlu0 %260
    %262 = vrot.lane.b32.xlu0 %v259, 96
    %v263 = vpop.permute.xlu0 %262
    %v266 = vmul.f32 %v219, %v261
    %v267 = vmul.f32 %v220, %v263
    %v268 = vsel %vm33, %v266, 0.0
    %269 = vadd.xlane.f32.xlu0 %v268
    %v270 = vpop.xlane.xlu0 %269
    %v271 = vsel %vm33, %v267, 0.0
    %272 = vadd.xlane.f32.xlu0 %v271
    %v273 = vpop.xlane.xlu0 %272
    %v276 = vperm.slane %v270, %v241
    %v277 = vperm.slane %v273, %v241
    %v278 = vsel %vm244, %v277, %v276
    %s280 = scalar_lea.vmem [#allocation4], 2
    %281 = vst.msk [vmem:[%s280] sm:$0x3] %vm247, %v278
    %v282 = vld [vmem:[%s5 + $0x2] sm:$0x1]
    %v283 = vperm.slane %v282, 0
    %285 = vrot.lane.b32.xlu0 %v283, 64
    %v286 = vpop.permute.xlu0 %285
    %v288 = vadd.f32 %v217, %v286
    %v290 = vrot.slane %v288, 1
    %v291 = vperm.slane %v288, 0
    %v292 = vperm.slane %v290, 0
    %293 = vrot.lane.b32.xlu0 %v291, 64
    %v294 = vpop.permute.xlu0 %293
    %295 = vrot.lane.b32.xlu0 %v292, 64
    %v296 = vpop.permute.xlu0 %295
    %v299 = vmul.f32 %v219, %v294
    %v300 = vmul.f32 %v220, %v296
    %v301 = vsel %vm33, %v299, 0.0
    %302 = vadd.xlane.f32.xlu0 %v301
    %v303 = vpop.xlane.xlu0 %302
    %v304 = vsel %vm33, %v300, 0.0
    %305 = vadd.xlane.f32.xlu0 %v304
    %v306 = vpop.xlane.xlu0 %305
    %v309 = vperm.slane %v303, %v241
    %v310 = vperm.slane %v306, %v241
    %v311 = vsel %vm244, %v310, %v309
    %s313 = scalar_lea.vmem [#allocation4], 4
    %314 = vst.msk [vmem:[%s313] sm:$0x3] %vm247, %v311
    %v315 = vld [vmem:[%s5 + $0x3] sm:$0x1]
    %v316 = vperm.slane %v315, 0
    %318 = vrot.lane.b32.xlu0 %v316, 96
    %v319 = vpop.permute.xlu0 %318
    %v321 = vadd.f32 %v217, %v319
    %v323 = vrot.slane %v321, 1
    %v324 = vperm.slane %v321, 0
    %v325 = vperm.slane %v323, 0
    %326 = vrot.lane.b32.xlu0 %v324, 32
    %v327 = vpop.permute.xlu0 %326
    %328 = vrot.lane.b32.xlu0 %v325, 32
    %v329 = vpop.permute.xlu0 %328
    %v332 = vmul.f32 %v219, %v327
    %v333 = vmul.f32 %v220, %v329
    %v334 = vsel %vm33, %v332, 0.0
    %335 = vadd.xlane.f32.xlu0 %v334
    %v336 = vpop.xlane.xlu0 %335
    %v337 = vsel %vm33, %v333, 0.0
    %338 = vadd.xlane.f32.xlu0 %v337
    %v339 = vpop.xlane.xlu0 %338
    %v342 = vperm.slane %v336, %v241
    %v343 = vperm.slane %v339, %v241
    %v344 = vsel %vm244, %v343, %v342
    %s346 = scalar_lea.vmem [#allocation4], 6
    %347 = vst.msk [vmem:[%s346] sm:$0x3] %vm247, %v344
    %v348 = vld [vmem:[%s4] sm:$0xff]
    %v349 = vld [vmem:[%s4 + $0x8] sm:$0xff]
    %v350 = vld [vmem:[%s4 + $0x10] sm:$0xff]
    %v351 = vld [vmem:[%s4 + $0x18] sm:$0xff]
    %v353 = vsel %vm33, 0.0, 0
    %355 = vmatpush.msra.mxu0 0.0
    %356 = vmatpush.msra.mxu0 0.0
    %357 = vmatpush.msra.mxu0 0.0
    %358 = vmatpush.msra.mxu0 0.0
    %359 = vmatpush.msra.mxu0 0.0
    %360 = vmatpush.msra.mxu0 0.0
    %361 = vmatpush.msra.mxu0 0.0
    %362 = vmatpush.msra.mxu0 0.0
    %363 = vmatpush.msra.mxu0 0.0
    %364 = vmatpush.msra.mxu0 0.0
    %365 = vmatpush.msra.mxu0 0.0
    %366 = vmatpush.msra.mxu0 0.0
    %367 = vmatpush.msra.mxu0 %v351
    %368 = vmatpush.msra.mxu0 %v350
    %369 = vmatpush.msra.mxu0 %v349
    %370 = vmatpush.msra.mxu0 %v348
    %371 = vmatmul.f32.gmra.mxu0 %v353
    %v372 = vpop.f32.mrf.mxu0
    %v373 = vadd.f32 0.0, %v372
    %374 = vdwg.mxu0
    %v375 = vld [vmem:[#allocation3] sm:$0xff]
    %v376 = vld [vmem:[#allocation3 + $0x8] sm:$0xff]
    %v378 = vrot.slane %v373, 1
    %v379 = vperm.slane %v373, 0
    %v380 = vperm.slane %v378, 0
    %v383 = vmul.f32 %v375, %v379
    %v384 = vmul.f32 %v376, %v380
    %v385 = vsel %vm33, %v383, 0.0
    %386 = vadd.xlane.f32.xlu0 %v385
    %v387 = vpop.xlane.xlu0 %386
    %v388 = vsel %vm33, %v384, 0.0
    %389 = vadd.xlane.f32.xlu0 %v388
    %v390 = vpop.xlane.xlu0 %389
    %v391 = vld [vmem:[#allocation4] sm:$0x3]
    %v393 = vperm.slane %v391, 0
    %v394 = vlaneseq
    %v395 = vshrl.u32 %v394, 7
    %397 = vset.pattern.permute.xlu0 %v395
    %398 = vperm.xlu0 %397, %v393
    %v399 = vpop.permute.xlu0 %398
    %v400 = vperm.slane %v391, 1
    %v401 = vlaneseq
    %v402 = vshrl.u32 %v401, 7
    %404 = vset.pattern.permute.xlu0 %v402
    %405 = vperm.xlu0 %404, %v400
    %v406 = vpop.permute.xlu0 %405
    %v409 = vadd.f32 %v387, %v399
    %v410 = vadd.f32 %v390, %v406
    %413 = vset.pattern.permute.xlu0 0
    %414 = vperm.xlu0 %413, %v409
    %v415 = vpop.permute.xlu0 %414
    %416 = vset.pattern.permute.xlu0 0
    %417 = vperm.xlu0 %416, %v410
    %v418 = vpop.permute.xlu0 %417
    %v419 = vperm.slane %v415, %v241
    %v420 = vperm.slane %v418, %v241
    %v421 = vsel %vm244, %v420, %v419
    %v423 = vsel %vm247, %v421, -inf
    %424 = vmax.xlane.f32.xlu0 %v423
    %v425 = vpop.xlane.xlu0 %424
    %v427 = vperm.slane %v425, 0
    %v428 = vperm.slane %v425, 1
    %v431 = vsub.f32 %v409, %v427
    %v432 = vsub.f32 %v410, %v428
    %v433 = vmul.f32 %v431, 1.442695
    %v434 = vpow.pop %v433
    %v435 = vmul.f32 %v432, 1.442695
    %v436 = vpow.pop %v435
    %439 = vset.pattern.permute.xlu0 0
    %440 = vperm.xlu0 %439, %v434
    %v441 = vpop.permute.xlu0 %440
    %442 = vset.pattern.permute.xlu0 0
    %443 = vperm.xlu0 %442, %v436
    %v444 = vpop.permute.xlu0 %443
    %v445 = vperm.slane %v441, %v241
    %v446 = vperm.slane %v444, %v241
    %v447 = vsel %vm244, %v446, %v445
    %v449 = vsel %vm247, %v447, 0.0
    %450 = vadd.xlane.f32.xlu0 %v449
    %v451 = vpop.xlane.xlu0 %450
    %v453 = vperm.slane %v451, 0
    %v454 = vperm.slane %v451, 1
    %v457 = vrcp.pop %v453
    %v458 = vmul.f32 %v453, %v457
    %v459 = vsub.f32 1.0, %v458
    %v460 = vmul.f32 %v457, %v459
    %v461 = vadd.f32 %v457, %v460
    %vm462 = vweird.f32 %v453
    %vm463 = vweird.f32 %v457
    %vm464 = vmor %vm462, %vm463
    %v465 = vsel %vm464, %v457, %v461
    %v466 = vand.u32 2147483647, %v453
    %vm467 = vcmp.eq.f32.partialorder %v466, 8.507059e+37
    %v468 = vand.u32 %v453, 2147483648
    %v469 = vor.u32 1.1754944e-38, %v468
    %v470 = vsel %vm467, %v469, %v465
    %v471 = vmul.f32 %v434, %v470
    %v472 = vrcp.pop %v454
    %v473 = vmul.f32 %v454, %v472
    %v474 = vsub.f32 1.0, %v473
    %v475 = vmul.f32 %v472, %v474
    %v476 = vadd.f32 %v472, %v475
    %vm477 = vweird.f32 %v454
    %vm478 = vweird.f32 %v472
    %vm479 = vmor %vm477, %vm478
    %v480 = vsel %vm479, %v472, %v476
    %v481 = vand.u32 2147483647, %v454
    %vm482 = vcmp.eq.f32.partialorder %v481, 8.507059e+37
    %v483 = vand.u32 %v454, 2147483648
    %v484 = vor.u32 1.1754944e-38, %v483
    %v485 = vsel %vm482, %v484, %v480
    %v486 = vmul.f32 %v436, %v485
    %v487 = vld [vmem:[%s0] sm:$0xff]
    %v488 = vld [vmem:[%s0 + $0x8] sm:$0xff]
    %490 = vset.pattern.permute.xlu0 0
    %491 = vperm.xlu0 %490, %v471
    %v492 = vpop.permute.xlu0 %491
    %495 = vset.pattern.permute.xlu0 0
    %496 = vperm.xlu0 %495, %v486
    %v497 = vpop.permute.xlu0 %496
    %v499 = vmul.f32 %v492, %v487
    %v500 = vmul.f32 %v497, %v488
    %v501 = vsel %vm33, %v499, 0.0
    %v502 = vrot.slane %v501, 4
    %v503 = vadd.f32 %v501, %v502
    %v504 = vrot.slane %v503, 2
    %v505 = vadd.f32 %v503, %v504
    %v506 = vrot.slane %v505, 1
    %v507 = vadd.f32 %v505, %v506
    %v508 = vsel %vm33, %v500, 0.0
    %v509 = vrot.slane %v508, 4
    %v510 = vadd.f32 %v508, %v509
    %v511 = vrot.slane %v510, 2
    %v512 = vadd.f32 %v510, %v511
    %v513 = vrot.slane %v512, 1
    %v514 = vadd.f32 %v512, %v513
    %s515 = scalar_lea.vmem %s4, 32
    %v516 = vld [vmem:[%s515] sm:$0xff]
    %v517 = vld [vmem:[%s515 + $0x8] sm:$0xff]
    %v518 = vld [vmem:[%s515 + $0x10] sm:$0xff]
    %v519 = vld [vmem:[%s515 + $0x18] sm:$0xff]
    %v520 = vld [vmem:[%s515 + $0x20] sm:$0xff]
    %v521 = vld [vmem:[%s515 + $0x28] sm:$0xff]
    %v522 = vld [vmem:[%s515 + $0x30] sm:$0xff]
    %v523 = vld [vmem:[%s515 + $0x38] sm:$0xff]
    %v524 = vld [vmem:[%s5 + $0x4] sm:$0x3]
    %v526 = vrot.slane %v524, 1
    %v527 = vperm.slane %v524, 0
    %v528 = vperm.slane %v526, 0
    %531 = vmatpush.msra.mxu0 0.0
    %532 = vmatpush.msra.mxu0 0.0
    %533 = vmatpush.msra.mxu0 0.0
    %534 = vmatpush.msra.mxu0 0.0
    %535 = vmatpush.msra.mxu0 0.0
    %536 = vmatpush.msra.mxu0 0.0
    %537 = vmatpush.msra.mxu0 0.0
    %538 = vmatpush.msra.mxu0 0.0
    %539 = vmatpush.msra.mxu0 0.0
    %540 = vmatpush.msra.mxu0 0.0
    %541 = vmatpush.msra.mxu0 0.0
    %542 = vmatpush.msra.mxu0 0.0
    %543 = vmatpush.msra.mxu0 %v519
    %544 = vmatpush.msra.mxu0 %v518
    %545 = vmatpush.msra.mxu0 %v517
    %546 = vmatpush.msra.mxu0 %v516
    %547 = vmatmul.f32.gmra.mxu0 %v353
    %v548 = vpop.f32.mrf.mxu0
    %v549 = vadd.f32 %v527, %v548
    %550 = vdwg.mxu0
    %551 = vmatpush.msra.mxu0 0.0
    %552 = vmatpush.msra.mxu0 0.0
    %553 = vmatpush.msra.mxu0 0.0
    %554 = vmatpush.msra.mxu0 0.0
    %555 = vmatpush.msra.mxu0 0.0
    %556 = vmatpush.msra.mxu0 0.0
    %557 = vmatpush.msra.mxu0 0.0
    %558 = vmatpush.msra.mxu0 0.0
    %559 = vmatpush.msra.mxu0 0.0
    %560 = vmatpush.msra.mxu0 0.0
    %561 = vmatpush.msra.mxu0 0.0
    %562 = vmatpush.msra.mxu0 0.0
    %563 = vmatpush.msra.mxu0 %v523
    %564 = vmatpush.msra.mxu0 %v522
    %565 = vmatpush.msra.mxu0 %v521
    %566 = vmatpush.msra.mxu0 %v520
    %567 = vmatmul.f32.gmra.mxu0 %v353
    %v568 = vpop.f32.mrf.mxu0
    %v569 = vadd.f32 %v528, %v568
    %570 = vdwg.mxu0
    %v571 = vld [vmem:[%s5 + $0x9] sm:$0x3]
    %v573 = vrot.slane %v571, 1
    %v574 = vperm.slane %v571, 0
    %v575 = vperm.slane %v573, 0
    %v578 = vmul.f32 %v507, %v574
    %v579 = vmul.f32 %v514, %v574
    %v580 = vmul.f32 %v507, %v575
    %v581 = vmul.f32 %v514, %v575
    %s582 = scalar_lea.vmem %s4, 96
    %v583 = vld [vmem:[%s582] sm:$0xff]
    %v584 = vld [vmem:[%s582 + $0x8] sm:$0xff]
    %v585 = vld [vmem:[%s582 + $0x10] sm:$0xff]
    %v586 = vld [vmem:[%s582 + $0x18] sm:$0xff]
    %v587 = vld [vmem:[%s582 + $0x20] sm:$0xff]
    %v588 = vld [vmem:[%s582 + $0x28] sm:$0xff]
    %v589 = vld [vmem:[%s582 + $0x30] sm:$0xff]
    %v590 = vld [vmem:[%s582 + $0x38] sm:$0xff]
    %v593 = vrot.slane %v579, 7
    %v594 = vsel %vm244, %v593, %v578
    %v595 = vsel %vm33, %v594, 0
    %597 = vmatpush.msra.mxu0 0.0
    %598 = vmatpush.msra.mxu0 0.0
    %599 = vmatpush.msra.mxu0 0.0
    %600 = vmatpush.msra.mxu0 0.0
    %601 = vmatpush.msra.mxu0 0.0
    %602 = vmatpush.msra.mxu0 0.0
    %603 = vmatpush.msra.mxu0 0.0
    %604 = vmatpush.msra.mxu0 0.0
    %605 = vmatpush.msra.mxu0 0.0
    %606 = vmatpush.msra.mxu0 0.0
    %607 = vmatpush.msra.mxu0 0.0
    %608 = vmatpush.msra.mxu0 0.0
    %609 = vmatpush.msra.mxu0 %v586
    %610 = vmatpush.msra.mxu0 %v585
    %611 = vmatpush.msra.mxu0 %v584
    %612 = vmatpush.msra.mxu0 %v583
    %613 = vmatmul.f32.gmra.mxu0 %v595
    %v614 = vpop.f32.mrf.mxu0
    %v615 = vadd.f32 0.0, %v614
    %616 = vdwg.mxu0
    %v619 = vrot.slane %v581, 7
    %v620 = vsel %vm244, %v619, %v580
    %v621 = vsel %vm33, %v620, 0
    %623 = vmatpush.msra.mxu0 0.0
    %624 = vmatpush.msra.mxu0 0.0
    %625 = vmatpush.msra.mxu0 0.0
    %626 = vmatpush.msra.mxu0 0.0
    %627 = vmatpush.msra.mxu0 0.0
    %628 = vmatpush.msra.mxu0 0.0
    %629 = vmatpush.msra.mxu0 0.0
    %630 = vmatpush.msra.mxu0 0.0
    %631 = vmatpush.msra.mxu0 0.0
    %632 = vmatpush.msra.mxu0 0.0
    %633 = vmatpush.msra.mxu0 0.0
    %634 = vmatpush.msra.mxu0 0.0
    %635 = vmatpush.msra.mxu0 %v590
    %636 = vmatpush.msra.mxu0 %v589
    %637 = vmatpush.msra.mxu0 %v588
    %638 = vmatpush.msra.mxu0 %v587
    %639 = vmatmul.f32.gmra.mxu0 %v621
    %v640 = vpop.f32.mrf.mxu0
    %v641 = vadd.f32 0.0, %v640
    %642 = vdwg.mxu0
    %v643 = vmul.f32 %v549, %v615
    %v644 = vmul.f32 %v569, %v641
    %v645 = vld [vmem:[%s2] sm:$0xff]
    %v646 = vld [vmem:[%s2 + $0x8] sm:$0x3]
    %v647 = vld [vmem:[%s2 + $0x10] sm:$0xff]
    %v648 = vld [vmem:[%s2 + $0x18] sm:$0x3]
    %v649 = vld [vmem:[%s2 + $0x20] sm:$0xff]
    %v650 = vld [vmem:[%s2 + $0x28] sm:$0x3]
    %v651 = vld [vmem:[%s2 + $0x30] sm:$0xff]
    %v652 = vld [vmem:[%s2 + $0x38] sm:$0x3]
    %v655 = vrot.slane %v643, 1
    %v656 = vrot.slane %v644, 1
    %v657 = vperm.slane %v643, 0
    %v658 = vperm.slane %v655, 0
    %v659 = vperm.slane %v644, 0
    %v660 = vperm.slane %v656, 0
    %v665 = vmul.f32 %v645, %v657
    %v666 = vmul.f32 %v646, %v657
    %v667 = vmul.f32 %v647, %v658
    %v668 = vmul.f32 %v648, %v658
    %v669 = vmul.f32 %v649, %v659
    %v670 = vmul.f32 %v650, %v659
    %v671 = vmul.f32 %v651, %v660
    %v672 = vmul.f32 %v652, %v660
    %v673 = vld [vmem:[#allocation2] sm:$0xff]
    %v674 = vld [vmem:[#allocation2 + $0x8] sm:$0x3]
    %v675 = vld [vmem:[#allocation2 + $0x10] sm:$0xff]
    %v676 = vld [vmem:[#allocation2 + $0x18] sm:$0x3]
    %v677 = vld [vmem:[#allocation2 + $0x20] sm:$0xff]
    %v678 = vld [vmem:[#allocation2 + $0x28] sm:$0x3]
    %v679 = vld [vmem:[#allocation2 + $0x30] sm:$0xff]
    %v680 = vld [vmem:[#allocation2 + $0x38] sm:$0x3]
    %v681 = vperm.slane %v578, 0
    %v682 = vperm.slane %v579, 0
    %v683 = vperm.slane %v580, 0
    %v684 = vperm.slane %v581, 0
    %v685 = vmul.f32 %v673, %v681
    %v686 = vmul.f32 %v674, %v681
    %v687 = vmul.f32 %v675, %v682
    %v688 = vmul.f32 %v676, %v682
    %v689 = vmul.f32 %v677, %v683
    %v690 = vmul.f32 %v678, %v683
    %v691 = vmul.f32 %v679, %v684
    %v692 = vmul.f32 %v680, %v684
    %v693 = vadd.f32 %v665, %v685
    %v694 = vadd.f32 %v666, %v686
    %v695 = vadd.f32 %v667, %v687
    %v696 = vadd.f32 %v668, %v688
    %v697 = vadd.f32 %v669, %v689
    %v698 = vadd.f32 %v670, %v690
    %v699 = vadd.f32 %v671, %v691
    %v700 = vadd.f32 %v672, %v692
    %v701 = vsel %vm33, %v693, 0.0
    %702 = vadd.xlane.f32.xlu0 %v701
    %v703 = vpop.xlane.xlu0 %702
    %v704 = vsel %vm64, %v694, 0.0
    %705 = vadd.xlane.f32.xlu0 %v704
    %v706 = vpop.xlane.xlu0 %705
    %v707 = vsel %vm33, %v695, 0.0
    %708 = vadd.xlane.f32.xlu0 %v707
    %v709 = vpop.xlane.xlu0 %708
    %v710 = vsel %vm64, %v696, 0.0
    %711 = vadd.xlane.f32.xlu0 %v710
    %v712 = vpop.xlane.xlu0 %711
    %v713 = vsel %vm33, %v697, 0.0
    %714 = vadd.xlane.f32.xlu0 %v713
    %v715 = vpop.xlane.xlu0 %714
    %v716 = vsel %vm64, %v698, 0.0
    %717 = vadd.xlane.f32.xlu0 %v716
    %v718 = vpop.xlane.xlu0 %717
    %v719 = vsel %vm33, %v699, 0.0
    %720 = vadd.xlane.f32.xlu0 %v719
    %v721 = vpop.xlane.xlu0 %720
    %v722 = vsel %vm64, %v700, 0.0
    %723 = vadd.xlane.f32.xlu0 %v722
    %v724 = vpop.xlane.xlu0 %723
    %v733 = vperm.slane %v703, %v241
    %v734 = vadd.s32 %v241, 4294967288
    %v735 = vperm.slane %v706, %v734
    %vm736 = vcmask 130112
    %v737 = vsel %vm736, %v735, %v733
    %v738 = vperm.slane %v709, %v241
    %v739 = vperm.slane %v712, %v734
    %v740 = vsel %vm736, %v739, %v738
    %v741 = vperm.slane %v715, %v241
    %v742 = vperm.slane %v718, %v734
    %v743 = vsel %vm736, %v742, %v741
    %v744 = vperm.slane %v721, %v241
    %v745 = vperm.slane %v724, %v734
    %v746 = vsel %vm736, %v745, %v744
    %v747 = vsel %vm244, %v740, %v737
    %v748 = vsel %vm244, %v746, %v743
    %vm751 = vcmask 74752
    %v752 = vsel %vm751, %v747, -inf
    %753 = vmax.xlane.f32.xlu0 %v752
    %v754 = vpop.xlane.xlu0 %753
    %v755 = vsel %vm751, %v748, -inf
    %756 = vmax.xlane.f32.xlu0 %v755
    %v757 = vpop.xlane.xlu0 %756
    %v760 = vperm.slane %v754, 0
    %v761 = vperm.slane %v754, 1
    %v762 = vperm.slane %v757, 0
    %v763 = vperm.slane %v757, 1
    %v768 = vsub.f32 %v703, %v760
    %v769 = vsub.f32 %v706, %v760
    %v770 = vsub.f32 %v709, %v761
    %v771 = vsub.f32 %v712, %v761
    %v772 = vsub.f32 %v715, %v762
    %v773 = vsub.f32 %v718, %v762
    %v774 = vsub.f32 %v721, %v763
    %v775 = vsub.f32 %v724, %v763
    %v776 = vmul.f32 %v768, 1.442695
    %v777 = vpow.pop %v776
    %v778 = vmul.f32 %v769, 1.442695
    %v779 = vpow.pop %v778
    %v780 = vmul.f32 %v770, 1.442695
    %v781 = vpow.pop %v780
    %v782 = vmul.f32 %v771, 1.442695
    %v783 = vpow.pop %v782
    %v784 = vmul.f32 %v772, 1.442695
    %v785 = vpow.pop %v784
    %v786 = vmul.f32 %v773, 1.442695
    %v787 = vpow.pop %v786
    %v788 = vmul.f32 %v774, 1.442695
    %v789 = vpow.pop %v788
    %v790 = vmul.f32 %v775, 1.442695
    %v791 = vpow.pop %v790
    %800 = vset.pattern.permute.xlu0 0
    %801 = vperm.xlu0 %800, %v777
    %v802 = vpop.permute.xlu0 %801
    %803 = vset.pattern.permute.xlu0 0
    %804 = vperm.xlu0 %803, %v779
    %v805 = vpop.permute.xlu0 %804
    %806 = vset.pattern.permute.xlu0 0
    %807 = vperm.xlu0 %806, %v781
    %v808 = vpop.permute.xlu0 %807
    %809 = vset.pattern.permute.xlu0 0
    %810 = vperm.xlu0 %809, %v783
    %v811 = vpop.permute.xlu0 %810
    %812 = vset.pattern.permute.xlu0 0
    %813 = vperm.xlu0 %812, %v785
    %v814 = vpop.permute.xlu0 %813
    %815 = vset.pattern.permute.xlu0 0
    %816 = vperm.xlu0 %815, %v787
    %v817 = vpop.permute.xlu0 %816
    %818 = vset.pattern.permute.xlu0 0
    %819 = vperm.xlu0 %818, %v789
    %v820 = vpop.permute.xlu0 %819
    %821 = vset.pattern.permute.xlu0 0
    %822 = vperm.xlu0 %821, %v791
    %v823 = vpop.permute.xlu0 %822
    %v824 = vperm.slane %v802, %v241
    %v825 = vperm.slane %v805, %v734
    %v826 = vsel %vm736, %v825, %v824
    %v827 = vperm.slane %v808, %v241
    %v828 = vperm.slane %v811, %v734
    %v829 = vsel %vm736, %v828, %v827
    %v830 = vperm.slane %v814, %v241
    %v831 = vperm.slane %v817, %v734
    %v832 = vsel %vm736, %v831, %v830
    %v833 = vperm.slane %v820, %v241
    %v834 = vperm.slane %v823, %v734
    %v835 = vsel %vm736, %v834, %v833
    %v836 = vsel %vm244, %v829, %v826
    %v837 = vsel %vm244, %v835, %v832
    %v840 = vsel %vm751, %v836, 0.0
    %841 = vadd.xlane.f32.xlu0 %v840
    %v842 = vpop.xlane.xlu0 %841
    %v843 = vsel %vm751, %v837, 0.0
    %844 = vadd.xlane.f32.xlu0 %v843
    %v845 = vpop.xlane.xlu0 %844
    %v848 = vperm.slane %v842, 0
    %v849 = vperm.slane %v842, 1
    %v850 = vperm.slane %v845, 0
    %v851 = vperm.slane %v845, 1
    %v856 = vrcp.pop %v848
    %v857 = vmul.f32 %v848, %v856
    %v858 = vsub.f32 1.0, %v857
    %v859 = vmul.f32 %v856, %v858
    %v860 = vadd.f32 %v856, %v859
    %vm861 = vweird.f32 %v848
    %vm862 = vweird.f32 %v856
    %vm863 = vmor %vm861, %vm862
    %v864 = vsel %vm863, %v856, %v860
    %v865 = vand.u32 2147483647, %v848
    %vm866 = vcmp.eq.f32.partialorder %v865, 8.507059e+37
    %v867 = vand.u32 %v848, 2147483648
    %v868 = vor.u32 1.1754944e-38, %v867
    %v869 = vsel %vm866, %v868, %v864
    %v870 = vmul.f32 %v777, %v869
    %v871 = vmul.f32 %v779, %v869
    %v872 = vrcp.pop %v849
    %v873 = vmul.f32 %v849, %v872
    %v874 = vsub.f32 1.0, %v873
    %v875 = vmul.f32 %v872, %v874
    %v876 = vadd.f32 %v872, %v875
    %vm877 = vweird.f32 %v849
    %vm878 = vweird.f32 %v872
    %vm879 = vmor %vm877, %vm878
    %v880 = vsel %vm879, %v872, %v876
    %v881 = vand.u32 2147483647, %v849
    %vm882 = vcmp.eq.f32.partialorder %v881, 8.507059e+37
    %v883 = vand.u32 %v849, 2147483648
    %v884 = vor.u32 1.1754944e-38, %v883
    %v885 = vsel %vm882, %v884, %v880
    %v886 = vmul.f32 %v781, %v885
    %v887 = vmul.f32 %v783, %v885
    %v888 = vrcp.pop %v850
    %v889 = vmul.f32 %v850, %v888
    %v890 = vsub.f32 1.0, %v889
    %v891 = vmul.f32 %v888, %v890
    %v892 = vadd.f32 %v888, %v891
    %vm893 = vweird.f32 %v850
    %vm894 = vweird.f32 %v888
    %vm895 = vmor %vm893, %vm894
    %v896 = vsel %vm895, %v888, %v892
    %v897 = vand.u32 2147483647, %v850
    %vm898 = vcmp.eq.f32.partialorder %v897, 8.507059e+37
    %v899 = vand.u32 %v850, 2147483648
    %v900 = vor.u32 1.1754944e-38, %v899
    %v901 = vsel %vm898, %v900, %v896
    %v902 = vmul.f32 %v785, %v901
    %v903 = vmul.f32 %v787, %v901
    %v904 = vrcp.pop %v851
    %v905 = vmul.f32 %v851, %v904
    %v906 = vsub.f32 1.0, %v905
    %v907 = vmul.f32 %v904, %v906
    %v908 = vadd.f32 %v904, %v907
    %vm909 = vweird.f32 %v851
    %vm910 = vweird.f32 %v904
    %vm911 = vmor %vm909, %vm910
    %v912 = vsel %vm911, %v904, %v908
    %v913 = vand.u32 2147483647, %v851
    %vm914 = vcmp.eq.f32.partialorder %v913, 8.507059e+37
    %v915 = vand.u32 %v851, 2147483648
    %v916 = vor.u32 1.1754944e-38, %v915
    %v917 = vsel %vm914, %v916, %v912
    %v918 = vmul.f32 %v789, %v917
    %v919 = vmul.f32 %v791, %v917
    %921 = vset.pattern.permute.xlu0 0
    %922 = vperm.xlu0 %921, %v870
    %v923 = vpop.permute.xlu0 %922
    %926 = vset.pattern.permute.xlu0 0
    %927 = vperm.xlu0 %926, %v871
    %v928 = vpop.permute.xlu0 %927
    %931 = vset.pattern.permute.xlu0 0
    %932 = vperm.xlu0 %931, %v886
    %v933 = vpop.permute.xlu0 %932
    %936 = vset.pattern.permute.xlu0 0
    %937 = vperm.xlu0 %936, %v887
    %v938 = vpop.permute.xlu0 %937
    %941 = vset.pattern.permute.xlu0 0
    %942 = vperm.xlu0 %941, %v902
    %v943 = vpop.permute.xlu0 %942
    %946 = vset.pattern.permute.xlu0 0
    %947 = vperm.xlu0 %946, %v903
    %v948 = vpop.permute.xlu0 %947
    %951 = vset.pattern.permute.xlu0 0
    %952 = vperm.xlu0 %951, %v918
    %v953 = vpop.permute.xlu0 %952
    %956 = vset.pattern.permute.xlu0 0
    %957 = vperm.xlu0 %956, %v919
    %v958 = vpop.permute.xlu0 %957
    %v960 = vmul.f32 %v923, %v645
    %v961 = vmul.f32 %v928, %v646
    %v962 = vmul.f32 %v933, %v647
    %v963 = vmul.f32 %v938, %v648
    %v964 = vmul.f32 %v943, %v649
    %v965 = vmul.f32 %v948, %v650
    %v966 = vmul.f32 %v953, %v651
    %v967 = vmul.f32 %v958, %v652
    %v968 = vsel %vm33, %v960, 0.0
    %v969 = vsel %vm64, %v961, 0.0
    %v970 = vadd.f32 %v968, %v969
    %v971 = vrot.slane %v970, 4
    %v972 = vadd.f32 %v970, %v971
    %v973 = vrot.slane %v972, 2
    %v974 = vadd.f32 %v972, %v973
    %v975 = vrot.slane %v974, 1
    %v976 = vadd.f32 %v974, %v975
    %v977 = vsel %vm33, %v962, 0.0
    %v978 = vsel %vm64, %v963, 0.0
    %v979 = vadd.f32 %v977, %v978
    %v980 = vrot.slane %v979, 4
    %v981 = vadd.f32 %v979, %v980
    %v982 = vrot.slane %v981, 2
    %v983 = vadd.f32 %v981, %v982
    %v984 = vrot.slane %v983, 1
    %v985 = vadd.f32 %v983, %v984
    %v986 = vsel %vm33, %v964, 0.0
    %v987 = vsel %vm64, %v965, 0.0
    %v988 = vadd.f32 %v986, %v987
    %v989 = vrot.slane %v988, 4
    %v990 = vadd.f32 %v988, %v989
    %v991 = vrot.slane %v990, 2
    %v992 = vadd.f32 %v990, %v991
    %v993 = vrot.slane %v992, 1
    %v994 = vadd.f32 %v992, %v993
    %v995 = vsel %vm33, %v966, 0.0
    %v996 = vsel %vm64, %v967, 0.0
    %v997 = vadd.f32 %v995, %v996
    %v998 = vrot.slane %v997, 4
    %v999 = vadd.f32 %v997, %v998
    %v1000 = vrot.slane %v999, 2
    %v1001 = vadd.f32 %v999, %v1000
    %v1002 = vrot.slane %v1001, 1
    %v1003 = vadd.f32 %v1001, %v1002
    %s1004 = scalar_lea.vmem %s4, 224
    %v1005 = vld [vmem:[%s1004] sm:$0xff]
    %v1006 = vld [vmem:[%s1004 + $0x8] sm:$0xff]
    %v1007 = vld [vmem:[%s1004 + $0x10] sm:$0xff]
    %v1008 = vld [vmem:[%s1004 + $0x18] sm:$0xff]
    %s1009 = scalar_lea.vmem %s4, 256
    %v1010 = vld [vmem:[%s1009] sm:$0xff]
    %v1011 = vld [vmem:[%s1009 + $0x8] sm:$0xff]
    %v1012 = vld [vmem:[%s1009 + $0x10] sm:$0xff]
    %v1013 = vld [vmem:[%s1009 + $0x18] sm:$0xff]
    %v1016 = vsel %vm244, %v1003, %v994
    %v1017 = vsel %vm33, %v1016, 0
    %1019 = vmatpush.msra.mxu0 0.0
    %1020 = vmatpush.msra.mxu0 0.0
    %1021 = vmatpush.msra.mxu0 0.0
    %1022 = vmatpush.msra.mxu0 0.0
    %1023 = vmatpush.msra.mxu0 0.0
    %1024 = vmatpush.msra.mxu0 0.0
    %1025 = vmatpush.msra.mxu0 0.0
    %1026 = vmatpush.msra.mxu0 0.0
    %1027 = vmatpush.msra.mxu0 0.0
    %1028 = vmatpush.msra.mxu0 0.0
    %1029 = vmatpush.msra.mxu0 0.0
    %1030 = vmatpush.msra.mxu0 0.0
    %1031 = vmatpush.msra.mxu0 %v1013
    %1032 = vmatpush.msra.mxu0 %v1012
    %1033 = vmatpush.msra.mxu0 %v1011
    %1034 = vmatpush.msra.mxu0 %v1010
    %1035 = vmatmul.f32.gmra.mxu0 %v1017
    %v1036 = vpop.f32.mrf.mxu0
    %v1037 = vadd.f32 0.0, %v1036
    %1038 = vdwg.mxu0
    %v1041 = vsel %vm244, %v985, %v976
    %v1042 = vsel %vm33, %v1041, 0
    %1044 = vmatpush.msra.mxu0 0.0
    %1045 = vmatpush.msra.mxu0 0.0
    %1046 = vmatpush.msra.mxu0 0.0
    %1047 = vmatpush.msra.mxu0 0.0
    %1048 = vmatpush.msra.mxu0 0.0
    %1049 = vmatpush.msra.mxu0 0.0
    %1050 = vmatpush.msra.mxu0 0.0
    %1051 = vmatpush.msra.mxu0 0.0
    %1052 = vmatpush.msra.mxu0 0.0
    %1053 = vmatpush.msra.mxu0 0.0
    %1054 = vmatpush.msra.mxu0 0.0
    %1055 = vmatpush.msra.mxu0 0.0
    %1056 = vmatpush.msra.mxu0 %v1008
    %1057 = vmatpush.msra.mxu0 %v1007
    %1058 = vmatpush.msra.mxu0 %v1006
    %1059 = vmatpush.msra.mxu0 %v1005
    %1060 = vmatmul.f32.gmra.mxu0 %v1042
    %v1061 = vpop.f32.mrf.mxu0
    %v1062 = vadd.f32 %v1037, %v1061
    %1063 = vdwg.mxu0
    %v1064 = vld [vmem:[%s5 + $0xb] sm:$0x1]
    %v1065 = vperm.slane %v1064, 0
    %v1066 = vadd.f32 %v1062, %v1065
    %s1067 = scalar_lea.vmem %s4, 288
    %v1068 = vld [vmem:[%s1067] sm:$0xff]
    %v1069 = vld [vmem:[%s1067 + $0x8] sm:$0xff]
    %v1070 = vld [vmem:[%s1067 + $0x10] sm:$0xff]
    %v1071 = vld [vmem:[%s1067 + $0x18] sm:$0xff]
    %s1072 = scalar_lea.vmem %s4, 320
    %v1073 = vld [vmem:[%s1072] sm:$0xff]
    %v1074 = vld [vmem:[%s1072 + $0x8] sm:$0xff]
    %v1075 = vld [vmem:[%s1072 + $0x10] sm:$0xff]
    %v1076 = vld [vmem:[%s1072 + $0x18] sm:$0xff]
    %1077 = vmatpush.msra.mxu0 0.0
    %1078 = vmatpush.msra.mxu0 0.0
    %1079 = vmatpush.msra.mxu0 0.0
    %1080 = vmatpush.msra.mxu0 0.0
    %1081 = vmatpush.msra.mxu0 0.0
    %1082 = vmatpush.msra.mxu0 0.0
    %1083 = vmatpush.msra.mxu0 0.0
    %1084 = vmatpush.msra.mxu0 0.0
    %1085 = vmatpush.msra.mxu0 0.0
    %1086 = vmatpush.msra.mxu0 0.0
    %1087 = vmatpush.msra.mxu0 0.0
    %1088 = vmatpush.msra.mxu0 0.0
    %1089 = vmatpush.msra.mxu0 %v1076
    %1090 = vmatpush.msra.mxu0 %v1075
    %1091 = vmatpush.msra.mxu0 %v1074
    %1092 = vmatpush.msra.mxu0 %v1073
    %1093 = vmatmul.f32.gmra.mxu0 %v353
    %v1094 = vpop.f32.mrf.mxu0
    %v1095 = vadd.f32 0.0, %v1094
    %1096 = vdwg.mxu0
    %v1098 = vsel %vm33, %v1066, 0
    %1100 = vmatpush.msra.mxu0 0.0
    %1101 = vmatpush.msra.mxu0 0.0
    %1102 = vmatpush.msra.mxu0 0.0
    %1103 = vmatpush.msra.mxu0 0.0
    %1104 = vmatpush.msra.mxu0 0.0
    %1105 = vmatpush.msra.mxu0 0.0
    %1106 = vmatpush.msra.mxu0 0.0
    %1107 = vmatpush.msra.mxu0 0.0
    %1108 = vmatpush.msra.mxu0 0.0
    %1109 = vmatpush.msra.mxu0 0.0
    %1110 = vmatpush.msra.mxu0 0.0
    %1111 = vmatpush.msra.mxu0 0.0
    %1112 = vmatpush.msra.mxu0 %v1071
    %1113 = vmatpush.msra.mxu0 %v1070
    %1114 = vmatpush.msra.mxu0 %v1069
    %1115 = vmatpush.msra.mxu0 %v1068
    %1116 = vmatmul.f32.gmra.mxu0 %v1098
    %v1117 = vpop.f32.mrf.mxu0
    %v1118 = vadd.f32 %v1095, %v1117
    %1119 = vdwg.mxu0
    %v1120 = vld [vmem:[%s5 + $0xc] sm:$0x1]
    %v1121 = vperm.slane %v1120, 0
    %v1122 = vadd.f32 %v1118, %v1121
    %v1123 = vld [vmem:[%s4] sm:$0xff]
    %v1124 = vld [vmem:[%s4 + $0x8] sm:$0xff]
    %v1125 = vld [vmem:[%s4 + $0x10] sm:$0xff]
    %v1126 = vld [vmem:[%s4 + $0x18] sm:$0xff]
    %v1129 = vsel %vm244, %v514, %v507
    %v1130 = vsel %vm33, %v1129, 0
    %1132 = vmatpush.msra.mxu0 0.0
    %1133 = vmatpush.msra.mxu0 0.0
    %1134 = vmatpush.msra.mxu0 0.0
    %1135 = vmatpush.msra.mxu0 0.0
    %1136 = vmatpush.msra.mxu0 0.0
    %1137 = vmatpush.msra.mxu0 0.0
    %1138 = vmatpush.msra.mxu0 0.0
    %1139 = vmatpush.msra.mxu0 0.0
    %1140 = vmatpush.msra.mxu0 0.0
    %1141 = vmatpush.msra.mxu0 0.0
    %1142 = vmatpush.msra.mxu0 0.0
    %1143 = vmatpush.msra.mxu0 0.0
    %1144 = vmatpush.msra.mxu0 %v1126
    %1145 = vmatpush.msra.mxu0 %v1125
    %1146 = vmatpush.msra.mxu0 %v1124
    %1147 = vmatpush.msra.mxu0 %v1123
    %1148 = vmatmul.f32.gmra.mxu0 %v1130
    %v1149 = vpop.f32.mrf.mxu0
    %v1150 = vadd.f32 0.0, %v1149
    %1151 = vdwg.mxu0
    %v1152 = vld [vmem:[#allocation3] sm:$0xff]
    %v1153 = vld [vmem:[#allocation3 + $0x8] sm:$0xff]
    %v1155 = vrot.slane %v1150, 1
    %v1156 = vperm.slane %v1150, 0
    %v1157 = vperm.slane %v1155, 0
    %v1160 = vmul.f32 %v1152, %v1156
    %v1161 = vmul.f32 %v1153, %v1157
    %v1162 = vsel %vm33, %v1160, 0.0
    %1163 = vadd.xlane.f32.xlu0 %v1162
    %v1164 = vpop.xlane.xlu0 %1163
    %v1165 = vsel %vm33, %v1161, 0.0
    %1166 = vadd.xlane.f32.xlu0 %v1165
    %v1167 = vpop.xlane.xlu0 %1166
    %v1168 = vld [vmem:[%s280] sm:$0x3]
    %v1170 = vperm.slane %v1168, 0
    %v1171 = vlaneseq
    %v1172 = vshrl.u32 %v1171, 7
    %1174 = vset.pattern.permute.xlu0 %v1172
    %1175 = vperm.xlu0 %1174, %v1170
    %v1176 = vpop.permute.xlu0 %1175
    %v1177 = vperm.slane %v1168, 1
    %v1178 = vlaneseq
    %v1179 = vshrl.u32 %v1178, 7
    %1181 = vset.pattern.permute.xlu0 %v1179
    %1182 = vperm.xlu0 %1181, %v1177
    %v1183 = vpop.permute.xlu0 %1182
    %v1186 = vadd.f32 %v1164, %v1176
    %v1187 = vadd.f32 %v1167, %v1183
    %1190 = vset.pattern.permute.xlu0 0
    %1191 = vperm.xlu0 %1190, %v1186
    %v1192 = vpop.permute.xlu0 %1191
    %1193 = vset.pattern.permute.xlu0 0
    %1194 = vperm.xlu0 %1193, %v1187
    %v1195 = vpop.permute.xlu0 %1194
    %v1196 = vperm.slane %v1192, %v241
    %v1197 = vperm.slane %v1195, %v241
    %v1198 = vsel %vm244, %v1197, %v1196
    %v1200 = vsel %vm247, %v1198, -inf
    %1201 = vmax.xlane.f32.xlu0 %v1200
    %v1202 = vpop.xlane.xlu0 %1201
    %v1204 = vperm.slane %v1202, 0
    %v1205 = vperm.slane %v1202, 1
    %v1208 = vsub.f32 %v1186, %v1204
    %v1209 = vsub.f32 %v1187, %v1205
    %v1210 = vmul.f32 %v1208, 1.442695
    %v1211 = vpow.pop %v1210
    %v1212 = vmul.f32 %v1209, 1.442695
    %v1213 = vpow.pop %v1212
    %1216 = vset.pattern.permute.xlu0 0
    %1217 = vperm.xlu0 %1216, %v1211
    %v1218 = vpop.permute.xlu0 %1217
    %1219 = vset.pattern.permute.xlu0 0
    %1220 = vperm.xlu0 %1219, %v1213
    %v1221 = vpop.permute.xlu0 %1220
    %v1222 = vperm.slane %v1218, %v241
    %v1223 = vperm.slane %v1221, %v241
    %v1224 = vsel %vm244, %v1223, %v1222
    %v1226 = vsel %vm247, %v1224, 0.0
    %1227 = vadd.xlane.f32.xlu0 %v1226
    %v1228 = vpop.xlane.xlu0 %1227
    %v1230 = vperm.slane %v1228, 0
    %v1231 = vperm.slane %v1228, 1
    %v1234 = vrcp.pop %v1230
    %v1235 = vmul.f32 %v1230, %v1234
    %v1236 = vsub.f32 1.0, %v1235
    %v1237 = vmul.f32 %v1234, %v1236
    %v1238 = vadd.f32 %v1234, %v1237
    %vm1239 = vweird.f32 %v1230
    %vm1240 = vweird.f32 %v1234
    %vm1241 = vmor %vm1239, %vm1240
    %v1242 = vsel %vm1241, %v1234, %v1238
    %v1243 = vand.u32 2147483647, %v1230
    %vm1244 = vcmp.eq.f32.partialorder %v1243, 8.507059e+37
    %v1245 = vand.u32 %v1230, 2147483648
    %v1246 = vor.u32 1.1754944e-38, %v1245
    %v1247 = vsel %vm1244, %v1246, %v1242
    %v1248 = vmul.f32 %v1211, %v1247
    %v1249 = vrcp.pop %v1231
    %v1250 = vmul.f32 %v1231, %v1249
    %v1251 = vsub.f32 1.0, %v1250
    %v1252 = vmul.f32 %v1249, %v1251
    %v1253 = vadd.f32 %v1249, %v1252
    %vm1254 = vweird.f32 %v1231
    %vm1255 = vweird.f32 %v1249
    %vm1256 = vmor %vm1254, %vm1255
    %v1257 = vsel %vm1256, %v1249, %v1253
    %v1258 = vand.u32 2147483647, %v1231
    %vm1259 = vcmp.eq.f32.partialorder %v1258, 8.507059e+37
    %v1260 = vand.u32 %v1231, 2147483648
    %v1261 = vor.u32 1.1754944e-38, %v1260
    %v1262 = vsel %vm1259, %v1261, %v1257
    %v1263 = vmul.f32 %v1213, %v1262
    %v1264 = vld [vmem:[%s0] sm:$0xff]
    %v1265 = vld [vmem:[%s0 + $0x8] sm:$0xff]
    %1267 = vset.pattern.permute.xlu0 0
    %1268 = vperm.xlu0 %1267, %v1248
    %v1269 = vpop.permute.xlu0 %1268
    %1272 = vset.pattern.permute.xlu0 0
    %1273 = vperm.xlu0 %1272, %v1263
    %v1274 = vpop.permute.xlu0 %1273
    %v1276 = vmul.f32 %v1269, %v1264
    %v1277 = vmul.f32 %v1274, %v1265
    %v1278 = vsel %vm33, %v1276, 0.0
    %v1279 = vrot.slane %v1278, 4
    %v1280 = vadd.f32 %v1278, %v1279
    %v1281 = vrot.slane %v1280, 2
    %v1282 = vadd.f32 %v1280, %v1281
    %v1283 = vrot.slane %v1282, 1
    %v1284 = vadd.f32 %v1282, %v1283
    %v1285 = vsel %vm33, %v1277, 0.0
    %v1286 = vrot.slane %v1285, 4
    %v1287 = vadd.f32 %v1285, %v1286
    %v1288 = vrot.slane %v1287, 2
    %v1289 = vadd.f32 %v1287, %v1288
    %v1290 = vrot.slane %v1289, 1
    %v1291 = vadd.f32 %v1289, %v1290
    %v1292 = vld [vmem:[%s515] sm:$0xff]
    %v1293 = vld [vmem:[%s515 + $0x8] sm:$0xff]
    %v1294 = vld [vmem:[%s515 + $0x10] sm:$0xff]
    %v1295 = vld [vmem:[%s515 + $0x18] sm:$0xff]
    %v1296 = vld [vmem:[%s515 + $0x20] sm:$0xff]
    %v1297 = vld [vmem:[%s515 + $0x28] sm:$0xff]
    %v1298 = vld [vmem:[%s515 + $0x30] sm:$0xff]
    %v1299 = vld [vmem:[%s515 + $0x38] sm:$0xff]
    %v1300 = vld [vmem:[%s5 + $0x4] sm:$0x3]
    %v1302 = vrot.slane %v1300, 1
    %v1303 = vperm.slane %v1300, 0
    %v1304 = vperm.slane %v1302, 0
    %v1308 = vsel %vm33, %v1122, 0
    %1310 = vmatpush.msra.mxu0 0.0
    %1311 = vmatpush.msra.mxu0 0.0
    %1312 = vmatpush.msra.mxu0 0.0
    %1313 = vmatpush.msra.mxu0 0.0
    %1314 = vmatpush.msra.mxu0 0.0
    %1315 = vmatpush.msra.mxu0 0.0
    %1316 = vmatpush.msra.mxu0 0.0
    %1317 = vmatpush.msra.mxu0 0.0
    %1318 = vmatpush.msra.mxu0 0.0
    %1319 = vmatpush.msra.mxu0 0.0
    %1320 = vmatpush.msra.mxu0 0.0
    %1321 = vmatpush.msra.mxu0 0.0
    %1322 = vmatpush.msra.mxu0 %v1295
    %1323 = vmatpush.msra.mxu0 %v1294
    %1324 = vmatpush.msra.mxu0 %v1293
    %1325 = vmatpush.msra.mxu0 %v1292
    %1326 = vmatmul.f32.gmra.mxu0 %v1308
    %v1327 = vpop.f32.mrf.mxu0
    %v1328 = vadd.f32 %v1303, %v1327
    %1329 = vdwg.mxu0
    %1330 = vmatpush.msra.mxu0 0.0
    %1331 = vmatpush.msra.mxu0 0.0
    %1332 = vmatpush.msra.mxu0 0.0
    %1333 = vmatpush.msra.mxu0 0.0
    %1334 = vmatpush.msra.mxu0 0.0
    %1335 = vmatpush.msra.mxu0 0.0
    %1336 = vmatpush.msra.mxu0 0.0
    %1337 = vmatpush.msra.mxu0 0.0
    %1338 = vmatpush.msra.mxu0 0.0
    %1339 = vmatpush.msra.mxu0 0.0
    %1340 = vmatpush.msra.mxu0 0.0
    %1341 = vmatpush.msra.mxu0 0.0
    %1342 = vmatpush.msra.mxu0 %v1299
    %1343 = vmatpush.msra.mxu0 %v1298
    %1344 = vmatpush.msra.mxu0 %v1297
    %1345 = vmatpush.msra.mxu0 %v1296
    %1346 = vmatmul.f32.gmra.mxu0 %v1308
    %v1347 = vpop.f32.mrf.mxu0
    %v1348 = vadd.f32 %v1304, %v1347
    %1349 = vdwg.mxu0
    %v1350 = vld [vmem:[%s5 + $0x9] sm:$0x3]
    %v1352 = vrot.slane %v1350, 1
    %v1353 = vperm.slane %v1350, 0
    %v1354 = vperm.slane %v1352, 0
    %v1357 = vmul.f32 %v1284, %v1353
    %v1358 = vmul.f32 %v1291, %v1353
    %v1359 = vmul.f32 %v1284, %v1354
    %v1360 = vmul.f32 %v1291, %v1354
    %v1361 = vld [vmem:[%s582] sm:$0xff]
    %v1362 = vld [vmem:[%s582 + $0x8] sm:$0xff]
    %v1363 = vld [vmem:[%s582 + $0x10] sm:$0xff]
    %v1364 = vld [vmem:[%s582 + $0x18] sm:$0xff]
    %v1365 = vld [vmem:[%s582 + $0x20] sm:$0xff]
    %v1366 = vld [vmem:[%s582 + $0x28] sm:$0xff]
    %v1367 = vld [vmem:[%s582 + $0x30] sm:$0xff]
    %v1368 = vld [vmem:[%s582 + $0x38] sm:$0xff]
    %v1371 = vrot.slane %v1358, 7
    %v1372 = vsel %vm244, %v1371, %v1357
    %v1373 = vsel %vm33, %v1372, 0
    %1375 = vmatpush.msra.mxu0 0.0
    %1376 = vmatpush.msra.mxu0 0.0
    %1377 = vmatpush.msra.mxu0 0.0
    %1378 = vmatpush.msra.mxu0 0.0
    %1379 = vmatpush.msra.mxu0 0.0
    %1380 = vmatpush.msra.mxu0 0.0
    %1381 = vmatpush.msra.mxu0 0.0
    %1382 = vmatpush.msra.mxu0 0.0
    %1383 = vmatpush.msra.mxu0 0.0
    %1384 = vmatpush.msra.mxu0 0.0
    %1385 = vmatpush.msra.mxu0 0.0
    %1386 = vmatpush.msra.mxu0 0.0
    %1387 = vmatpush.msra.mxu0 %v1364
    %1388 = vmatpush.msra.mxu0 %v1363
    %1389 = vmatpush.msra.mxu0 %v1362
    %1390 = vmatpush.msra.mxu0 %v1361
    %1391 = vmatmul.f32.gmra.mxu0 %v1373
    %v1392 = vpop.f32.mrf.mxu0
    %v1393 = vadd.f32 0.0, %v1392
    %1394 = vdwg.mxu0
    %v1397 = vrot.slane %v1360, 7
    %v1398 = vsel %vm244, %v1397, %v1359
    %v1399 = vsel %vm33, %v1398, 0
    %1401 = vmatpush.msra.mxu0 0.0
    %1402 = vmatpush.msra.mxu0 0.0
    %1403 = vmatpush.msra.mxu0 0.0
    %1404 = vmatpush.msra.mxu0 0.0
    %1405 = vmatpush.msra.mxu0 0.0
    %1406 = vmatpush.msra.mxu0 0.0
    %1407 = vmatpush.msra.mxu0 0.0
    %1408 = vmatpush.msra.mxu0 0.0
    %1409 = vmatpush.msra.mxu0 0.0
    %1410 = vmatpush.msra.mxu0 0.0
    %1411 = vmatpush.msra.mxu0 0.0
    %1412 = vmatpush.msra.mxu0 0.0
    %1413 = vmatpush.msra.mxu0 %v1368
    %1414 = vmatpush.msra.mxu0 %v1367
    %1415 = vmatpush.msra.mxu0 %v1366
    %1416 = vmatpush.msra.mxu0 %v1365
    %1417 = vmatmul.f32.gmra.mxu0 %v1399
    %v1418 = vpop.f32.mrf.mxu0
    %v1419 = vadd.f32 0.0, %v1418
    %1420 = vdwg.mxu0
    %v1421 = vmul.f32 %v1328, %v1393
    %v1422 = vmul.f32 %v1348, %v1419
    %v1423 = vld [vmem:[%s2] sm:$0xff]
    %v1424 = vld [vmem:[%s2 + $0x8] sm:$0x3]
    %v1425 = vld [vmem:[%s2 + $0x10] sm:$0xff]
    %v1426 = vld [vmem:[%s2 + $0x18] sm:$0x3]
    %v1427 = vld [vmem:[%s2 + $0x20] sm:$0xff]
    %v1428 = vld [vmem:[%s2 + $0x28] sm:$0x3]
    %v1429 = vld [vmem:[%s2 + $0x30] sm:$0xff]
    %v1430 = vld [vmem:[%s2 + $0x38] sm:$0x3]
    %v1433 = vrot.slane %v1421, 1
    %v1434 = vrot.slane %v1422, 1
    %v1435 = vperm.slane %v1421, 0
    %v1436 = vperm.slane %v1433, 0
    %v1437 = vperm.slane %v1422, 0
    %v1438 = vperm.slane %v1434, 0
    %v1443 = vmul.f32 %v1423, %v1435
    %v1444 = vmul.f32 %v1424, %v1435
    %v1445 = vmul.f32 %v1425, %v1436
    %v1446 = vmul.f32 %v1426, %v1436
    %v1447 = vmul.f32 %v1427, %v1437
    %v1448 = vmul.f32 %v1428, %v1437
    %v1449 = vmul.f32 %v1429, %v1438
    %v1450 = vmul.f32 %v1430, %v1438
    %v1451 = vld [vmem:[#allocation2] sm:$0xff]
    %v1452 = vld [vmem:[#allocation2 + $0x8] sm:$0x3]
    %v1453 = vld [vmem:[#allocation2 + $0x10] sm:$0xff]
    %v1454 = vld [vmem:[#allocation2 + $0x18] sm:$0x3]
    %v1455 = vld [vmem:[#allocation2 + $0x20] sm:$0xff]
    %v1456 = vld [vmem:[#allocation2 + $0x28] sm:$0x3]
    %v1457 = vld [vmem:[#allocation2 + $0x30] sm:$0xff]
    %v1458 = vld [vmem:[#allocation2 + $0x38] sm:$0x3]
    %v1459 = vperm.slane %v1357, 0
    %v1460 = vperm.slane %v1358, 0
    %v1461 = vperm.slane %v1359, 0
    %v1462 = vperm.slane %v1360, 0
    %v1463 = vmul.f32 %v1451, %v1459
    %v1464 = vmul.f32 %v1452, %v1459
    %v1465 = vmul.f32 %v1453, %v1460
    %v1466 = vmul.f32 %v1454, %v1460
    %v1467 = vmul.f32 %v1455, %v1461
    %v1468 = vmul.f32 %v1456, %v1461
    %v1469 = vmul.f32 %v1457, %v1462
    %v1470 = vmul.f32 %v1458, %v1462
    %v1471 = vadd.f32 %v1443, %v1463
    %v1472 = vadd.f32 %v1444, %v1464
    %v1473 = vadd.f32 %v1445, %v1465
    %v1474 = vadd.f32 %v1446, %v1466
    %v1475 = vadd.f32 %v1447, %v1467
    %v1476 = vadd.f32 %v1448, %v1468
    %v1477 = vadd.f32 %v1449, %v1469
    %v1478 = vadd.f32 %v1450, %v1470
    %v1479 = vsel %vm33, %v1471, 0.0
    %1480 = vadd.xlane.f32.xlu0 %v1479
    %v1481 = vpop.xlane.xlu0 %1480
    %v1482 = vsel %vm64, %v1472, 0.0
    %1483 = vadd.xlane.f32.xlu0 %v1482
    %v1484 = vpop.xlane.xlu0 %1483
    %v1485 = vsel %vm33, %v1473, 0.0
    %1486 = vadd.xlane.f32.xlu0 %v1485
    %v1487 = vpop.xlane.xlu0 %1486
    %v1488 = vsel %vm64, %v1474, 0.0
    %1489 = vadd.xlane.f32.xlu0 %v1488
    %v1490 = vpop.xlane.xlu0 %1489
    %v1491 = vsel %vm33, %v1475, 0.0
    %1492 = vadd.xlane.f32.xlu0 %v1491
    %v1493 = vpop.xlane.xlu0 %1492
    %v1494 = vsel %vm64, %v1476, 0.0
    %1495 = vadd.xlane.f32.xlu0 %v1494
    %v1496 = vpop.xlane.xlu0 %1495
    %v1497 = vsel %vm33, %v1477, 0.0
    %1498 = vadd.xlane.f32.xlu0 %v1497
    %v1499 = vpop.xlane.xlu0 %1498
    %v1500 = vsel %vm64, %v1478, 0.0
    %1501 = vadd.xlane.f32.xlu0 %v1500
    %v1502 = vpop.xlane.xlu0 %1501
    %v1511 = vperm.slane %v1481, %v241
    %v1512 = vperm.slane %v1484, %v734
    %v1513 = vsel %vm736, %v1512, %v1511
    %v1514 = vperm.slane %v1487, %v241
    %v1515 = vperm.slane %v1490, %v734
    %v1516 = vsel %vm736, %v1515, %v1514
    %v1517 = vperm.slane %v1493, %v241
    %v1518 = vperm.slane %v1496, %v734
    %v1519 = vsel %vm736, %v1518, %v1517
    %v1520 = vperm.slane %v1499, %v241
    %v1521 = vperm.slane %v1502, %v734
    %v1522 = vsel %vm736, %v1521, %v1520
    %v1523 = vsel %vm244, %v1516, %v1513
    %v1524 = vsel %vm244, %v1522, %v1519
    %v1527 = vsel %vm751, %v1523, -inf
    %1528 = vmax.xlane.f32.xlu0 %v1527
    %v1529 = vpop.xlane.xlu0 %1528
    %v1530 = vsel %vm751, %v1524, -inf
    %1531 = vmax.xlane.f32.xlu0 %v1530
    %v1532 = vpop.xlane.xlu0 %1531
    %v1535 = vperm.slane %v1529, 0
    %v1536 = vperm.slane %v1529, 1
    %v1537 = vperm.slane %v1532, 0
    %v1538 = vperm.slane %v1532, 1
    %v1543 = vsub.f32 %v1481, %v1535
    %v1544 = vsub.f32 %v1484, %v1535
    %v1545 = vsub.f32 %v1487, %v1536
    %v1546 = vsub.f32 %v1490, %v1536
    %v1547 = vsub.f32 %v1493, %v1537
    %v1548 = vsub.f32 %v1496, %v1537
    %v1549 = vsub.f32 %v1499, %v1538
    %v1550 = vsub.f32 %v1502, %v1538
    %v1551 = vmul.f32 %v1543, 1.442695
    %v1552 = vpow.pop %v1551
    %v1553 = vmul.f32 %v1544, 1.442695
    %v1554 = vpow.pop %v1553
    %v1555 = vmul.f32 %v1545, 1.442695
    %v1556 = vpow.pop %v1555
    %v1557 = vmul.f32 %v1546, 1.442695
    %v1558 = vpow.pop %v1557
    %v1559 = vmul.f32 %v1547, 1.442695
    %v1560 = vpow.pop %v1559
    %v1561 = vmul.f32 %v1548, 1.442695
    %v1562 = vpow.pop %v1561
    %v1563 = vmul.f32 %v1549, 1.442695
    %v1564 = vpow.pop %v1563
    %v1565 = vmul.f32 %v1550, 1.442695
    %v1566 = vpow.pop %v1565
    %1575 = vset.pattern.permute.xlu0 0
    %1576 = vperm.xlu0 %1575, %v1552
    %v1577 = vpop.permute.xlu0 %1576
    %1578 = vset.pattern.permute.xlu0 0
    %1579 = vperm.xlu0 %1578, %v1554
    %v1580 = vpop.permute.xlu0 %1579
    %1581 = vset.pattern.permute.xlu0 0
    %1582 = vperm.xlu0 %1581, %v1556
    %v1583 = vpop.permute.xlu0 %1582
    %1584 = vset.pattern.permute.xlu0 0
    %1585 = vperm.xlu0 %1584, %v1558
    %v1586 = vpop.permute.xlu0 %1585
    %1587 = vset.pattern.permute.xlu0 0
    %1588 = vperm.xlu0 %1587, %v1560
    %v1589 = vpop.permute.xlu0 %1588
    %1590 = vset.pattern.permute.xlu0 0
    %1591 = vperm.xlu0 %1590, %v1562
    %v1592 = vpop.permute.xlu0 %1591
    %1593 = vset.pattern.permute.xlu0 0
    %1594 = vperm.xlu0 %1593, %v1564
    %v1595 = vpop.permute.xlu0 %1594
    %1596 = vset.pattern.permute.xlu0 0
    %1597 = vperm.xlu0 %1596, %v1566
    %v1598 = vpop.permute.xlu0 %1597
    %v1599 = vperm.slane %v1577, %v241
    %v1600 = vperm.slane %v1580, %v734
    %v1601 = vsel %vm736, %v1600, %v1599
    %v1602 = vperm.slane %v1583, %v241
    %v1603 = vperm.slane %v1586, %v734
    %v1604 = vsel %vm736, %v1603, %v1602
    %v1605 = vperm.slane %v1589, %v241
    %v1606 = vperm.slane %v1592, %v734
    %v1607 = vsel %vm736, %v1606, %v1605
    %v1608 = vperm.slane %v1595, %v241
    %v1609 = vperm.slane %v1598, %v734
    %v1610 = vsel %vm736, %v1609, %v1608
    %v1611 = vsel %vm244, %v1604, %v1601
    %v1612 = vsel %vm244, %v1610, %v1607
    %v1615 = vsel %vm751, %v1611, 0.0
    %1616 = vadd.xlane.f32.xlu0 %v1615
    %v1617 = vpop.xlane.xlu0 %1616
    %v1618 = vsel %vm751, %v1612, 0.0
    %1619 = vadd.xlane.f32.xlu0 %v1618
    %v1620 = vpop.xlane.xlu0 %1619
    %v1623 = vperm.slane %v1617, 0
    %v1624 = vperm.slane %v1617, 1
    %v1625 = vperm.slane %v1620, 0
    %v1626 = vperm.slane %v1620, 1
    %v1631 = vrcp.pop %v1623
    %v1632 = vmul.f32 %v1623, %v1631
    %v1633 = vsub.f32 1.0, %v1632
    %v1634 = vmul.f32 %v1631, %v1633
    %v1635 = vadd.f32 %v1631, %v1634
    %vm1636 = vweird.f32 %v1623
    %vm1637 = vweird.f32 %v1631
    %vm1638 = vmor %vm1636, %vm1637
    %v1639 = vsel %vm1638, %v1631, %v1635
    %v1640 = vand.u32 2147483647, %v1623
    %vm1641 = vcmp.eq.f32.partialorder %v1640, 8.507059e+37
    %v1642 = vand.u32 %v1623, 2147483648
    %v1643 = vor.u32 1.1754944e-38, %v1642
    %v1644 = vsel %vm1641, %v1643, %v1639
    %v1645 = vmul.f32 %v1552, %v1644
    %v1646 = vmul.f32 %v1554, %v1644
    %v1647 = vrcp.pop %v1624
    %v1648 = vmul.f32 %v1624, %v1647
    %v1649 = vsub.f32 1.0, %v1648
    %v1650 = vmul.f32 %v1647, %v1649
    %v1651 = vadd.f32 %v1647, %v1650
    %vm1652 = vweird.f32 %v1624
    %vm1653 = vweird.f32 %v1647
    %vm1654 = vmor %vm1652, %vm1653
    %v1655 = vsel %vm1654, %v1647, %v1651
    %v1656 = vand.u32 2147483647, %v1624
    %vm1657 = vcmp.eq.f32.partialorder %v1656, 8.507059e+37
    %v1658 = vand.u32 %v1624, 2147483648
    %v1659 = vor.u32 1.1754944e-38, %v1658
    %v1660 = vsel %vm1657, %v1659, %v1655
    %v1661 = vmul.f32 %v1556, %v1660
    %v1662 = vmul.f32 %v1558, %v1660
    %v1663 = vrcp.pop %v1625
    %v1664 = vmul.f32 %v1625, %v1663
    %v1665 = vsub.f32 1.0, %v1664
    %v1666 = vmul.f32 %v1663, %v1665
    %v1667 = vadd.f32 %v1663, %v1666
    %vm1668 = vweird.f32 %v1625
    %vm1669 = vweird.f32 %v1663
    %vm1670 = vmor %vm1668, %vm1669
    %v1671 = vsel %vm1670, %v1663, %v1667
    %v1672 = vand.u32 2147483647, %v1625
    %vm1673 = vcmp.eq.f32.partialorder %v1672, 8.507059e+37
    %v1674 = vand.u32 %v1625, 2147483648
    %v1675 = vor.u32 1.1754944e-38, %v1674
    %v1676 = vsel %vm1673, %v1675, %v1671
    %v1677 = vmul.f32 %v1560, %v1676
    %v1678 = vmul.f32 %v1562, %v1676
    %v1679 = vrcp.pop %v1626
    %v1680 = vmul.f32 %v1626, %v1679
    %v1681 = vsub.f32 1.0, %v1680
    %v1682 = vmul.f32 %v1679, %v1681
    %v1683 = vadd.f32 %v1679, %v1682
    %vm1684 = vweird.f32 %v1626
    %vm1685 = vweird.f32 %v1679
    %vm1686 = vmor %vm1684, %vm1685
    %v1687 = vsel %vm1686, %v1679, %v1683
    %v1688 = vand.u32 2147483647, %v1626
    %vm1689 = vcmp.eq.f32.partialorder %v1688, 8.507059e+37
    %v1690 = vand.u32 %v1626, 2147483648
    %v1691 = vor.u32 1.1754944e-38, %v1690
    %v1692 = vsel %vm1689, %v1691, %v1687
    %v1693 = vmul.f32 %v1564, %v1692
    %v1694 = vmul.f32 %v1566, %v1692
    %1696 = vset.pattern.permute.xlu0 0
    %1697 = vperm.xlu0 %1696, %v1645
    %v1698 = vpop.permute.xlu0 %1697
    %1701 = vset.pattern.permute.xlu0 0
    %1702 = vperm.xlu0 %1701, %v1646
    %v1703 = vpop.permute.xlu0 %1702
    %1706 = vset.pattern.permute.xlu0 0
    %1707 = vperm.xlu0 %1706, %v1661
    %v1708 = vpop.permute.xlu0 %1707
    %1711 = vset.pattern.permute.xlu0 0
    %1712 = vperm.xlu0 %1711, %v1662
    %v1713 = vpop.permute.xlu0 %1712
    %1716 = vset.pattern.permute.xlu0 0
    %1717 = vperm.xlu0 %1716, %v1677
    %v1718 = vpop.permute.xlu0 %1717
    %1721 = vset.pattern.permute.xlu0 0
    %1722 = vperm.xlu0 %1721, %v1678
    %v1723 = vpop.permute.xlu0 %1722
    %1726 = vset.pattern.permute.xlu0 0
    %1727 = vperm.xlu0 %1726, %v1693
    %v1728 = vpop.permute.xlu0 %1727
    %1731 = vset.pattern.permute.xlu0 0
    %1732 = vperm.xlu0 %1731, %v1694
    %v1733 = vpop.permute.xlu0 %1732
    %v1735 = vmul.f32 %v1698, %v1423
    %v1736 = vmul.f32 %v1703, %v1424
    %v1737 = vmul.f32 %v1708, %v1425
    %v1738 = vmul.f32 %v1713, %v1426
    %v1739 = vmul.f32 %v1718, %v1427
    %v1740 = vmul.f32 %v1723, %v1428
    %v1741 = vmul.f32 %v1728, %v1429
    %v1742 = vmul.f32 %v1733, %v1430
    %v1743 = vsel %vm33, %v1735, 0.0
    %v1744 = vsel %vm64, %v1736, 0.0
    %v1745 = vadd.f32 %v1743, %v1744
    %v1746 = vrot.slane %v1745, 4
    %v1747 = vadd.f32 %v1745, %v1746
    %v1748 = vrot.slane %v1747, 2
    %v1749 = vadd.f32 %v1747, %v1748
    %v1750 = vrot.slane %v1749, 1
    %v1751 = vadd.f32 %v1749, %v1750
    %v1752 = vsel %vm33, %v1737, 0.0
    %v1753 = vsel %vm64, %v1738, 0.0
    %v1754 = vadd.f32 %v1752, %v1753
    %v1755 = vrot.slane %v1754, 4
    %v1756 = vadd.f32 %v1754, %v1755
    %v1757 = vrot.slane %v1756, 2
    %v1758 = vadd.f32 %v1756, %v1757
    %v1759 = vrot.slane %v1758, 1
    %v1760 = vadd.f32 %v1758, %v1759
    %v1761 = vsel %vm33, %v1739, 0.0
    %v1762 = vsel %vm64, %v1740, 0.0
    %v1763 = vadd.f32 %v1761, %v1762
    %v1764 = vrot.slane %v1763, 4
    %v1765 = vadd.f32 %v1763, %v1764
    %v1766 = vrot.slane %v1765, 2
    %v1767 = vadd.f32 %v1765, %v1766
    %v1768 = vrot.slane %v1767, 1
    %v1769 = vadd.f32 %v1767, %v1768
    %v1770 = vsel %vm33, %v1741, 0.0
    %v1771 = vsel %vm64, %v1742, 0.0
    %v1772 = vadd.f32 %v1770, %v1771
    %v1773 = vrot.slane %v1772, 4
    %v1774 = vadd.f32 %v1772, %v1773
    %v1775 = vrot.slane %v1774, 2
    %v1776 = vadd.f32 %v1774, %v1775
    %v1777 = vrot.slane %v1776, 1
    %v1778 = vadd.f32 %v1776, %v1777
    %v1779 = vld [vmem:[%s1004] sm:$0xff]
    %v1780 = vld [vmem:[%s1004 + $0x8] sm:$0xff]
    %v1781 = vld [vmem:[%s1004 + $0x10] sm:$0xff]
    %v1782 = vld [vmem:[%s1004 + $0x18] sm:$0xff]
    %v1783 = vld [vmem:[%s1009] sm:$0xff]
    %v1784 = vld [vmem:[%s1009 + $0x8] sm:$0xff]
    %v1785 = vld [vmem:[%s1009 + $0x10] sm:$0xff]
    %v1786 = vld [vmem:[%s1009 + $0x18] sm:$0xff]
    %v1789 = vsel %vm244, %v1778, %v1769
    %v1790 = vsel %vm33, %v1789, 0
    %1792 = vmatpush.msra.mxu0 0.0
    %1793 = vmatpush.msra.mxu0 0.0
    %1794 = vmatpush.msra.mxu0 0.0
    %1795 = vmatpush.msra.mxu0 0.0
    %1796 = vmatpush.msra.mxu0 0.0
    %1797 = vmatpush.msra.mxu0 0.0
    %1798 = vmatpush.msra.mxu0 0.0
    %1799 = vmatpush.msra.mxu0 0.0
    %1800 = vmatpush.msra.mxu0 0.0
    %1801 = vmatpush.msra.mxu0 0.0
    %1802 = vmatpush.msra.mxu0 0.0
    %1803 = vmatpush.msra.mxu0 0.0
    %1804 = vmatpush.msra.mxu0 %v1786
    %1805 = vmatpush.msra.mxu0 %v1785
    %1806 = vmatpush.msra.mxu0 %v1784
    %1807 = vmatpush.msra.mxu0 %v1783
    %1808 = vmatmul.f32.gmra.mxu0 %v1790
    %v1809 = vpop.f32.mrf.mxu0
    %v1810 = vadd.f32 0.0, %v1809
    %1811 = vdwg.mxu0
    %v1814 = vsel %vm244, %v1760, %v1751
    %v1815 = vsel %vm33, %v1814, 0
    %1817 = vmatpush.msra.mxu0 0.0
    %1818 = vmatpush.msra.mxu0 0.0
    %1819 = vmatpush.msra.mxu0 0.0
    %1820 = vmatpush.msra.mxu0 0.0
    %1821 = vmatpush.msra.mxu0 0.0
    %1822 = vmatpush.msra.mxu0 0.0
    %1823 = vmatpush.msra.mxu0 0.0
    %1824 = vmatpush.msra.mxu0 0.0
    %1825 = vmatpush.msra.mxu0 0.0
    %1826 = vmatpush.msra.mxu0 0.0
    %1827 = vmatpush.msra.mxu0 0.0
    %1828 = vmatpush.msra.mxu0 0.0
    %1829 = vmatpush.msra.mxu0 %v1782
    %1830 = vmatpush.msra.mxu0 %v1781
    %1831 = vmatpush.msra.mxu0 %v1780
    %1832 = vmatpush.msra.mxu0 %v1779
    %1833 = vmatmul.f32.gmra.mxu0 %v1815
    %v1834 = vpop.f32.mrf.mxu0
    %v1835 = vadd.f32 %v1810, %v1834
    %1836 = vdwg.mxu0
    %v1837 = vld [vmem:[%s5 + $0xb] sm:$0x1]
    %v1838 = vperm.slane %v1837, 0
    %v1839 = vadd.f32 %v1835, %v1838
    %v1840 = vld [vmem:[%s1067] sm:$0xff]
    %v1841 = vld [vmem:[%s1067 + $0x8] sm:$0xff]
    %v1842 = vld [vmem:[%s1067 + $0x10] sm:$0xff]
    %v1843 = vld [vmem:[%s1067 + $0x18] sm:$0xff]
    %v1844 = vld [vmem:[%s1072] sm:$0xff]
    %v1845 = vld [vmem:[%s1072 + $0x8] sm:$0xff]
    %v1846 = vld [vmem:[%s1072 + $0x10] sm:$0xff]
    %v1847 = vld [vmem:[%s1072 + $0x18] sm:$0xff]
    %1848 = vmatpush.msra.mxu0 0.0
    %1849 = vmatpush.msra.mxu0 0.0
    %1850 = vmatpush.msra.mxu0 0.0
    %1851 = vmatpush.msra.mxu0 0.0
    %1852 = vmatpush.msra.mxu0 0.0
    %1853 = vmatpush.msra.mxu0 0.0
    %1854 = vmatpush.msra.mxu0 0.0
    %1855 = vmatpush.msra.mxu0 0.0
    %1856 = vmatpush.msra.mxu0 0.0
    %1857 = vmatpush.msra.mxu0 0.0
    %1858 = vmatpush.msra.mxu0 0.0
    %1859 = vmatpush.msra.mxu0 0.0
    %1860 = vmatpush.msra.mxu0 %v1847
    %1861 = vmatpush.msra.mxu0 %v1846
    %1862 = vmatpush.msra.mxu0 %v1845
    %1863 = vmatpush.msra.mxu0 %v1844
    %1864 = vmatmul.f32.gmra.mxu0 %v1308
    %v1865 = vpop.f32.mrf.mxu0
    %v1866 = vadd.f32 0.0, %v1865
    %1867 = vdwg.mxu0
    %v1869 = vsel %vm33, %v1839, 0
    %1871 = vmatpush.msra.mxu0 0.0
    %1872 = vmatpush.msra.mxu0 0.0
    %1873 = vmatpush.msra.mxu0 0.0
    %1874 = vmatpush.msra.mxu0 0.0
    %1875 = vmatpush.msra.mxu0 0.0
    %1876 = vmatpush.msra.mxu0 0.0
    %1877 = vmatpush.msra.mxu0 0.0
    %1878 = vmatpush.msra.mxu0 0.0
    %1879 = vmatpush.msra.mxu0 0.0
    %1880 = vmatpush.msra.mxu0 0.0
    %1881 = vmatpush.msra.mxu0 0.0
    %1882 = vmatpush.msra.mxu0 0.0
    %1883 = vmatpush.msra.mxu0 %v1843
    %1884 = vmatpush.msra.mxu0 %v1842
    %1885 = vmatpush.msra.mxu0 %v1841
    %1886 = vmatpush.msra.mxu0 %v1840
    %1887 = vmatmul.f32.gmra.mxu0 %v1869
    %v1888 = vpop.f32.mrf.mxu0
    %v1889 = vadd.f32 %v1866, %v1888
    %1890 = vdwg.mxu0
    %v1891 = vld [vmem:[%s5 + $0xc] sm:$0x1]
    %v1892 = vperm.slane %v1891, 0
    %v1893 = vadd.f32 %v1889, %v1892
    %v1894 = vld [vmem:[%s4] sm:$0xff]
    %v1895 = vld [vmem:[%s4 + $0x8] sm:$0xff]
    %v1896 = vld [vmem:[%s4 + $0x10] sm:$0xff]
    %v1897 = vld [vmem:[%s4 + $0x18] sm:$0xff]
    %v1900 = vsel %vm244, %v1291, %v1284
    %v1901 = vsel %vm33, %v1900, 0
    %1903 = vmatpush.msra.mxu0 0.0
    %1904 = vmatpush.msra.mxu0 0.0
    %1905 = vmatpush.msra.mxu0 0.0
    %1906 = vmatpush.msra.mxu0 0.0
    %1907 = vmatpush.msra.mxu0 0.0
    %1908 = vmatpush.msra.mxu0 0.0
    %1909 = vmatpush.msra.mxu0 0.0
    %1910 = vmatpush.msra.mxu0 0.0
    %1911 = vmatpush.msra.mxu0 0.0
    %1912 = vmatpush.msra.mxu0 0.0
    %1913 = vmatpush.msra.mxu0 0.0
    %1914 = vmatpush.msra.mxu0 0.0
    %1915 = vmatpush.msra.mxu0 %v1897
    %1916 = vmatpush.msra.mxu0 %v1896
    %1917 = vmatpush.msra.mxu0 %v1895
    %1918 = vmatpush.msra.mxu0 %v1894
    %1919 = vmatmul.f32.gmra.mxu0 %v1901
    %v1920 = vpop.f32.mrf.mxu0
    %v1921 = vadd.f32 0.0, %v1920
    %1922 = vdwg.mxu0
    %v1923 = vld [vmem:[#allocation3] sm:$0xff]
    %v1924 = vld [vmem:[#allocation3 + $0x8] sm:$0xff]
    %v1926 = vrot.slane %v1921, 1
    %v1927 = vperm.slane %v1921, 0
    %v1928 = vperm.slane %v1926, 0
    %v1931 = vmul.f32 %v1923, %v1927
    %v1932 = vmul.f32 %v1924, %v1928
    %v1933 = vsel %vm33, %v1931, 0.0
    %1934 = vadd.xlane.f32.xlu0 %v1933
    %v1935 = vpop.xlane.xlu0 %1934
    %v1936 = vsel %vm33, %v1932, 0.0
    %1937 = vadd.xlane.f32.xlu0 %v1936
    %v1938 = vpop.xlane.xlu0 %1937
    %v1939 = vld [vmem:[%s313] sm:$0x3]
    %v1941 = vperm.slane %v1939, 0
    %v1942 = vlaneseq
    %v1943 = vshrl.u32 %v1942, 7
    %1945 = vset.pattern.permute.xlu0 %v1943
    %1946 = vperm.xlu0 %1945, %v1941
    %v1947 = vpop.permute.xlu0 %1946
    %v1948 = vperm.slane %v1939, 1
    %v1949 = vlaneseq
    %v1950 = vshrl.u32 %v1949, 7
    %1952 = vset.pattern.permute.xlu0 %v1950
    %1953 = vperm.xlu0 %1952, %v1948
    %v1954 = vpop.permute.xlu0 %1953
    %v1957 = vadd.f32 %v1935, %v1947
    %v1958 = vadd.f32 %v1938, %v1954
    %1961 = vset.pattern.permute.xlu0 0
    %1962 = vperm.xlu0 %1961, %v1957
    %v1963 = vpop.permute.xlu0 %1962
    %1964 = vset.pattern.permute.xlu0 0
    %1965 = vperm.xlu0 %1964, %v1958
    %v1966 = vpop.permute.xlu0 %1965
    %v1967 = vperm.slane %v1963, %v241
    %v1968 = vperm.slane %v1966, %v241
    %v1969 = vsel %vm244, %v1968, %v1967
    %v1971 = vsel %vm247, %v1969, -inf
    %1972 = vmax.xlane.f32.xlu0 %v1971
    %v1973 = vpop.xlane.xlu0 %1972
    %v1975 = vperm.slane %v1973, 0
    %v1976 = vperm.slane %v1973, 1
    %v1979 = vsub.f32 %v1957, %v1975
    %v1980 = vsub.f32 %v1958, %v1976
    %v1981 = vmul.f32 %v1979, 1.442695
    %v1982 = vpow.pop %v1981
    %v1983 = vmul.f32 %v1980, 1.442695
    %v1984 = vpow.pop %v1983
    %1987 = vset.pattern.permute.xlu0 0
    %1988 = vperm.xlu0 %1987, %v1982
    %v1989 = vpop.permute.xlu0 %1988
    %1990 = vset.pattern.permute.xlu0 0
    %1991 = vperm.xlu0 %1990, %v1984
    %v1992 = vpop.permute.xlu0 %1991
    %v1993 = vperm.slane %v1989, %v241
    %v1994 = vperm.slane %v1992, %v241
    %v1995 = vsel %vm244, %v1994, %v1993
    %v1997 = vsel %vm247, %v1995, 0.0
    %1998 = vadd.xlane.f32.xlu0 %v1997
    %v1999 = vpop.xlane.xlu0 %1998
    %v2001 = vperm.slane %v1999, 0
    %v2002 = vperm.slane %v1999, 1
    %v2005 = vrcp.pop %v2001
    %v2006 = vmul.f32 %v2001, %v2005
    %v2007 = vsub.f32 1.0, %v2006
    %v2008 = vmul.f32 %v2005, %v2007
    %v2009 = vadd.f32 %v2005, %v2008
    %vm2010 = vweird.f32 %v2001
    %vm2011 = vweird.f32 %v2005
    %vm2012 = vmor %vm2010, %vm2011
    %v2013 = vsel %vm2012, %v2005, %v2009
    %v2014 = vand.u32 2147483647, %v2001
    %vm2015 = vcmp.eq.f32.partialorder %v2014, 8.507059e+37
    %v2016 = vand.u32 %v2001, 2147483648
    %v2017 = vor.u32 1.1754944e-38, %v2016
    %v2018 = vsel %vm2015, %v2017, %v2013
    %v2019 = vmul.f32 %v1982, %v2018
    %v2020 = vrcp.pop %v2002
    %v2021 = vmul.f32 %v2002, %v2020
    %v2022 = vsub.f32 1.0, %v2021
    %v2023 = vmul.f32 %v2020, %v2022
    %v2024 = vadd.f32 %v2020, %v2023
    %vm2025 = vweird.f32 %v2002
    %vm2026 = vweird.f32 %v2020
    %vm2027 = vmor %vm2025, %vm2026
    %v2028 = vsel %vm2027, %v2020, %v2024
    %v2029 = vand.u32 2147483647, %v2002
    %vm2030 = vcmp.eq.f32.partialorder %v2029, 8.507059e+37
    %v2031 = vand.u32 %v2002, 2147483648
    %v2032 = vor.u32 1.1754944e-38, %v2031
    %v2033 = vsel %vm2030, %v2032, %v2028
    %v2034 = vmul.f32 %v1984, %v2033
    %v2035 = vld [vmem:[%s0] sm:$0xff]
    %v2036 = vld [vmem:[%s0 + $0x8] sm:$0xff]
    %2038 = vset.pattern.permute.xlu0 0
    %2039 = vperm.xlu0 %2038, %v2019
    %v2040 = vpop.permute.xlu0 %2039
    %2043 = vset.pattern.permute.xlu0 0
    %2044 = vperm.xlu0 %2043, %v2034
    %v2045 = vpop.permute.xlu0 %2044
    %v2047 = vmul.f32 %v2040, %v2035
    %v2048 = vmul.f32 %v2045, %v2036
    %v2049 = vsel %vm33, %v2047, 0.0
    %v2050 = vrot.slane %v2049, 4
    %v2051 = vadd.f32 %v2049, %v2050
    %v2052 = vrot.slane %v2051, 2
    %v2053 = vadd.f32 %v2051, %v2052
    %v2054 = vrot.slane %v2053, 1
    %v2055 = vadd.f32 %v2053, %v2054
    %v2056 = vsel %vm33, %v2048, 0.0
    %v2057 = vrot.slane %v2056, 4
    %v2058 = vadd.f32 %v2056, %v2057
    %v2059 = vrot.slane %v2058, 2
    %v2060 = vadd.f32 %v2058, %v2059
    %v2061 = vrot.slane %v2060, 1
    %v2062 = vadd.f32 %v2060, %v2061
    %v2063 = vld [vmem:[%s515] sm:$0xff]
    %v2064 = vld [vmem:[%s515 + $0x8] sm:$0xff]
    %v2065 = vld [vmem:[%s515 + $0x10] sm:$0xff]
    %v2066 = vld [vmem:[%s515 + $0x18] sm:$0xff]
    %v2067 = vld [vmem:[%s515 + $0x20] sm:$0xff]
    %v2068 = vld [vmem:[%s515 + $0x28] sm:$0xff]
    %v2069 = vld [vmem:[%s515 + $0x30] sm:$0xff]
    %v2070 = vld [vmem:[%s515 + $0x38] sm:$0xff]
    %v2071 = vld [vmem:[%s5 + $0x4] sm:$0x3]
    %v2073 = vrot.slane %v2071, 1
    %v2074 = vperm.slane %v2071, 0
    %v2075 = vperm.slane %v2073, 0
    %v2079 = vsel %vm33, %v1893, 0
    %2081 = vmatpush.msra.mxu0 0.0
    %2082 = vmatpush.msra.mxu0 0.0
    %2083 = vmatpush.msra.mxu0 0.0
    %2084 = vmatpush.msra.mxu0 0.0
    %2085 = vmatpush.msra.mxu0 0.0
    %2086 = vmatpush.msra.mxu0 0.0
    %2087 = vmatpush.msra.mxu0 0.0
    %2088 = vmatpush.msra.mxu0 0.0
    %2089 = vmatpush.msra.mxu0 0.0
    %2090 = vmatpush.msra.mxu0 0.0
    %2091 = vmatpush.msra.mxu0 0.0
    %2092 = vmatpush.msra.mxu0 0.0
    %2093 = vmatpush.msra.mxu0 %v2066
    %2094 = vmatpush.msra.mxu0 %v2065
    %2095 = vmatpush.msra.mxu0 %v2064
    %2096 = vmatpush.msra.mxu0 %v2063
    %2097 = vmatmul.f32.gmra.mxu0 %v2079
    %v2098 = vpop.f32.mrf.mxu0
    %v2099 = vadd.f32 %v2074, %v2098
    %2100 = vdwg.mxu0
    %2101 = vmatpush.msra.mxu0 0.0
    %2102 = vmatpush.msra.mxu0 0.0
    %2103 = vmatpush.msra.mxu0 0.0
    %2104 = vmatpush.msra.mxu0 0.0
    %2105 = vmatpush.msra.mxu0 0.0
    %2106 = vmatpush.msra.mxu0 0.0
    %2107 = vmatpush.msra.mxu0 0.0
    %2108 = vmatpush.msra.mxu0 0.0
    %2109 = vmatpush.msra.mxu0 0.0
    %2110 = vmatpush.msra.mxu0 0.0
    %2111 = vmatpush.msra.mxu0 0.0
    %2112 = vmatpush.msra.mxu0 0.0
    %2113 = vmatpush.msra.mxu0 %v2070
    %2114 = vmatpush.msra.mxu0 %v2069
    %2115 = vmatpush.msra.mxu0 %v2068
    %2116 = vmatpush.msra.mxu0 %v2067
    %2117 = vmatmul.f32.gmra.mxu0 %v2079
    %v2118 = vpop.f32.mrf.mxu0
    %v2119 = vadd.f32 %v2075, %v2118
    %2120 = vdwg.mxu0
    %v2121 = vld [vmem:[%s5 + $0x9] sm:$0x3]
    %v2123 = vrot.slane %v2121, 1
    %v2124 = vperm.slane %v2121, 0
    %v2125 = vperm.slane %v2123, 0
    %v2128 = vmul.f32 %v2055, %v2124
    %v2129 = vmul.f32 %v2062, %v2124
    %v2130 = vmul.f32 %v2055, %v2125
    %v2131 = vmul.f32 %v2062, %v2125
    %v2132 = vld [vmem:[%s582] sm:$0xff]
    %v2133 = vld [vmem:[%s582 + $0x8] sm:$0xff]
    %v2134 = vld [vmem:[%s582 + $0x10] sm:$0xff]
    %v2135 = vld [vmem:[%s582 + $0x18] sm:$0xff]
    %v2136 = vld [vmem:[%s582 + $0x20] sm:$0xff]
    %v2137 = vld [vmem:[%s582 + $0x28] sm:$0xff]
    %v2138 = vld [vmem:[%s582 + $0x30] sm:$0xff]
    %v2139 = vld [vmem:[%s582 + $0x38] sm:$0xff]
    %v2142 = vrot.slane %v2129, 7
    %v2143 = vsel %vm244, %v2142, %v2128
    %v2144 = vsel %vm33, %v2143, 0
    %2146 = vmatpush.msra.mxu0 0.0
    %2147 = vmatpush.msra.mxu0 0.0
    %2148 = vmatpush.msra.mxu0 0.0
    %2149 = vmatpush.msra.mxu0 0.0
    %2150 = vmatpush.msra.mxu0 0.0
    %2151 = vmatpush.msra.mxu0 0.0
    %2152 = vmatpush.msra.mxu0 0.0
    %2153 = vmatpush.msra.mxu0 0.0
    %2154 = vmatpush.msra.mxu0 0.0
    %2155 = vmatpush.msra.mxu0 0.0
    %2156 = vmatpush.msra.mxu0 0.0
    %2157 = vmatpush.msra.mxu0 0.0
    %2158 = vmatpush.msra.mxu0 %v2135
    %2159 = vmatpush.msra.mxu0 %v2134
    %2160 = vmatpush.msra.mxu0 %v2133
    %2161 = vmatpush.msra.mxu0 %v2132
    %2162 = vmatmul.f32.gmra.mxu0 %v2144
    %v2163 = vpop.f32.mrf.mxu0
    %v2164 = vadd.f32 0.0, %v2163
    %2165 = vdwg.mxu0
    %v2168 = vrot.slane %v2131, 7
    %v2169 = vsel %vm244, %v2168, %v2130
    %v2170 = vsel %vm33, %v2169, 0
    %2172 = vmatpush.msra.mxu0 0.0
    %2173 = vmatpush.msra.mxu0 0.0
    %2174 = vmatpush.msra.mxu0 0.0
    %2175 = vmatpush.msra.mxu0 0.0
    %2176 = vmatpush.msra.mxu0 0.0
    %2177 = vmatpush.msra.mxu0 0.0
    %2178 = vmatpush.msra.mxu0 0.0
    %2179 = vmatpush.msra.mxu0 0.0
    %2180 = vmatpush.msra.mxu0 0.0
    %2181 = vmatpush.msra.mxu0 0.0
    %2182 = vmatpush.msra.mxu0 0.0
    %2183 = vmatpush.msra.mxu0 0.0
    %2184 = vmatpush.msra.mxu0 %v2139
    %2185 = vmatpush.msra.mxu0 %v2138
    %2186 = vmatpush.msra.mxu0 %v2137
    %2187 = vmatpush.msra.mxu0 %v2136
    %2188 = vmatmul.f32.gmra.mxu0 %v2170
    %v2189 = vpop.f32.mrf.mxu0
    %v2190 = vadd.f32 0.0, %v2189
    %2191 = vdwg.mxu0
    %v2192 = vmul.f32 %v2099, %v2164
    %v2193 = vmul.f32 %v2119, %v2190
    %v2194 = vld [vmem:[%s2] sm:$0xff]
    %v2195 = vld [vmem:[%s2 + $0x8] sm:$0x3]
    %v2196 = vld [vmem:[%s2 + $0x10] sm:$0xff]
    %v2197 = vld [vmem:[%s2 + $0x18] sm:$0x3]
    %v2198 = vld [vmem:[%s2 + $0x20] sm:$0xff]
    %v2199 = vld [vmem:[%s2 + $0x28] sm:$0x3]
    %v2200 = vld [vmem:[%s2 + $0x30] sm:$0xff]
    %v2201 = vld [vmem:[%s2 + $0x38] sm:$0x3]
    %v2204 = vrot.slane %v2192, 1
    %v2205 = vrot.slane %v2193, 1
    %v2206 = vperm.slane %v2192, 0
    %v2207 = vperm.slane %v2204, 0
    %v2208 = vperm.slane %v2193, 0
    %v2209 = vperm.slane %v2205, 0
    %v2214 = vmul.f32 %v2194, %v2206
    %v2215 = vmul.f32 %v2195, %v2206
    %v2216 = vmul.f32 %v2196, %v2207
    %v2217 = vmul.f32 %v2197, %v2207
    %v2218 = vmul.f32 %v2198, %v2208
    %v2219 = vmul.f32 %v2199, %v2208
    %v2220 = vmul.f32 %v2200, %v2209
    %v2221 = vmul.f32 %v2201, %v2209
    %v2222 = vld [vmem:[#allocation2] sm:$0xff]
    %v2223 = vld [vmem:[#allocation2 + $0x8] sm:$0x3]
    %v2224 = vld [vmem:[#allocation2 + $0x10] sm:$0xff]
    %v2225 = vld [vmem:[#allocation2 + $0x18] sm:$0x3]
    %v2226 = vld [vmem:[#allocation2 + $0x20] sm:$0xff]
    %v2227 = vld [vmem:[#allocation2 + $0x28] sm:$0x3]
    %v2228 = vld [vmem:[#allocation2 + $0x30] sm:$0xff]
    %v2229 = vld [vmem:[#allocation2 + $0x38] sm:$0x3]
    %v2230 = vperm.slane %v2128, 0
    %v2231 = vperm.slane %v2129, 0
    %v2232 = vperm.slane %v2130, 0
    %v2233 = vperm.slane %v2131, 0
    %v2234 = vmul.f32 %v2222, %v2230
    %v2235 = vmul.f32 %v2223, %v2230
    %v2236 = vmul.f32 %v2224, %v2231
    %v2237 = vmul.f32 %v2225, %v2231
    %v2238 = vmul.f32 %v2226, %v2232
    %v2239 = vmul.f32 %v2227, %v2232
    %v2240 = vmul.f32 %v2228, %v2233
    %v2241 = vmul.f32 %v2229, %v2233
    %v2242 = vadd.f32 %v2214, %v2234
    %v2243 = vadd.f32 %v2215, %v2235
    %v2244 = vadd.f32 %v2216, %v2236
    %v2245 = vadd.f32 %v2217, %v2237
    %v2246 = vadd.f32 %v2218, %v2238
    %v2247 = vadd.f32 %v2219, %v2239
    %v2248 = vadd.f32 %v2220, %v2240
    %v2249 = vadd.f32 %v2221, %v2241
    %v2250 = vsel %vm33, %v2242, 0.0
    %2251 = vadd.xlane.f32.xlu0 %v2250
    %v2252 = vpop.xlane.xlu0 %2251
    %v2253 = vsel %vm64, %v2243, 0.0
    %2254 = vadd.xlane.f32.xlu0 %v2253
    %v2255 = vpop.xlane.xlu0 %2254
    %v2256 = vsel %vm33, %v2244, 0.0
    %2257 = vadd.xlane.f32.xlu0 %v2256
    %v2258 = vpop.xlane.xlu0 %2257
    %v2259 = vsel %vm64, %v2245, 0.0
    %2260 = vadd.xlane.f32.xlu0 %v2259
    %v2261 = vpop.xlane.xlu0 %2260
    %v2262 = vsel %vm33, %v2246, 0.0
    %2263 = vadd.xlane.f32.xlu0 %v2262
    %v2264 = vpop.xlane.xlu0 %2263
    %v2265 = vsel %vm64, %v2247, 0.0
    %2266 = vadd.xlane.f32.xlu0 %v2265
    %v2267 = vpop.xlane.xlu0 %2266
    %v2268 = vsel %vm33, %v2248, 0.0
    %2269 = vadd.xlane.f32.xlu0 %v2268
    %v2270 = vpop.xlane.xlu0 %2269
    %v2271 = vsel %vm64, %v2249, 0.0
    %2272 = vadd.xlane.f32.xlu0 %v2271
    %v2273 = vpop.xlane.xlu0 %2272
    %v2282 = vperm.slane %v2252, %v241
    %v2283 = vperm.slane %v2255, %v734
    %v2284 = vsel %vm736, %v2283, %v2282
    %v2285 = vperm.slane %v2258, %v241
    %v2286 = vperm.slane %v2261, %v734
    %v2287 = vsel %vm736, %v2286, %v2285
    %v2288 = vperm.slane %v2264, %v241
    %v2289 = vperm.slane %v2267, %v734
    %v2290 = vsel %vm736, %v2289, %v2288
    %v2291 = vperm.slane %v2270, %v241
    %v2292 = vperm.slane %v2273, %v734
    %v2293 = vsel %vm736, %v2292, %v2291
    %v2294 = vsel %vm244, %v2287, %v2284
    %v2295 = vsel %vm244, %v2293, %v2290
    %v2298 = vsel %vm751, %v2294, -inf
    %2299 = vmax.xlane.f32.xlu0 %v2298
    %v2300 = vpop.xlane.xlu0 %2299
    %v2301 = vsel %vm751, %v2295, -inf
    %2302 = vmax.xlane.f32.xlu0 %v2301
    %v2303 = vpop.xlane.xlu0 %2302
    %v2306 = vperm.slane %v2300, 0
    %v2307 = vperm.slane %v2300, 1
    %v2308 = vperm.slane %v2303, 0
    %v2309 = vperm.slane %v2303, 1
    %v2314 = vsub.f32 %v2252, %v2306
    %v2315 = vsub.f32 %v2255, %v2306
    %v2316 = vsub.f32 %v2258, %v2307
    %v2317 = vsub.f32 %v2261, %v2307
    %v2318 = vsub.f32 %v2264, %v2308
    %v2319 = vsub.f32 %v2267, %v2308
    %v2320 = vsub.f32 %v2270, %v2309
    %v2321 = vsub.f32 %v2273, %v2309
    %v2322 = vmul.f32 %v2314, 1.442695
    %v2323 = vpow.pop %v2322
    %v2324 = vmul.f32 %v2315, 1.442695
    %v2325 = vpow.pop %v2324
    %v2326 = vmul.f32 %v2316, 1.442695
    %v2327 = vpow.pop %v2326
    %v2328 = vmul.f32 %v2317, 1.442695
    %v2329 = vpow.pop %v2328
    %v2330 = vmul.f32 %v2318, 1.442695
    %v2331 = vpow.pop %v2330
    %v2332 = vmul.f32 %v2319, 1.442695
    %v2333 = vpow.pop %v2332
    %v2334 = vmul.f32 %v2320, 1.442695
    %v2335 = vpow.pop %v2334
    %v2336 = vmul.f32 %v2321, 1.442695
    %v2337 = vpow.pop %v2336
    %2346 = vset.pattern.permute.xlu0 0
    %2347 = vperm.xlu0 %2346, %v2323
    %v2348 = vpop.permute.xlu0 %2347
    %2349 = vset.pattern.permute.xlu0 0
    %2350 = vperm.xlu0 %2349, %v2325
    %v2351 = vpop.permute.xlu0 %2350
    %2352 = vset.pattern.permute.xlu0 0
    %2353 = vperm.xlu0 %2352, %v2327
    %v2354 = vpop.permute.xlu0 %2353
    %2355 = vset.pattern.permute.xlu0 0
    %2356 = vperm.xlu0 %2355, %v2329
    %v2357 = vpop.permute.xlu0 %2356
    %2358 = vset.pattern.permute.xlu0 0
    %2359 = vperm.xlu0 %2358, %v2331
    %v2360 = vpop.permute.xlu0 %2359
    %2361 = vset.pattern.permute.xlu0 0
    %2362 = vperm.xlu0 %2361, %v2333
    %v2363 = vpop.permute.xlu0 %2362
    %2364 = vset.pattern.permute.xlu0 0
    %2365 = vperm.xlu0 %2364, %v2335
    %v2366 = vpop.permute.xlu0 %2365
    %2367 = vset.pattern.permute.xlu0 0
    %2368 = vperm.xlu0 %2367, %v2337
    %v2369 = vpop.permute.xlu0 %2368
    %v2370 = vperm.slane %v2348, %v241
    %v2371 = vperm.slane %v2351, %v734
    %v2372 = vsel %vm736, %v2371, %v2370
    %v2373 = vperm.slane %v2354, %v241
    %v2374 = vperm.slane %v2357, %v734
    %v2375 = vsel %vm736, %v2374, %v2373
    %v2376 = vperm.slane %v2360, %v241
    %v2377 = vperm.slane %v2363, %v734
    %v2378 = vsel %vm736, %v2377, %v2376
    %v2379 = vperm.slane %v2366, %v241
    %v2380 = vperm.slane %v2369, %v734
    %v2381 = vsel %vm736, %v2380, %v2379
    %v2382 = vsel %vm244, %v2375, %v2372
    %v2383 = vsel %vm244, %v2381, %v2378
    %v2386 = vsel %vm751, %v2382, 0.0
    %2387 = vadd.xlane.f32.xlu0 %v2386
    %v2388 = vpop.xlane.xlu0 %2387
    %v2389 = vsel %vm751, %v2383, 0.0
    %2390 = vadd.xlane.f32.xlu0 %v2389
    %v2391 = vpop.xlane.xlu0 %2390
    %v2394 = vperm.slane %v2388, 0
    %v2395 = vperm.slane %v2388, 1
    %v2396 = vperm.slane %v2391, 0
    %v2397 = vperm.slane %v2391, 1
    %v2402 = vrcp.pop %v2394
    %v2403 = vmul.f32 %v2394, %v2402
    %v2404 = vsub.f32 1.0, %v2403
    %v2405 = vmul.f32 %v2402, %v2404
    %v2406 = vadd.f32 %v2402, %v2405
    %vm2407 = vweird.f32 %v2394
    %vm2408 = vweird.f32 %v2402
    %vm2409 = vmor %vm2407, %vm2408
    %v2410 = vsel %vm2409, %v2402, %v2406
    %v2411 = vand.u32 2147483647, %v2394
    %vm2412 = vcmp.eq.f32.partialorder %v2411, 8.507059e+37
    %v2413 = vand.u32 %v2394, 2147483648
    %v2414 = vor.u32 1.1754944e-38, %v2413
    %v2415 = vsel %vm2412, %v2414, %v2410
    %v2416 = vmul.f32 %v2323, %v2415
    %v2417 = vmul.f32 %v2325, %v2415
    %v2418 = vrcp.pop %v2395
    %v2419 = vmul.f32 %v2395, %v2418
    %v2420 = vsub.f32 1.0, %v2419
    %v2421 = vmul.f32 %v2418, %v2420
    %v2422 = vadd.f32 %v2418, %v2421
    %vm2423 = vweird.f32 %v2395
    %vm2424 = vweird.f32 %v2418
    %vm2425 = vmor %vm2423, %vm2424
    %v2426 = vsel %vm2425, %v2418, %v2422
    %v2427 = vand.u32 2147483647, %v2395
    %vm2428 = vcmp.eq.f32.partialorder %v2427, 8.507059e+37
    %v2429 = vand.u32 %v2395, 2147483648
    %v2430 = vor.u32 1.1754944e-38, %v2429
    %v2431 = vsel %vm2428, %v2430, %v2426
    %v2432 = vmul.f32 %v2327, %v2431
    %v2433 = vmul.f32 %v2329, %v2431
    %v2434 = vrcp.pop %v2396
    %v2435 = vmul.f32 %v2396, %v2434
    %v2436 = vsub.f32 1.0, %v2435
    %v2437 = vmul.f32 %v2434, %v2436
    %v2438 = vadd.f32 %v2434, %v2437
    %vm2439 = vweird.f32 %v2396
    %vm2440 = vweird.f32 %v2434
    %vm2441 = vmor %vm2439, %vm2440
    %v2442 = vsel %vm2441, %v2434, %v2438
    %v2443 = vand.u32 2147483647, %v2396
    %vm2444 = vcmp.eq.f32.partialorder %v2443, 8.507059e+37
    %v2445 = vand.u32 %v2396, 2147483648
    %v2446 = vor.u32 1.1754944e-38, %v2445
    %v2447 = vsel %vm2444, %v2446, %v2442
    %v2448 = vmul.f32 %v2331, %v2447
    %v2449 = vmul.f32 %v2333, %v2447
    %v2450 = vrcp.pop %v2397
    %v2451 = vmul.f32 %v2397, %v2450
    %v2452 = vsub.f32 1.0, %v2451
    %v2453 = vmul.f32 %v2450, %v2452
    %v2454 = vadd.f32 %v2450, %v2453
    %vm2455 = vweird.f32 %v2397
    %vm2456 = vweird.f32 %v2450
    %vm2457 = vmor %vm2455, %vm2456
    %v2458 = vsel %vm2457, %v2450, %v2454
    %v2459 = vand.u32 2147483647, %v2397
    %vm2460 = vcmp.eq.f32.partialorder %v2459, 8.507059e+37
    %v2461 = vand.u32 %v2397, 2147483648
    %v2462 = vor.u32 1.1754944e-38, %v2461
    %v2463 = vsel %vm2460, %v2462, %v2458
    %v2464 = vmul.f32 %v2335, %v2463
    %v2465 = vmul.f32 %v2337, %v2463
    %2467 = vset.pattern.permute.xlu0 0
    %2468 = vperm.xlu0 %2467, %v2416
    %v2469 = vpop.permute.xlu0 %2468
    %2472 = vset.pattern.permute.xlu0 0
    %2473 = vperm.xlu0 %2472, %v2417
    %v2474 = vpop.permute.xlu0 %2473
    %2477 = vset.pattern.permute.xlu0 0
    %2478 = vperm.xlu0 %2477, %v2432
    %v2479 = vpop.permute.xlu0 %2478
    %2482 = vset.pattern.permute.xlu0 0
    %2483 = vperm.xlu0 %2482, %v2433
    %v2484 = vpop.permute.xlu0 %2483
    %2487 = vset.pattern.permute.xlu0 0
    %2488 = vperm.xlu0 %2487, %v2448
    %v2489 = vpop.permute.xlu0 %2488
    %2492 = vset.pattern.permute.xlu0 0
    %2493 = vperm.xlu0 %2492, %v2449
    %v2494 = vpop.permute.xlu0 %2493
    %2497 = vset.pattern.permute.xlu0 0
    %2498 = vperm.xlu0 %2497, %v2464
    %v2499 = vpop.permute.xlu0 %2498
    %2502 = vset.pattern.permute.xlu0 0
    %2503 = vperm.xlu0 %2502, %v2465
    %v2504 = vpop.permute.xlu0 %2503
    %v2506 = vmul.f32 %v2469, %v2194
    %v2507 = vmul.f32 %v2474, %v2195
    %v2508 = vmul.f32 %v2479, %v2196
    %v2509 = vmul.f32 %v2484, %v2197
    %v2510 = vmul.f32 %v2489, %v2198
    %v2511 = vmul.f32 %v2494, %v2199
    %v2512 = vmul.f32 %v2499, %v2200
    %v2513 = vmul.f32 %v2504, %v2201
    %v2514 = vsel %vm33, %v2506, 0.0
    %v2515 = vsel %vm64, %v2507, 0.0
    %v2516 = vadd.f32 %v2514, %v2515
    %v2517 = vrot.slane %v2516, 4
    %v2518 = vadd.f32 %v2516, %v2517
    %v2519 = vrot.slane %v2518, 2
    %v2520 = vadd.f32 %v2518, %v2519
    %v2521 = vrot.slane %v2520, 1
    %v2522 = vadd.f32 %v2520, %v2521
    %v2523 = vsel %vm33, %v2508, 0.0
    %v2524 = vsel %vm64, %v2509, 0.0
    %v2525 = vadd.f32 %v2523, %v2524
    %v2526 = vrot.slane %v2525, 4
    %v2527 = vadd.f32 %v2525, %v2526
    %v2528 = vrot.slane %v2527, 2
    %v2529 = vadd.f32 %v2527, %v2528
    %v2530 = vrot.slane %v2529, 1
    %v2531 = vadd.f32 %v2529, %v2530
    %v2532 = vsel %vm33, %v2510, 0.0
    %v2533 = vsel %vm64, %v2511, 0.0
    %v2534 = vadd.f32 %v2532, %v2533
    %v2535 = vrot.slane %v2534, 4
    %v2536 = vadd.f32 %v2534, %v2535
    %v2537 = vrot.slane %v2536, 2
    %v2538 = vadd.f32 %v2536, %v2537
    %v2539 = vrot.slane %v2538, 1
    %v2540 = vadd.f32 %v2538, %v2539
    %v2541 = vsel %vm33, %v2512, 0.0
    %v2542 = vsel %vm64, %v2513, 0.0
    %v2543 = vadd.f32 %v2541, %v2542
    %v2544 = vrot.slane %v2543, 4
    %v2545 = vadd.f32 %v2543, %v2544
    %v2546 = vrot.slane %v2545, 2
    %v2547 = vadd.f32 %v2545, %v2546
    %v2548 = vrot.slane %v2547, 1
    %v2549 = vadd.f32 %v2547, %v2548
    %v2550 = vld [vmem:[%s1004] sm:$0xff]
    %v2551 = vld [vmem:[%s1004 + $0x8] sm:$0xff]
    %v2552 = vld [vmem:[%s1004 + $0x10] sm:$0xff]
    %v2553 = vld [vmem:[%s1004 + $0x18] sm:$0xff]
    %v2554 = vld [vmem:[%s1009] sm:$0xff]
    %v2555 = vld [vmem:[%s1009 + $0x8] sm:$0xff]
    %v2556 = vld [vmem:[%s1009 + $0x10] sm:$0xff]
    %v2557 = vld [vmem:[%s1009 + $0x18] sm:$0xff]
    %v2560 = vsel %vm244, %v2549, %v2540
    %v2561 = vsel %vm33, %v2560, 0
    %2563 = vmatpush.msra.mxu0 0.0
    %2564 = vmatpush.msra.mxu0 0.0
    %2565 = vmatpush.msra.mxu0 0.0
    %2566 = vmatpush.msra.mxu0 0.0
    %2567 = vmatpush.msra.mxu0 0.0
    %2568 = vmatpush.msra.mxu0 0.0
    %2569 = vmatpush.msra.mxu0 0.0
    %2570 = vmatpush.msra.mxu0 0.0
    %2571 = vmatpush.msra.mxu0 0.0
    %2572 = vmatpush.msra.mxu0 0.0
    %2573 = vmatpush.msra.mxu0 0.0
    %2574 = vmatpush.msra.mxu0 0.0
    %2575 = vmatpush.msra.mxu0 %v2557
    %2576 = vmatpush.msra.mxu0 %v2556
    %2577 = vmatpush.msra.mxu0 %v2555
    %2578 = vmatpush.msra.mxu0 %v2554
    %2579 = vmatmul.f32.gmra.mxu0 %v2561
    %v2580 = vpop.f32.mrf.mxu0
    %v2581 = vadd.f32 0.0, %v2580
    %2582 = vdwg.mxu0
    %v2585 = vsel %vm244, %v2531, %v2522
    %v2586 = vsel %vm33, %v2585, 0
    %2588 = vmatpush.msra.mxu0 0.0
    %2589 = vmatpush.msra.mxu0 0.0
    %2590 = vmatpush.msra.mxu0 0.0
    %2591 = vmatpush.msra.mxu0 0.0
    %2592 = vmatpush.msra.mxu0 0.0
    %2593 = vmatpush.msra.mxu0 0.0
    %2594 = vmatpush.msra.mxu0 0.0
    %2595 = vmatpush.msra.mxu0 0.0
    %2596 = vmatpush.msra.mxu0 0.0
    %2597 = vmatpush.msra.mxu0 0.0
    %2598 = vmatpush.msra.mxu0 0.0
    %2599 = vmatpush.msra.mxu0 0.0
    %2600 = vmatpush.msra.mxu0 %v2553
    %2601 = vmatpush.msra.mxu0 %v2552
    %2602 = vmatpush.msra.mxu0 %v2551
    %2603 = vmatpush.msra.mxu0 %v2550
    %2604 = vmatmul.f32.gmra.mxu0 %v2586
    %v2605 = vpop.f32.mrf.mxu0
    %v2606 = vadd.f32 %v2581, %v2605
    %2607 = vdwg.mxu0
    %v2608 = vld [vmem:[%s5 + $0xb] sm:$0x1]
    %v2609 = vperm.slane %v2608, 0
    %v2610 = vadd.f32 %v2606, %v2609
    %v2611 = vld [vmem:[%s1067] sm:$0xff]
    %v2612 = vld [vmem:[%s1067 + $0x8] sm:$0xff]
    %v2613 = vld [vmem:[%s1067 + $0x10] sm:$0xff]
    %v2614 = vld [vmem:[%s1067 + $0x18] sm:$0xff]
    %v2615 = vld [vmem:[%s1072] sm:$0xff]
    %v2616 = vld [vmem:[%s1072 + $0x8] sm:$0xff]
    %v2617 = vld [vmem:[%s1072 + $0x10] sm:$0xff]
    %v2618 = vld [vmem:[%s1072 + $0x18] sm:$0xff]
    %2619 = vmatpush.msra.mxu0 0.0
    %2620 = vmatpush.msra.mxu0 0.0
    %2621 = vmatpush.msra.mxu0 0.0
    %2622 = vmatpush.msra.mxu0 0.0
    %2623 = vmatpush.msra.mxu0 0.0
    %2624 = vmatpush.msra.mxu0 0.0
    %2625 = vmatpush.msra.mxu0 0.0
    %2626 = vmatpush.msra.mxu0 0.0
    %2627 = vmatpush.msra.mxu0 0.0
    %2628 = vmatpush.msra.mxu0 0.0
    %2629 = vmatpush.msra.mxu0 0.0
    %2630 = vmatpush.msra.mxu0 0.0
    %2631 = vmatpush.msra.mxu0 %v2618
    %2632 = vmatpush.msra.mxu0 %v2617
    %2633 = vmatpush.msra.mxu0 %v2616
    %2634 = vmatpush.msra.mxu0 %v2615
    %2635 = vmatmul.f32.gmra.mxu0 %v2079
    %v2636 = vpop.f32.mrf.mxu0
    %v2637 = vadd.f32 0.0, %v2636
    %2638 = vdwg.mxu0
    %v2640 = vsel %vm33, %v2610, 0
    %2642 = vmatpush.msra.mxu0 0.0
    %2643 = vmatpush.msra.mxu0 0.0
    %2644 = vmatpush.msra.mxu0 0.0
    %2645 = vmatpush.msra.mxu0 0.0
    %2646 = vmatpush.msra.mxu0 0.0
    %2647 = vmatpush.msra.mxu0 0.0
    %2648 = vmatpush.msra.mxu0 0.0
    %2649 = vmatpush.msra.mxu0 0.0
    %2650 = vmatpush.msra.mxu0 0.0
    %2651 = vmatpush.msra.mxu0 0.0
    %2652 = vmatpush.msra.mxu0 0.0
    %2653 = vmatpush.msra.mxu0 0.0
    %2654 = vmatpush.msra.mxu0 %v2614
    %2655 = vmatpush.msra.mxu0 %v2613
    %2656 = vmatpush.msra.mxu0 %v2612
    %2657 = vmatpush.msra.mxu0 %v2611
    %2658 = vmatmul.f32.gmra.mxu0 %v2640
    %v2659 = vpop.f32.mrf.mxu0
    %v2660 = vadd.f32 %v2637, %v2659
    %2661 = vdwg.mxu0
    %v2662 = vld [vmem:[%s5 + $0xc] sm:$0x1]
    %v2663 = vperm.slane %v2662, 0
    %v2664 = vadd.f32 %v2660, %v2663
    %v2665 = vld [vmem:[%s4] sm:$0xff]
    %v2666 = vld [vmem:[%s4 + $0x8] sm:$0xff]
    %v2667 = vld [vmem:[%s4 + $0x10] sm:$0xff]
    %v2668 = vld [vmem:[%s4 + $0x18] sm:$0xff]
    %v2671 = vsel %vm244, %v2062, %v2055
    %v2672 = vsel %vm33, %v2671, 0
    %2674 = vmatpush.msra.mxu0 0.0
    %2675 = vmatpush.msra.mxu0 0.0
    %2676 = vmatpush.msra.mxu0 0.0
    %2677 = vmatpush.msra.mxu0 0.0
    %2678 = vmatpush.msra.mxu0 0.0
    %2679 = vmatpush.msra.mxu0 0.0
    %2680 = vmatpush.msra.mxu0 0.0
    %2681 = vmatpush.msra.mxu0 0.0
    %2682 = vmatpush.msra.mxu0 0.0
    %2683 = vmatpush.msra.mxu0 0.0
    %2684 = vmatpush.msra.mxu0 0.0
    %2685 = vmatpush.msra.mxu0 0.0
    %2686 = vmatpush.msra.mxu0 %v2668
    %2687 = vmatpush.msra.mxu0 %v2667
    %2688 = vmatpush.msra.mxu0 %v2666
    %2689 = vmatpush.msra.mxu0 %v2665
    %2690 = vmatmul.f32.gmra.mxu0 %v2672
    %v2691 = vpop.f32.mrf.mxu0
    %v2692 = vadd.f32 0.0, %v2691
    %2693 = vdwg.mxu0
    %v2694 = vld [vmem:[#allocation3] sm:$0xff]
    %v2695 = vld [vmem:[#allocation3 + $0x8] sm:$0xff]
    %v2697 = vrot.slane %v2692, 1
    %v2698 = vperm.slane %v2692, 0
    %v2699 = vperm.slane %v2697, 0
    %v2702 = vmul.f32 %v2694, %v2698
    %v2703 = vmul.f32 %v2695, %v2699
    %v2704 = vsel %vm33, %v2702, 0.0
    %2705 = vadd.xlane.f32.xlu0 %v2704
    %v2706 = vpop.xlane.xlu0 %2705
    %v2707 = vsel %vm33, %v2703, 0.0
    %2708 = vadd.xlane.f32.xlu0 %v2707
    %v2709 = vpop.xlane.xlu0 %2708
    %v2710 = vld [vmem:[%s346] sm:$0x3]
    %v2712 = vperm.slane %v2710, 0
    %v2713 = vlaneseq
    %v2714 = vshrl.u32 %v2713, 7
    %2716 = vset.pattern.permute.xlu0 %v2714
    %2717 = vperm.xlu0 %2716, %v2712
    %v2718 = vpop.permute.xlu0 %2717
    %v2719 = vperm.slane %v2710, 1
    %v2720 = vlaneseq
    %v2721 = vshrl.u32 %v2720, 7
    %2723 = vset.pattern.permute.xlu0 %v2721
    %2724 = vperm.xlu0 %2723, %v2719
    %v2725 = vpop.permute.xlu0 %2724
    %v2728 = vadd.f32 %v2706, %v2718
    %v2729 = vadd.f32 %v2709, %v2725
    %2732 = vset.pattern.permute.xlu0 0
    %2733 = vperm.xlu0 %2732, %v2728
    %v2734 = vpop.permute.xlu0 %2733
    %2735 = vset.pattern.permute.xlu0 0
    %2736 = vperm.xlu0 %2735, %v2729
    %v2737 = vpop.permute.xlu0 %2736
    %v2738 = vperm.slane %v2734, %v241
    %v2739 = vperm.slane %v2737, %v241
    %v2740 = vsel %vm244, %v2739, %v2738
    %v2742 = vsel %vm247, %v2740, -inf
    %2743 = vmax.xlane.f32.xlu0 %v2742
    %v2744 = vpop.xlane.xlu0 %2743
    %v2746 = vperm.slane %v2744, 0
    %v2747 = vperm.slane %v2744, 1
    %v2750 = vsub.f32 %v2728, %v2746
    %v2751 = vsub.f32 %v2729, %v2747
    %v2752 = vmul.f32 %v2750, 1.442695
    %v2753 = vpow.pop %v2752
    %v2754 = vmul.f32 %v2751, 1.442695
    %v2755 = vpow.pop %v2754
    %2758 = vset.pattern.permute.xlu0 0
    %2759 = vperm.xlu0 %2758, %v2753
    %v2760 = vpop.permute.xlu0 %2759
    %2761 = vset.pattern.permute.xlu0 0
    %2762 = vperm.xlu0 %2761, %v2755
    %v2763 = vpop.permute.xlu0 %2762
    %v2764 = vperm.slane %v2760, %v241
    %v2765 = vperm.slane %v2763, %v241
    %v2766 = vsel %vm244, %v2765, %v2764
    %v2768 = vsel %vm247, %v2766, 0.0
    %2769 = vadd.xlane.f32.xlu0 %v2768
    %v2770 = vpop.xlane.xlu0 %2769
    %v2772 = vperm.slane %v2770, 0
    %v2773 = vperm.slane %v2770, 1
    %v2776 = vrcp.pop %v2772
    %v2777 = vmul.f32 %v2772, %v2776
    %v2778 = vsub.f32 1.0, %v2777
    %v2779 = vmul.f32 %v2776, %v2778
    %v2780 = vadd.f32 %v2776, %v2779
    %vm2781 = vweird.f32 %v2772
    %vm2782 = vweird.f32 %v2776
    %vm2783 = vmor %vm2781, %vm2782
    %v2784 = vsel %vm2783, %v2776, %v2780
    %v2785 = vand.u32 2147483647, %v2772
    %vm2786 = vcmp.eq.f32.partialorder %v2785, 8.507059e+37
    %v2787 = vand.u32 %v2772, 2147483648
    %v2788 = vor.u32 1.1754944e-38, %v2787
    %v2789 = vsel %vm2786, %v2788, %v2784
    %v2790 = vmul.f32 %v2753, %v2789
    %v2791 = vrcp.pop %v2773
    %v2792 = vmul.f32 %v2773, %v2791
    %v2793 = vsub.f32 1.0, %v2792
    %v2794 = vmul.f32 %v2791, %v2793
    %v2795 = vadd.f32 %v2791, %v2794
    %vm2796 = vweird.f32 %v2773
    %vm2797 = vweird.f32 %v2791
    %vm2798 = vmor %vm2796, %vm2797
    %v2799 = vsel %vm2798, %v2791, %v2795
    %v2800 = vand.u32 2147483647, %v2773
    %vm2801 = vcmp.eq.f32.partialorder %v2800, 8.507059e+37
    %v2802 = vand.u32 %v2773, 2147483648
    %v2803 = vor.u32 1.1754944e-38, %v2802
    %v2804 = vsel %vm2801, %v2803, %v2799
    %v2805 = vmul.f32 %v2755, %v2804
    %v2806 = vld [vmem:[%s0] sm:$0xff]
    %v2807 = vld [vmem:[%s0 + $0x8] sm:$0xff]
    %2809 = vset.pattern.permute.xlu0 0
    %2810 = vperm.xlu0 %2809, %v2790
    %v2811 = vpop.permute.xlu0 %2810
    %2814 = vset.pattern.permute.xlu0 0
    %2815 = vperm.xlu0 %2814, %v2805
    %v2816 = vpop.permute.xlu0 %2815
    %v2818 = vmul.f32 %v2811, %v2806
    %v2819 = vmul.f32 %v2816, %v2807
    %v2820 = vsel %vm33, %v2818, 0.0
    %v2821 = vrot.slane %v2820, 4
    %v2822 = vadd.f32 %v2820, %v2821
    %v2823 = vrot.slane %v2822, 2
    %v2824 = vadd.f32 %v2822, %v2823
    %v2825 = vrot.slane %v2824, 1
    %v2826 = vadd.f32 %v2824, %v2825
    %v2827 = vsel %vm33, %v2819, 0.0
    %v2828 = vrot.slane %v2827, 4
    %v2829 = vadd.f32 %v2827, %v2828
    %v2830 = vrot.slane %v2829, 2
    %v2831 = vadd.f32 %v2829, %v2830
    %v2832 = vrot.slane %v2831, 1
    %v2833 = vadd.f32 %v2831, %v2832
    %v2834 = vld [vmem:[%s515] sm:$0xff]
    %v2835 = vld [vmem:[%s515 + $0x8] sm:$0xff]
    %v2836 = vld [vmem:[%s515 + $0x10] sm:$0xff]
    %v2837 = vld [vmem:[%s515 + $0x18] sm:$0xff]
    %v2838 = vld [vmem:[%s515 + $0x20] sm:$0xff]
    %v2839 = vld [vmem:[%s515 + $0x28] sm:$0xff]
    %v2840 = vld [vmem:[%s515 + $0x30] sm:$0xff]
    %v2841 = vld [vmem:[%s515 + $0x38] sm:$0xff]
    %v2842 = vld [vmem:[%s5 + $0x4] sm:$0x3]
    %v2844 = vrot.slane %v2842, 1
    %v2845 = vperm.slane %v2842, 0
    %v2846 = vperm.slane %v2844, 0
    %v2850 = vsel %vm33, %v2664, 0
    %2852 = vmatpush.msra.mxu0 0.0
    %2853 = vmatpush.msra.mxu0 0.0
    %2854 = vmatpush.msra.mxu0 0.0
    %2855 = vmatpush.msra.mxu0 0.0
    %2856 = vmatpush.msra.mxu0 0.0
    %2857 = vmatpush.msra.mxu0 0.0
    %2858 = vmatpush.msra.mxu0 0.0
    %2859 = vmatpush.msra.mxu0 0.0
    %2860 = vmatpush.msra.mxu0 0.0
    %2861 = vmatpush.msra.mxu0 0.0
    %2862 = vmatpush.msra.mxu0 0.0
    %2863 = vmatpush.msra.mxu0 0.0
    %2864 = vmatpush.msra.mxu0 %v2837
    %2865 = vmatpush.msra.mxu0 %v2836
    %2866 = vmatpush.msra.mxu0 %v2835
    %2867 = vmatpush.msra.mxu0 %v2834
    %2868 = vmatmul.f32.gmra.mxu0 %v2850
    %v2869 = vpop.f32.mrf.mxu0
    %v2870 = vadd.f32 %v2845, %v2869
    %2871 = vdwg.mxu0
    %2872 = vmatpush.msra.mxu0 0.0
    %2873 = vmatpush.msra.mxu0 0.0
    %2874 = vmatpush.msra.mxu0 0.0
    %2875 = vmatpush.msra.mxu0 0.0
    %2876 = vmatpush.msra.mxu0 0.0
    %2877 = vmatpush.msra.mxu0 0.0
    %2878 = vmatpush.msra.mxu0 0.0
    %2879 = vmatpush.msra.mxu0 0.0
    %2880 = vmatpush.msra.mxu0 0.0
    %2881 = vmatpush.msra.mxu0 0.0
    %2882 = vmatpush.msra.mxu0 0.0
    %2883 = vmatpush.msra.mxu0 0.0
    %2884 = vmatpush.msra.mxu0 %v2841
    %2885 = vmatpush.msra.mxu0 %v2840
    %2886 = vmatpush.msra.mxu0 %v2839
    %2887 = vmatpush.msra.mxu0 %v2838
    %2888 = vmatmul.f32.gmra.mxu0 %v2850
    %v2889 = vpop.f32.mrf.mxu0
    %v2890 = vadd.f32 %v2846, %v2889
    %2891 = vdwg.mxu0
    %v2892 = vld [vmem:[%s5 + $0x9] sm:$0x3]
    %v2894 = vrot.slane %v2892, 1
    %v2895 = vperm.slane %v2892, 0
    %v2896 = vperm.slane %v2894, 0
    %v2899 = vmul.f32 %v2826, %v2895
    %v2900 = vmul.f32 %v2833, %v2895
    %v2901 = vmul.f32 %v2826, %v2896
    %v2902 = vmul.f32 %v2833, %v2896
    %v2903 = vld [vmem:[%s582] sm:$0xff]
    %v2904 = vld [vmem:[%s582 + $0x8] sm:$0xff]
    %v2905 = vld [vmem:[%s582 + $0x10] sm:$0xff]
    %v2906 = vld [vmem:[%s582 + $0x18] sm:$0xff]
    %v2907 = vld [vmem:[%s582 + $0x20] sm:$0xff]
    %v2908 = vld [vmem:[%s582 + $0x28] sm:$0xff]
    %v2909 = vld [vmem:[%s582 + $0x30] sm:$0xff]
    %v2910 = vld [vmem:[%s582 + $0x38] sm:$0xff]
    %v2913 = vrot.slane %v2900, 7
    %v2914 = vsel %vm244, %v2913, %v2899
    %v2915 = vsel %vm33, %v2914, 0
    %2917 = vmatpush.msra.mxu0 0.0
    %2918 = vmatpush.msra.mxu0 0.0
    %2919 = vmatpush.msra.mxu0 0.0
    %2920 = vmatpush.msra.mxu0 0.0
    %2921 = vmatpush.msra.mxu0 0.0
    %2922 = vmatpush.msra.mxu0 0.0
    %2923 = vmatpush.msra.mxu0 0.0
    %2924 = vmatpush.msra.mxu0 0.0
    %2925 = vmatpush.msra.mxu0 0.0
    %2926 = vmatpush.msra.mxu0 0.0
    %2927 = vmatpush.msra.mxu0 0.0
    %2928 = vmatpush.msra.mxu0 0.0
    %2929 = vmatpush.msra.mxu0 %v2906
    %2930 = vmatpush.msra.mxu0 %v2905
    %2931 = vmatpush.msra.mxu0 %v2904
    %2932 = vmatpush.msra.mxu0 %v2903
    %2933 = vmatmul.f32.gmra.mxu0 %v2915
    %v2934 = vpop.f32.mrf.mxu0
    %v2935 = vadd.f32 0.0, %v2934
    %2936 = vdwg.mxu0
    %v2939 = vrot.slane %v2902, 7
    %v2940 = vsel %vm244, %v2939, %v2901
    %v2941 = vsel %vm33, %v2940, 0
    %2943 = vmatpush.msra.mxu0 0.0
    %2944 = vmatpush.msra.mxu0 0.0
    %2945 = vmatpush.msra.mxu0 0.0
    %2946 = vmatpush.msra.mxu0 0.0
    %2947 = vmatpush.msra.mxu0 0.0
    %2948 = vmatpush.msra.mxu0 0.0
    %2949 = vmatpush.msra.mxu0 0.0
    %2950 = vmatpush.msra.mxu0 0.0
    %2951 = vmatpush.msra.mxu0 0.0
    %2952 = vmatpush.msra.mxu0 0.0
    %2953 = vmatpush.msra.mxu0 0.0
    %2954 = vmatpush.msra.mxu0 0.0
    %2955 = vmatpush.msra.mxu0 %v2910
    %2956 = vmatpush.msra.mxu0 %v2909
    %2957 = vmatpush.msra.mxu0 %v2908
    %2958 = vmatpush.msra.mxu0 %v2907
    %2959 = vmatmul.f32.gmra.mxu0 %v2941
    %v2960 = vpop.f32.mrf.mxu0
    %v2961 = vadd.f32 0.0, %v2960
    %2962 = vdwg.mxu0
    %v2963 = vmul.f32 %v2870, %v2935
    %v2964 = vmul.f32 %v2890, %v2961
    %v2965 = vld [vmem:[%s2] sm:$0xff]
    %v2966 = vld [vmem:[%s2 + $0x8] sm:$0x3]
    %v2967 = vld [vmem:[%s2 + $0x10] sm:$0xff]
    %v2968 = vld [vmem:[%s2 + $0x18] sm:$0x3]
    %v2969 = vld [vmem:[%s2 + $0x20] sm:$0xff]
    %v2970 = vld [vmem:[%s2 + $0x28] sm:$0x3]
    %v2971 = vld [vmem:[%s2 + $0x30] sm:$0xff]
    %v2972 = vld [vmem:[%s2 + $0x38] sm:$0x3]
    %v2975 = vrot.slane %v2963, 1
    %v2976 = vrot.slane %v2964, 1
    %v2977 = vperm.slane %v2963, 0
    %v2978 = vperm.slane %v2975, 0
    %v2979 = vperm.slane %v2964, 0
    %v2980 = vperm.slane %v2976, 0
    %v2985 = vmul.f32 %v2965, %v2977
    %v2986 = vmul.f32 %v2966, %v2977
    %v2987 = vmul.f32 %v2967, %v2978
    %v2988 = vmul.f32 %v2968, %v2978
    %v2989 = vmul.f32 %v2969, %v2979
    %v2990 = vmul.f32 %v2970, %v2979
    %v2991 = vmul.f32 %v2971, %v2980
    %v2992 = vmul.f32 %v2972, %v2980
    %v2993 = vld [vmem:[#allocation2] sm:$0xff]
    %v2994 = vld [vmem:[#allocation2 + $0x8] sm:$0x3]
    %v2995 = vld [vmem:[#allocation2 + $0x10] sm:$0xff]
    %v2996 = vld [vmem:[#allocation2 + $0x18] sm:$0x3]
    %v2997 = vld [vmem:[#allocation2 + $0x20] sm:$0xff]
    %v2998 = vld [vmem:[#allocation2 + $0x28] sm:$0x3]
    %v2999 = vld [vmem:[#allocation2 + $0x30] sm:$0xff]
    %v3000 = vld [vmem:[#allocation2 + $0x38] sm:$0x3]
    %v3001 = vperm.slane %v2899, 0
    %v3002 = vperm.slane %v2900, 0
    %v3003 = vperm.slane %v2901, 0
    %v3004 = vperm.slane %v2902, 0
    %v3005 = vmul.f32 %v2993, %v3001
    %v3006 = vmul.f32 %v2994, %v3001
    %v3007 = vmul.f32 %v2995, %v3002
    %v3008 = vmul.f32 %v2996, %v3002
    %v3009 = vmul.f32 %v2997, %v3003
    %v3010 = vmul.f32 %v2998, %v3003
    %v3011 = vmul.f32 %v2999, %v3004
    %v3012 = vmul.f32 %v3000, %v3004
    %v3013 = vadd.f32 %v2985, %v3005
    %v3014 = vadd.f32 %v2986, %v3006
    %v3015 = vadd.f32 %v2987, %v3007
    %v3016 = vadd.f32 %v2988, %v3008
    %v3017 = vadd.f32 %v2989, %v3009
    %v3018 = vadd.f32 %v2990, %v3010
    %v3019 = vadd.f32 %v2991, %v3011
    %v3020 = vadd.f32 %v2992, %v3012
    %v3021 = vsel %vm33, %v3013, 0.0
    %3022 = vadd.xlane.f32.xlu0 %v3021
    %v3023 = vpop.xlane.xlu0 %3022
    %v3024 = vsel %vm64, %v3014, 0.0
    %3025 = vadd.xlane.f32.xlu0 %v3024
    %v3026 = vpop.xlane.xlu0 %3025
    %v3027 = vsel %vm33, %v3015, 0.0
    %3028 = vadd.xlane.f32.xlu0 %v3027
    %v3029 = vpop.xlane.xlu0 %3028
    %v3030 = vsel %vm64, %v3016, 0.0
    %3031 = vadd.xlane.f32.xlu0 %v3030
    %v3032 = vpop.xlane.xlu0 %3031
    %v3033 = vsel %vm33, %v3017, 0.0
    %3034 = vadd.xlane.f32.xlu0 %v3033
    %v3035 = vpop.xlane.xlu0 %3034
    %v3036 = vsel %vm64, %v3018, 0.0
    %3037 = vadd.xlane.f32.xlu0 %v3036
    %v3038 = vpop.xlane.xlu0 %3037
    %v3039 = vsel %vm33, %v3019, 0.0
    %3040 = vadd.xlane.f32.xlu0 %v3039
    %v3041 = vpop.xlane.xlu0 %3040
    %v3042 = vsel %vm64, %v3020, 0.0
    %3043 = vadd.xlane.f32.xlu0 %v3042
    %v3044 = vpop.xlane.xlu0 %3043
    %v3053 = vperm.slane %v3023, %v241
    %v3054 = vperm.slane %v3026, %v734
    %v3055 = vsel %vm736, %v3054, %v3053
    %v3056 = vperm.slane %v3029, %v241
    %v3057 = vperm.slane %v3032, %v734
    %v3058 = vsel %vm736, %v3057, %v3056
    %v3059 = vperm.slane %v3035, %v241
    %v3060 = vperm.slane %v3038, %v734
    %v3061 = vsel %vm736, %v3060, %v3059
    %v3062 = vperm.slane %v3041, %v241
    %v3063 = vperm.slane %v3044, %v734
    %v3064 = vsel %vm736, %v3063, %v3062
    %v3065 = vsel %vm244, %v3058, %v3055
    %v3066 = vsel %vm244, %v3064, %v3061
    %v3069 = vsel %vm751, %v3065, -inf
    %3070 = vmax.xlane.f32.xlu0 %v3069
    %v3071 = vpop.xlane.xlu0 %3070
    %v3072 = vsel %vm751, %v3066, -inf
    %3073 = vmax.xlane.f32.xlu0 %v3072
    %v3074 = vpop.xlane.xlu0 %3073
    %v3077 = vperm.slane %v3071, 0
    %v3078 = vperm.slane %v3071, 1
    %v3079 = vperm.slane %v3074, 0
    %v3080 = vperm.slane %v3074, 1
    %v3085 = vsub.f32 %v3023, %v3077
    %v3086 = vsub.f32 %v3026, %v3077
    %v3087 = vsub.f32 %v3029, %v3078
    %v3088 = vsub.f32 %v3032, %v3078
    %v3089 = vsub.f32 %v3035, %v3079
    %v3090 = vsub.f32 %v3038, %v3079
    %v3091 = vsub.f32 %v3041, %v3080
    %v3092 = vsub.f32 %v3044, %v3080
    %v3093 = vmul.f32 %v3085, 1.442695
    %v3094 = vpow.pop %v3093
    %v3095 = vmul.f32 %v3086, 1.442695
    %v3096 = vpow.pop %v3095
    %v3097 = vmul.f32 %v3087, 1.442695
    %v3098 = vpow.pop %v3097
    %v3099 = vmul.f32 %v3088, 1.442695
    %v3100 = vpow.pop %v3099
    %v3101 = vmul.f32 %v3089, 1.442695
    %v3102 = vpow.pop %v3101
    %v3103 = vmul.f32 %v3090, 1.442695
    %v3104 = vpow.pop %v3103
    %v3105 = vmul.f32 %v3091, 1.442695
    %v3106 = vpow.pop %v3105
    %v3107 = vmul.f32 %v3092, 1.442695
    %v3108 = vpow.pop %v3107
    %3117 = vset.pattern.permute.xlu0 0
    %3118 = vperm.xlu0 %3117, %v3094
    %v3119 = vpop.permute.xlu0 %3118
    %3120 = vset.pattern.permute.xlu0 0
    %3121 = vperm.xlu0 %3120, %v3096
    %v3122 = vpop.permute.xlu0 %3121
    %3123 = vset.pattern.permute.xlu0 0
    %3124 = vperm.xlu0 %3123, %v3098
    %v3125 = vpop.permute.xlu0 %3124
    %3126 = vset.pattern.permute.xlu0 0
    %3127 = vperm.xlu0 %3126, %v3100
    %v3128 = vpop.permute.xlu0 %3127
    %3129 = vset.pattern.permute.xlu0 0
    %3130 = vperm.xlu0 %3129, %v3102
    %v3131 = vpop.permute.xlu0 %3130
    %3132 = vset.pattern.permute.xlu0 0
    %3133 = vperm.xlu0 %3132, %v3104
    %v3134 = vpop.permute.xlu0 %3133
    %3135 = vset.pattern.permute.xlu0 0
    %3136 = vperm.xlu0 %3135, %v3106
    %v3137 = vpop.permute.xlu0 %3136
    %3138 = vset.pattern.permute.xlu0 0
    %3139 = vperm.xlu0 %3138, %v3108
    %v3140 = vpop.permute.xlu0 %3139
    %v3141 = vperm.slane %v3119, %v241
    %v3142 = vperm.slane %v3122, %v734
    %v3143 = vsel %vm736, %v3142, %v3141
    %v3144 = vperm.slane %v3125, %v241
    %v3145 = vperm.slane %v3128, %v734
    %v3146 = vsel %vm736, %v3145, %v3144
    %v3147 = vperm.slane %v3131, %v241
    %v3148 = vperm.slane %v3134, %v734
    %v3149 = vsel %vm736, %v3148, %v3147
    %v3150 = vperm.slane %v3137, %v241
    %v3151 = vperm.slane %v3140, %v734
    %v3152 = vsel %vm736, %v3151, %v3150
    %v3153 = vsel %vm244, %v3146, %v3143
    %v3154 = vsel %vm244, %v3152, %v3149
    %v3157 = vsel %vm751, %v3153, 0.0
    %3158 = vadd.xlane.f32.xlu0 %v3157
    %v3159 = vpop.xlane.xlu0 %3158
    %v3160 = vsel %vm751, %v3154, 0.0
    %3161 = vadd.xlane.f32.xlu0 %v3160
    %v3162 = vpop.xlane.xlu0 %3161
    %v3165 = vperm.slane %v3159, 0
    %v3166 = vperm.slane %v3159, 1
    %v3167 = vperm.slane %v3162, 0
    %v3168 = vperm.slane %v3162, 1
    %v3173 = vrcp.pop %v3165
    %v3174 = vmul.f32 %v3165, %v3173
    %v3175 = vsub.f32 1.0, %v3174
    %v3176 = vmul.f32 %v3173, %v3175
    %v3177 = vadd.f32 %v3173, %v3176
    %vm3178 = vweird.f32 %v3165
    %vm3179 = vweird.f32 %v3173
    %vm3180 = vmor %vm3178, %vm3179
    %v3181 = vsel %vm3180, %v3173, %v3177
    %v3182 = vand.u32 2147483647, %v3165
    %vm3183 = vcmp.eq.f32.partialorder %v3182, 8.507059e+37
    %v3184 = vand.u32 %v3165, 2147483648
    %v3185 = vor.u32 1.1754944e-38, %v3184
    %v3186 = vsel %vm3183, %v3185, %v3181
    %v3187 = vmul.f32 %v3094, %v3186
    %v3188 = vmul.f32 %v3096, %v3186
    %v3189 = vrcp.pop %v3166
    %v3190 = vmul.f32 %v3166, %v3189
    %v3191 = vsub.f32 1.0, %v3190
    %v3192 = vmul.f32 %v3189, %v3191
    %v3193 = vadd.f32 %v3189, %v3192
    %vm3194 = vweird.f32 %v3166
    %vm3195 = vweird.f32 %v3189
    %vm3196 = vmor %vm3194, %vm3195
    %v3197 = vsel %vm3196, %v3189, %v3193
    %v3198 = vand.u32 2147483647, %v3166
    %vm3199 = vcmp.eq.f32.partialorder %v3198, 8.507059e+37
    %v3200 = vand.u32 %v3166, 2147483648
    %v3201 = vor.u32 1.1754944e-38, %v3200
    %v3202 = vsel %vm3199, %v3201, %v3197
    %v3203 = vmul.f32 %v3098, %v3202
    %v3204 = vmul.f32 %v3100, %v3202
    %v3205 = vrcp.pop %v3167
    %v3206 = vmul.f32 %v3167, %v3205
    %v3207 = vsub.f32 1.0, %v3206
    %v3208 = vmul.f32 %v3205, %v3207
    %v3209 = vadd.f32 %v3205, %v3208
    %vm3210 = vweird.f32 %v3167
    %vm3211 = vweird.f32 %v3205
    %vm3212 = vmor %vm3210, %vm3211
    %v3213 = vsel %vm3212, %v3205, %v3209
    %v3214 = vand.u32 2147483647, %v3167
    %vm3215 = vcmp.eq.f32.partialorder %v3214, 8.507059e+37
    %v3216 = vand.u32 %v3167, 2147483648
    %v3217 = vor.u32 1.1754944e-38, %v3216
    %v3218 = vsel %vm3215, %v3217, %v3213
    %v3219 = vmul.f32 %v3102, %v3218
    %v3220 = vmul.f32 %v3104, %v3218
    %v3221 = vrcp.pop %v3168
    %v3222 = vmul.f32 %v3168, %v3221
    %v3223 = vsub.f32 1.0, %v3222
    %v3224 = vmul.f32 %v3221, %v3223
    %v3225 = vadd.f32 %v3221, %v3224
    %vm3226 = vweird.f32 %v3168
    %vm3227 = vweird.f32 %v3221
    %vm3228 = vmor %vm3226, %vm3227
    %v3229 = vsel %vm3228, %v3221, %v3225
    %v3230 = vand.u32 2147483647, %v3168
    %vm3231 = vcmp.eq.f32.partialorder %v3230, 8.507059e+37
    %v3232 = vand.u32 %v3168, 2147483648
    %v3233 = vor.u32 1.1754944e-38, %v3232
    %v3234 = vsel %vm3231, %v3233, %v3229
    %v3235 = vmul.f32 %v3106, %v3234
    %v3236 = vmul.f32 %v3108, %v3234
    %3238 = vset.pattern.permute.xlu0 0
    %3239 = vperm.xlu0 %3238, %v3187
    %v3240 = vpop.permute.xlu0 %3239
    %3243 = vset.pattern.permute.xlu0 0
    %3244 = vperm.xlu0 %3243, %v3188
    %v3245 = vpop.permute.xlu0 %3244
    %3248 = vset.pattern.permute.xlu0 0
    %3249 = vperm.xlu0 %3248, %v3203
    %v3250 = vpop.permute.xlu0 %3249
    %3253 = vset.pattern.permute.xlu0 0
    %3254 = vperm.xlu0 %3253, %v3204
    %v3255 = vpop.permute.xlu0 %3254
    %3258 = vset.pattern.permute.xlu0 0
    %3259 = vperm.xlu0 %3258, %v3219
    %v3260 = vpop.permute.xlu0 %3259
    %3263 = vset.pattern.permute.xlu0 0
    %3264 = vperm.xlu0 %3263, %v3220
    %v3265 = vpop.permute.xlu0 %3264
    %3268 = vset.pattern.permute.xlu0 0
    %3269 = vperm.xlu0 %3268, %v3235
    %v3270 = vpop.permute.xlu0 %3269
    %3273 = vset.pattern.permute.xlu0 0
    %3274 = vperm.xlu0 %3273, %v3236
    %v3275 = vpop.permute.xlu0 %3274
    %v3277 = vmul.f32 %v3240, %v2965
    %v3278 = vmul.f32 %v3245, %v2966
    %v3279 = vmul.f32 %v3250, %v2967
    %v3280 = vmul.f32 %v3255, %v2968
    %v3281 = vmul.f32 %v3260, %v2969
    %v3282 = vmul.f32 %v3265, %v2970
    %v3283 = vmul.f32 %v3270, %v2971
    %v3284 = vmul.f32 %v3275, %v2972
    %v3285 = vsel %vm33, %v3277, 0.0
    %v3286 = vsel %vm64, %v3278, 0.0
    %v3287 = vadd.f32 %v3285, %v3286
    %v3288 = vrot.slane %v3287, 4
    %v3289 = vadd.f32 %v3287, %v3288
    %v3290 = vrot.slane %v3289, 2
    %v3291 = vadd.f32 %v3289, %v3290
    %v3292 = vrot.slane %v3291, 1
    %v3293 = vadd.f32 %v3291, %v3292
    %v3294 = vsel %vm33, %v3279, 0.0
    %v3295 = vsel %vm64, %v3280, 0.0
    %v3296 = vadd.f32 %v3294, %v3295
    %v3297 = vrot.slane %v3296, 4
    %v3298 = vadd.f32 %v3296, %v3297
    %v3299 = vrot.slane %v3298, 2
    %v3300 = vadd.f32 %v3298, %v3299
    %v3301 = vrot.slane %v3300, 1
    %v3302 = vadd.f32 %v3300, %v3301
    %v3303 = vsel %vm33, %v3281, 0.0
    %v3304 = vsel %vm64, %v3282, 0.0
    %v3305 = vadd.f32 %v3303, %v3304
    %v3306 = vrot.slane %v3305, 4
    %v3307 = vadd.f32 %v3305, %v3306
    %v3308 = vrot.slane %v3307, 2
    %v3309 = vadd.f32 %v3307, %v3308
    %v3310 = vrot.slane %v3309, 1
    %v3311 = vadd.f32 %v3309, %v3310
    %v3312 = vsel %vm33, %v3283, 0.0
    %v3313 = vsel %vm64, %v3284, 0.0
    %v3314 = vadd.f32 %v3312, %v3313
    %v3315 = vrot.slane %v3314, 4
    %v3316 = vadd.f32 %v3314, %v3315
    %v3317 = vrot.slane %v3316, 2
    %v3318 = vadd.f32 %v3316, %v3317
    %v3319 = vrot.slane %v3318, 1
    %v3320 = vadd.f32 %v3318, %v3319
    %v3321 = vld [vmem:[%s1004] sm:$0xff]
    %v3322 = vld [vmem:[%s1004 + $0x8] sm:$0xff]
    %v3323 = vld [vmem:[%s1004 + $0x10] sm:$0xff]
    %v3324 = vld [vmem:[%s1004 + $0x18] sm:$0xff]
    %v3325 = vld [vmem:[%s1009] sm:$0xff]
    %v3326 = vld [vmem:[%s1009 + $0x8] sm:$0xff]
    %v3327 = vld [vmem:[%s1009 + $0x10] sm:$0xff]
    %v3328 = vld [vmem:[%s1009 + $0x18] sm:$0xff]
    %v3331 = vsel %vm244, %v3320, %v3311
    %v3332 = vsel %vm33, %v3331, 0
    %3334 = vmatpush.msra.mxu0 0.0
    %3335 = vmatpush.msra.mxu0 0.0
    %3336 = vmatpush.msra.mxu0 0.0
    %3337 = vmatpush.msra.mxu0 0.0
    %3338 = vmatpush.msra.mxu0 0.0
    %3339 = vmatpush.msra.mxu0 0.0
    %3340 = vmatpush.msra.mxu0 0.0
    %3341 = vmatpush.msra.mxu0 0.0
    %3342 = vmatpush.msra.mxu0 0.0
    %3343 = vmatpush.msra.mxu0 0.0
    %3344 = vmatpush.msra.mxu0 0.0
    %3345 = vmatpush.msra.mxu0 0.0
    %3346 = vmatpush.msra.mxu0 %v3328
    %3347 = vmatpush.msra.mxu0 %v3327
    %3348 = vmatpush.msra.mxu0 %v3326
    %3349 = vmatpush.msra.mxu0 %v3325
    %3350 = vmatmul.f32.gmra.mxu0 %v3332
    %v3351 = vpop.f32.mrf.mxu0
    %v3352 = vadd.f32 0.0, %v3351
    %3353 = vdwg.mxu0
    %v3356 = vsel %vm244, %v3302, %v3293
    %v3357 = vsel %vm33, %v3356, 0
    %3359 = vmatpush.msra.mxu0 0.0
    %3360 = vmatpush.msra.mxu0 0.0
    %3361 = vmatpush.msra.mxu0 0.0
    %3362 = vmatpush.msra.mxu0 0.0
    %3363 = vmatpush.msra.mxu0 0.0
    %3364 = vmatpush.msra.mxu0 0.0
    %3365 = vmatpush.msra.mxu0 0.0
    %3366 = vmatpush.msra.mxu0 0.0
    %3367 = vmatpush.msra.mxu0 0.0
    %3368 = vmatpush.msra.mxu0 0.0
    %3369 = vmatpush.msra.mxu0 0.0
    %3370 = vmatpush.msra.mxu0 0.0
    %3371 = vmatpush.msra.mxu0 %v3324
    %3372 = vmatpush.msra.mxu0 %v3323
    %3373 = vmatpush.msra.mxu0 %v3322
    %3374 = vmatpush.msra.mxu0 %v3321
    %3375 = vmatmul.f32.gmra.mxu0 %v3357
    %v3376 = vpop.f32.mrf.mxu0
    %v3377 = vadd.f32 %v3352, %v3376
    %3378 = vdwg.mxu0
    %v3379 = vld [vmem:[%s5 + $0xb] sm:$0x1]
    %v3380 = vperm.slane %v3379, 0
    %v3381 = vadd.f32 %v3377, %v3380
    %v3382 = vld [vmem:[%s1067] sm:$0xff]
    %v3383 = vld [vmem:[%s1067 + $0x8] sm:$0xff]
    %v3384 = vld [vmem:[%s1067 + $0x10] sm:$0xff]
    %v3385 = vld [vmem:[%s1067 + $0x18] sm:$0xff]
    %v3386 = vld [vmem:[%s1072] sm:$0xff]
    %v3387 = vld [vmem:[%s1072 + $0x8] sm:$0xff]
    %v3388 = vld [vmem:[%s1072 + $0x10] sm:$0xff]
    %v3389 = vld [vmem:[%s1072 + $0x18] sm:$0xff]
    %3390 = vmatpush.msra.mxu0 0.0
    %3391 = vmatpush.msra.mxu0 0.0
    %3392 = vmatpush.msra.mxu0 0.0
    %3393 = vmatpush.msra.mxu0 0.0
    %3394 = vmatpush.msra.mxu0 0.0
    %3395 = vmatpush.msra.mxu0 0.0
    %3396 = vmatpush.msra.mxu0 0.0
    %3397 = vmatpush.msra.mxu0 0.0
    %3398 = vmatpush.msra.mxu0 0.0
    %3399 = vmatpush.msra.mxu0 0.0
    %3400 = vmatpush.msra.mxu0 0.0
    %3401 = vmatpush.msra.mxu0 0.0
    %3402 = vmatpush.msra.mxu0 %v3389
    %3403 = vmatpush.msra.mxu0 %v3388
    %3404 = vmatpush.msra.mxu0 %v3387
    %3405 = vmatpush.msra.mxu0 %v3386
    %3406 = vmatmul.f32.gmra.mxu0 %v2850
    %v3407 = vpop.f32.mrf.mxu0
    %v3408 = vadd.f32 0.0, %v3407
    %3409 = vdwg.mxu0
    %v3411 = vsel %vm33, %v3381, 0
    %3413 = vmatpush.msra.mxu0 0.0
    %3414 = vmatpush.msra.mxu0 0.0
    %3415 = vmatpush.msra.mxu0 0.0
    %3416 = vmatpush.msra.mxu0 0.0
    %3417 = vmatpush.msra.mxu0 0.0
    %3418 = vmatpush.msra.mxu0 0.0
    %3419 = vmatpush.msra.mxu0 0.0
    %3420 = vmatpush.msra.mxu0 0.0
    %3421 = vmatpush.msra.mxu0 0.0
    %3422 = vmatpush.msra.mxu0 0.0
    %3423 = vmatpush.msra.mxu0 0.0
    %3424 = vmatpush.msra.mxu0 0.0
    %3425 = vmatpush.msra.mxu0 %v3385
    %3426 = vmatpush.msra.mxu0 %v3384
    %3427 = vmatpush.msra.mxu0 %v3383
    %3428 = vmatpush.msra.mxu0 %v3382
    %3429 = vmatmul.f32.gmra.mxu0 %v3411
    %v3430 = vpop.f32.mrf.mxu0
    %v3431 = vadd.f32 %v3408, %v3430
    %3432 = vdwg.mxu0
    %v3433 = vld [vmem:[%s5 + $0xc] sm:$0x1]
    %v3434 = vperm.slane %v3433, 0
    %v3435 = vadd.f32 %v3431, %v3434
    %v3436 = vsel %vm64, %v3435, inf
    %3437 = vmin.xlane.f32.xlu0 %v3436
    %v3438 = vpop.xlane.xlu0 %3437
    %v3439 = vrot.slane %v3438, 4
    %v3440 = vmin.f32 %v3438, %v3439
    %v3441 = vrot.slane %v3440, 2
    %v3442 = vmin.f32 %v3440, %v3441
    %v3443 = vrot.slane %v3442, 1
    %v3444 = vmin.f32 %v3442, %v3443
    %s3445 = vtos %v3444
    %v3446 = vstv %s3445
    %v3447 = vsub.f32 %v3435, %v3446
    %v3448 = vsel %vm64, %v3447, -inf
    %3449 = vmax.xlane.f32.xlu0 %v3448
    %v3450 = vpop.xlane.xlu0 %3449
    %v3451 = vrot.slane %v3450, 4
    %v3452 = vmax.f32 %v3450, %v3451
    %v3453 = vrot.slane %v3452, 2
    %v3454 = vmax.f32 %v3452, %v3453
    %v3455 = vrot.slane %v3454, 1
    %v3456 = vmax.f32 %v3454, %v3455
    %s3457 = vtos %v3456
    %v3458 = vstv %s3457
    %v3459 = vrcp.pop %v3458
    %v3460 = vmul.f32 %v3458, %v3459
    %v3461 = vsub.f32 1.0, %v3460
    %v3462 = vmul.f32 %v3459, %v3461
    %v3463 = vadd.f32 %v3459, %v3462
    %vm3464 = vweird.f32 %v3458
    %vm3465 = vweird.f32 %v3459
    %vm3466 = vmor %vm3464, %vm3465
    %v3467 = vsel %vm3466, %v3459, %v3463
    %v3468 = vand.u32 2147483647, %v3458
    %vm3469 = vcmp.eq.f32.partialorder %v3468, 8.507059e+37
    %v3470 = vand.u32 %v3458, 2147483648
    %v3471 = vor.u32 1.1754944e-38, %v3470
    %v3472 = vsel %vm3469, %v3471, %v3467
    %v3473 = vmul.f32 %v3447, %v3472
    %v3474 = vmul.f32 %v3473, 2.0
    %v3475 = vsub.f32 %v3474, 1.0
    %3476 = vst.msk [vmem:[#allocation5] sm:$0x3] %vm64, %v3475
    // Predicated region
    $region26: #{mac_unit_2rus.1} parent=1 // pred_check
      _
    $region27: #{mac_unit_2rus.1} parent=1 // pred_check_branch
      %3478 = sbr.rel (0) target = $region29
    $region28: #{mac_unit_2rus.1} parent=1 // pred_region
      %3480 = vsyncadd [#allocation6], 0
      %s3482 = sshll.u32 [#allocation5], 4
      %s3483 = int_to_ptr.vmem [resolvable:$true] %s3482
      %s3484 = sshll.u32 %s6, 4
      %s3485 = int_to_ptr.hbm [resolvable:$true] %s3484
      %3487 = dma.vmem_to_hbm [thread:$0]  %s3483, 32, %s3485, [#allocation6]
    $region29: #{mac_unit_2rus.1} parent=1 // pred_fallthru
      _
    // Predicated region
    $region30: #{mac_unit_2rus.1} parent=1 // pred_check
      _
    $region31: #{mac_unit_2rus.1} parent=1 // pred_check_branch
      %3489 = sbr.rel (0) target = $region33
    $region32: #{mac_unit_2rus.1} parent=1 // pred_region
      %3491 = dma.done [#allocation6], 32
    $region33: #{mac_unit_2rus.1} parent=1 // pred_fallthru
      _
    %3492 = vsyncpa [#allocation6], 1

</llo_original>
